<compile_context>
chip_gen: v6e
topology: v6e:2x2x1
jax: 0.10.0
libtpu: 0.0.40
codegen_flags: <defaults>
</compile_context>

<pallas_src>
import jax
import jax.numpy as jnp
import numpy as np
from jax import lax
from jax.experimental import pallas as pl
from jax.experimental.pallas import tpu as pltpu

HIGH = lax.Precision.HIGHEST


# ------------------------------ small static helpers ------------------------------
def _round_up(x, m):
    return (x + m - 1) // m * m


def _vmem_limit(raw_bytes):
    # double-buffering + layout-padding headroom; never below the 32 MiB v6e default.
    return int(min(max(2 * raw_bytes + (2 << 20), 32 << 20), 120 << 20))


def _largest_divisor_leq(n, cap):
    for d in range(min(n, cap), 0, -1):
        if n % d == 0:
            return d
    return n


def _pick_row_tile(m, cap=512):
    if m <= cap:
        return m
    for d in range(cap, 7, -1):
        if m % d == 0 and d % 8 == 0:
            return d
    return m  # TODO(synk): ragged-M tiling for huge, awkward T*B


# ============================ LSTM kernel (grid = (batch-chunk, layer)) ============================
def _lstm_kernel(embed_ref, h0_ref, c0_ref, wih_ref, whh_ref, b_ref,
                 y_ref, ho_ref, co_ref, io_sc, xg_sc):
    l = pl.program_id(1)
    n_layers = pl.num_programs(1)
    T = embed_ref.shape[0]
    Tc, Bc, G = xg_sc.shape
    H = G // 4
    n_chunks = T // Tc

    # ---- bulk, time-chunked input projection: ONE (Tc*Bc, E) x (E, 4H) bf16 MXU matmul ----
    def project(chunk3d):
        inp2 = chunk3d.reshape(Tc * Bc, chunk3d.shape[-1]).astype(jnp.bfloat16)
        proj = jnp.dot(inp2, wih_ref[...], preferred_element_type=jnp.float32)
        xg_sc[...] = proj.reshape(Tc, Bc, 4 * H) + b_ref[...]   # PyTorch gate order i,f,g,o

    def chunk_body(ci, carry):
        h_prev, c_prev = carry
        c0 = ci * Tc
        if not isinstance(c0, int):
            c0 = pl.multiple_of(c0, Tc)

        @pl.when(l == 0)
        def _():
            project(embed_ref[pl.ds(c0, Tc)])        # layer 0 consumes the embeddings

        @pl.when(l != 0)
        def _():
            project(io_sc[pl.ds(c0, Tc)])            # layer l consumes layer l-1's output
                                                     # (inter-layer dropout == identity)

        # ---- serial recurrence: only h_prev @ W_hh remains per step (f32 gate math on VPU/EUP)
        def step(tl, hc):
            h_p, c_p = hc
            gates = xg_sc[tl] + jnp.dot(h_p.astype(jnp.bfloat16), whh_ref[...],
                                        preferred_element_type=jnp.float32)   # (Bc, 4H)
            i = jax.nn.sigmoid(gates[:, 0 * H:1 * H])
            f = jax.nn.sigmoid(gates[:, 1 * H:2 * H])
            g = jnp.tanh(gates[:, 2 * H:3 * H])
            o = jax.nn.sigmoid(gates[:, 3 * H:4 * H])
            c_new = f * c_p + i * g
            h_new = o * jnp.tanh(c_new)
            io_sc[c0 + tl] = h_new
            return h_new, c_new

        if Tc <= 32:                                  # full unroll: max scheduler visibility
            hc = (h_prev, c_prev)
            for tl in range(Tc):
                hc = step(tl, hc)
            return hc
        return lax.fori_loop(0, Tc, step, (h_prev, c_prev), unroll=2)

    carry0 = (h0_ref[...], c0_ref[...])
    if n_chunks == 1:
        h_fin, c_fin = chunk_body(0, carry0)
    else:
        h_fin, c_fin = lax.fori_loop(0, n_chunks, chunk_body, carry0)

    ho_ref[...] = h_fin                               # written once per (batch-chunk, layer)
    co_ref[...] = c_fin

    @pl.when(l == n_layers - 1)
    def _():
        y_ref[...] = io_sc[...]                       # lstm_out written only on the last layer


def run_lstm(embed, h0, c0, w_ih_t, w_hh_t, bias, *, max_time_chunk=64):
    """embed (T, B, E); h0/c0 (L, B, H); w_ih_t/w_hh_t (L, H, 4H) pre-transposed bf16;
    bias (L, 1, 4H) f32.  Requires E == H so layer-0 weights stack with the rest."""
    T, B, E = embed.shape
    L, _, H = h0.shape
    assert E == H, "stacked-layer LSTM kernel requires embed_size == hidden_size"
    # batch-chunk axis: lets the two v7x TensorCores each take half the batch (only when aligned)
    Bc = B // 2 if (B >= 16 and B % 16 == 0) else B
    nb = B // Bc
    Tc = _largest_divisor_leq(T, max_time_chunk)

    bcp = _round_up(Bc, 8)
    raw = (T * Bc * E * 4                 # embed block
           + 4 * Bc * H * 4               # h0, c0, ho, co blocks
           + 2 * H * 4 * H * 2            # W_ih + W_hh (bf16)
           + 4 * H * 4                    # bias
           + T * Bc * H * 4               # y block
           + T * bcp * H * 4              # io scratch (sublane-padded)
           + Tc * bcp * 4 * H * 4)        # time-chunked gate scratch

    out_shapes = (
        jax.ShapeDtypeStruct((T, B, H), jnp.float32),
        jax.ShapeDtypeStruct((L, B, H), jnp.float32),
        jax.ShapeDtypeStruct((L, B, H), jnp.float32),
    )
    grid_spec = pltpu.PrefetchScalarGridSpec(
        num_scalar_prefetch=0,
        grid=(nb, L),
        in_specs=[
            pl.BlockSpec((T, Bc, E), lambda b, l: (0, b, 0)),
            pl.BlockSpec((None, Bc, H), lambda b, l: (l, b, 0)),
            pl.BlockSpec((None, Bc, H), lambda b, l: (l, b, 0)),
            pl.BlockSpec((None, E, 4 * H), lambda b, l: (l, 0, 0)),
            pl.BlockSpec((None, H, 4 * H), lambda b, l: (l, 0, 0)),
            pl.BlockSpec((None, 1, 4 * H), lambda b, l: (l, 0, 0)),
        ],
        out_specs=[
            pl.BlockSpec((T, Bc, H), lambda b, l: (0, b, 0)),
            pl.BlockSpec((None, Bc, H), lambda b, l: (l, b, 0)),
            pl.BlockSpec((None, Bc, H), lambda b, l: (l, b, 0)),
        ],
        scratch_shapes=[pltpu.VMEM((T, Bc, H), jnp.float32),        # current layer input/output
                        pltpu.VMEM((Tc, Bc, 4 * H), jnp.float32)],  # time-chunked input gates
    )
    return pl.pallas_call(
        _lstm_kernel,
        out_shape=out_shapes,
        grid_spec=grid_spec,
        compiler_params=pltpu.CompilerParams(
            dimension_semantics=("parallel", "arbitrary"),
            vmem_limit_bytes=_vmem_limit(raw)),
    )(embed, h0, c0, w_ih_t, w_hh_t, bias)


# ============== attention + p_gen + attention_concat kernel (grid over batch, parallel) ==============
def _attn_kernel(enc_ref, lstm_ref, emb_ref, mask_ref, pk_ref, wc_ref,
                 weights_ref, pgen_ref, ctx_ref):
    H = enc_ref.shape[-1]
    enc = enc_ref[...]                                   # (1, Te, H)
    lstm = lstm_ref[...]                                 # (1, Td, H)
    emb = emb_ref[...]                                   # (1, Td, E)

    # scores with decoder steps on sublanes, encoder steps on lanes -> lane-axis softmax
    s = jnp.einsum('bmh,bnh->bmn', lstm, enc,
                   preferred_element_type=jnp.float32)   # (1, Td, Te)
    # NOTE: masked positions set to 1e-10 (not -inf) BEFORE softmax -- exact PyTorch semantics;
    #       padded encoder positions therefore still get non-trivial attention weight.
    s = jnp.where(mask_ref[...] > 0.5, jnp.float32(1e-10), s)
    m = jnp.max(s, axis=-1, keepdims=True)
    e = jnp.exp(s - m)
    w = e * pl.reciprocal(jnp.sum(e, axis=-1, keepdims=True), approx=True)   # EUP divide
    weights_ref[...] = w                                 # lane-dense (1, Td, Te); transpose in XLA

    ws = jnp.einsum('bmn,bnd->bmd', w, enc,
                    preferred_element_type=jnp.float32)  # (1, Td, H)

    h_w = pk_ref[0:1, :]                                 # (1, H)
    s_w = pk_ref[1:2, :]
    x_w = pk_ref[2:3, :]
    b_c = pk_ref[3:4, :]
    g_b = pk_ref[4:5, :]                                 # g_bias in lane 0, zeros elsewhere

    # p_gen = sigmoid(h_w.ws + s_w.lstm + x_w.emb + g_bias); lane-sum of g_b row == g_bias
    pg = jnp.sum(ws * h_w + lstm * s_w + emb * x_w + g_b, axis=-1)   # (1, Td)
    pgen_ref[0] = jax.nn.sigmoid(pg)                     # Td on lanes

    # tanh(Linear_{2H->H}(concat([lstm, ws])))  == lstm @ Wc[:H] + ws @ Wc[H:]   (bf16 MXU, f32 acc)
    w1 = wc_ref[0:H, :]
    w2 = wc_ref[H:2 * H, :]
    ctx_ref[0] = jnp.tanh(
        jnp.dot(lstm[0].astype(jnp.bfloat16), w1, preferred_element_type=jnp.float32)
        + jnp.dot(ws[0].astype(jnp.bfloat16), w2, preferred_element_type=jnp.float32)
        + b_c)


def run_attention(enc_b, lstm_b, emb_b, mask3, pk, w_c_t):
    B, Te, H = enc_b.shape
    Td = lstm_b.shape[1]
    E = emb_b.shape[2]
    raw = ((Te * H + Td * H + Td * E + Te + 8 * H + Td * Te + Td + Td * H) * 4
           + 2 * H * H * 2)
    out_shapes = (
        jax.ShapeDtypeStruct((B, Td, Te), jnp.float32),   # attention weights (lane-dense)
        jax.ShapeDtypeStruct((B, 1, Td), jnp.float32),    # p_gen (Td on lanes)
        jax.ShapeDtypeStruct((B, Td, H), jnp.float32),    # tanh(attention_concat(...))
    )
    # TODO(synk): for very long T_enc, tile the encoder axis inside each program (flash-style
    #             online softmax) so per-step VMEM stays bounded on v7x's 64 MiB.
    return pl.pallas_call(
        _attn_kernel,
        out_shape=out_shapes,
        grid=(B,),
        in_specs=[
            pl.BlockSpec((1, Te, H), lambda b: (b, 0, 0)),
            pl.BlockSpec((1, Td, H), lambda b: (b, 0, 0)),
            pl.BlockSpec((1, Td, E), lambda b: (b, 0, 0)),
            pl.BlockSpec((1, 1, Te), lambda b: (b, 0, 0)),
            pl.BlockSpec((8, H), lambda b: (0, 0)),
            pl.BlockSpec((2 * H, H), lambda b: (0, 0)),
        ],
        out_specs=[
            pl.BlockSpec((1, Td, Te), lambda b: (b, 0, 0)),
            pl.BlockSpec((1, 1, Td), lambda b: (b, 0, 0)),
            pl.BlockSpec((1, Td, H), lambda b: (b, 0, 0)),
        ],
        compiler_params=pltpu.CompilerParams(
            dimension_semantics=("parallel",),
            vmem_limit_bytes=_vmem_limit(raw)),
    )(enc_b, lstm_b, emb_b, mask3, pk, w_c_t)


# ===================== vocab projection kernel (tiled over rows and vocab, both parallel) =====================
def _out_proj_kernel(x_ref, w_ref, b_ref, o_ref):
    o_ref[...] = (jnp.dot(x_ref[...].astype(jnp.bfloat16), w_ref[...],
                          preferred_element_type=jnp.float32) + b_ref[...])


def run_out_proj(x2d, w_out_t, b_out):
    M, H = x2d.shape
    Vp = w_out_t.shape[1]                                  # already padded to a 128-multiple at setup
    tile_v = next((c for c in (512, 256, 128) if Vp % c == 0), Vp)
    tile_m = _pick_row_tile(M)
    raw = (tile_m * H * 4 + H * tile_v * 2 + tile_v * 4 + tile_m * tile_v * 4)
    return pl.pallas_call(
        _out_proj_kernel,
        out_shape=jax.ShapeDtypeStruct((M, Vp), jnp.float32),
        grid=(M // tile_m, Vp // tile_v),
        in_specs=[
            pl.BlockSpec((tile_m, H), lambda i, j: (i, 0)),
            pl.BlockSpec((H, tile_v), lambda i, j: (0, j)),
            pl.BlockSpec((1, tile_v), lambda i, j: (0, j)),
        ],
        out_specs=pl.BlockSpec((tile_m, tile_v), lambda i, j: (i, j)),
        compiler_params=pltpu.CompilerParams(
            dimension_semantics=("parallel", "parallel"),
            vmem_limit_bytes=_vmem_limit(raw)),
    )(x2d, w_out_t, b_out)


# ============================ one-time parameter preparation (outside jit) ============================
def prepare_params(raw):
    """bf16-cast the MXU weights, pre-pad the vocab projection, and pack the tiny attention params.
    Done ONCE at setup so nothing here costs HBM traffic per forward call."""
    H = raw["h_weight"].shape[1]
    E = raw["x_weight"].shape[1]
    if E != H:
        # packed p_gen path multiplies x_weight against an H-wide row -> must fail loudly.
        raise ValueError("PointerGenerator Pallas kernels require embed_size == hidden_size")

    p = {"embedding": raw["embedding"],
         "w_ih_t": raw["w_ih_t"].astype(jnp.bfloat16),
         "w_hh_t": raw["w_hh_t"].astype(jnp.bfloat16),
         "lstm_b": raw["lstm_b"],
         "w_c_t": raw["w_c_t"].astype(jnp.bfloat16)}

    pk = jnp.zeros((8, H), jnp.float32)
    pk = pk.at[0].set(raw["h_weight"][0])
    pk = pk.at[1].set(raw["s_weight"][0])
    pk = pk.at[2].set(raw["x_weight"][0])
    pk = pk.at[3].set(raw["b_c"][0])
    pk = pk.at[4, 0].set(raw["g_bias"][0, 0])            # lane-0 trick: lane-sum == g_bias
    p["attn_pk"] = pk

    w_out, b_out = raw["w_out_t"], raw["b_out"]
    V = w_out.shape[1]
    if not any(V % c == 0 for c in (512, 256, 128)):
        Vp = _round_up(V, 128)                            # pad ONCE here, never per forward call
        w_out = jnp.pad(w_out, ((0, 0), (0, Vp - V)))
        b_out = jnp.pad(b_out, ((0, 0), (0, Vp - V)))
    p["w_out_t"] = w_out.astype(jnp.bfloat16)
    p["b_out"] = b_out
    return p


# ================================== full forward (glue) ==================================
def pointer_generator_forward(x_ids, h_i, c_i, encoder_output, attention_mask, params):
    T, B = x_ids.shape
    L, _, H = h_i.shape
    V, E = params["embedding"].shape

    # embedding lookup + dropout (eval: identity); the gather stays in XLA.
    embed = params["embedding"][x_ids]                       # (T, B, E)

    lstm_out, h_o, c_o = run_lstm(embed, h_i, c_i,
                                  params["w_ih_t"], params["w_hh_t"], params["lstm_b"])

    # batch-first views for the per-batch attention grid (layout plumbing kept in XLA).
    enc_b = jnp.transpose(encoder_output, (1, 0, 2))         # (B, T_enc, H)
    lstm_b = jnp.transpose(lstm_out, (1, 0, 2))              # (B, T, H)
    emb_b = jnp.transpose(embed, (1, 0, 2))                  # (B, T, E)
    mask3 = jnp.transpose(attention_mask.astype(jnp.float32), (1, 0))[:, None, :]   # (B,1,T_enc)

    weights_btd, pgen_b1t, ctx_b = run_attention(enc_b, lstm_b, emb_b, mask3,
                                                 params["attn_pk"], params["w_c_t"])

    weights = jnp.transpose(weights_btd, (0, 2, 1))          # module contract: (B, T_enc, T_dec)
    p_gen = jnp.transpose(pgen_b1t[:, 0, :], (1, 0))         # (T, B)   (tiny transpose)
    # TODO(synk): this ctx transpose is one HBM round-trip; removing it needs a batch-minor out
    #             block (blocked by the (8,128) rule for small B) or fusing it into the vocab
    #             projection's input spec.
    ctx = jnp.transpose(ctx_b, (1, 0, 2)).reshape(T * B, H)  # seq-first rows for the logits reshape

    logits2d = run_out_proj(ctx, params["w_out_t"], params["b_out"])
    if logits2d.shape[1] != V:                               # only when V needed padding at setup
        logits2d = logits2d[:, :V]
    logits = logits2d.reshape(T, B, V)                       # .squeeze() is identity here (T,B>1)
    return logits, h_o, c_o, p_gen, weights


# ================================== pure-JAX reference ==================================
def reference_forward(x_ids, h_i, c_i, encoder_output, attention_mask, params):
    T, B = x_ids.shape
    L, _, H = h_i.shape
    embed = params["embedding"][x_ids]
    h = [h_i[l] for l in range(L)]
    c = [c_i[l] for l in range(L)]
    outs = []
    for t in range(T):
        inp = embed[t]
        for l in range(L):
            gates = (jnp.dot(inp, params["w_ih_t"][l], precision=HIGH)
                     + jnp.dot(h[l], params["w_hh_t"][l], precision=HIGH)
                     + params["lstm_b"][l])
            i = jax.nn.sigmoid(gates[:, :H]); f = jax.nn.sigmoid(gates[:, H:2 * H])
            g = jnp.tanh(gates[:, 2 * H:3 * H]); o = jax.nn.sigmoid(gates[:, 3 * H:4 * H])
            c[l] = f * c[l] + i * g
            h[l] = o * jnp.tanh(c[l])
            inp = h[l]
        outs.append(inp)
    lstm_out = jnp.stack(outs)
    h_o, c_o = jnp.stack(h), jnp.stack(c)

    enc_b = jnp.transpose(encoder_output, (1, 0, 2))
    score = jnp.einsum('bnh,mbh->bnm', enc_b, lstm_out, precision=HIGH)
    score = jnp.where(attention_mask.T[:, :, None], jnp.float32(1e-10), score)
    w = jax.nn.softmax(score, axis=1)
    ws = jnp.einsum('bnm,bnd->mbd', w, enc_b, precision=HIGH)
    pg = jax.nn.sigmoid(jnp.sum(ws * params["h_weight"][0], -1)
                        + jnp.sum(lstm_out * params["s_weight"][0], -1)
                        + jnp.sum(embed * params["x_weight"][0], -1)
                        + params["g_bias"][0, 0])
    cat = jnp.concatenate([lstm_out, ws], axis=2)
    ctx = jnp.tanh(jnp.einsum('tbk,kh->tbh', cat, params["w_c_t"], precision=HIGH)
                   + params["b_c"][0])
    logits = jnp.einsum('tbh,hv->tbv', ctx, params["w_out_t"], precision=HIGH) + params["b_out"][0]
    return logits, h_o, c_o, pg, w


# ========================================= demo =========================================
if __name__ == "__main__":
    V, E, H, L = 256, 32, 32, 2          # embed_size == hidden_size (matches module defaults)
    B, T_DEC, T_ENC = 2, 8, 8

    key = jax.random.PRNGKey(0)
    ks = jax.random.split(key, 16)
    s = 0.1
    raw_params = {
        "embedding": jax.random.normal(ks[0], (V, E), jnp.float32) * s,
        "w_ih_t":    jax.random.normal(ks[1], (L, H, 4 * H), jnp.float32) * s,
        "w_hh_t":    jax.random.normal(ks[2], (L, H, 4 * H), jnp.float32) * s,
        "lstm_b":    jax.random.normal(ks[3], (L, 1, 4 * H), jnp.float32) * s,
        "h_weight":  jax.random.normal(ks[4], (1, H), jnp.float32) * s,
        "s_weight":  jax.random.normal(ks[5], (1, H), jnp.float32) * s,
        "x_weight":  jax.random.normal(ks[6], (1, E), jnp.float32) * s,
        "g_bias":    jax.random.normal(ks[7], (1, 1), jnp.float32) * s,
        "w_c_t":     jax.random.normal(ks[8], (2 * H, H), jnp.float32) * s,
        "b_c":       jax.random.normal(ks[9], (1, H), jnp.float32) * s,
        "w_out_t":   jax.random.normal(ks[10], (H, V), jnp.float32) * s,
        "b_out":     jax.random.normal(ks[11], (1, V), jnp.float32) * s,
    }
    params = prepare_params(raw_params)                       # one-time bf16 cast / pad / pack

    x_ids = jax.random.randint(ks[12], (T_DEC, B), 0, V, dtype=jnp.int32)
    h_i = jax.random.normal(ks[13], (L, B, H), jnp.float32) * s
    c_i = jax.random.normal(ks[14], (L, B, H), jnp.float32) * s
    encoder_output = jax.random.normal(ks[15], (T_ENC, B, H), jnp.float32) * s
    attention_mask = jnp.zeros((T_ENC, B), dtype=bool).at[T_ENC - 2:, 1].set(True)

    fwd = jax.jit(pointer_generator_forward)
    outs = fwd(x_ids, h_i, c_i, encoder_output, attention_mask, params)
    outs = jax.block_until_ready(outs)

    ref = reference_forward(x_ids, h_i, c_i, encoder_output, attention_mask, raw_params)
    names = ["logits", "h_o", "c_o", "p_gen", "weights"]
    for name, got, want in zip(names, outs, ref):
        np.testing.assert_allclose(np.asarray(got), np.asarray(want),
                                   rtol=5e-3, atol=5e-3, err_msg=name)

    print("KERNEL_OK")
</pallas_src>

<mosaic_0001>
module attributes {stable_mosaic.version = 11 : i64} {
  func.func @_lstm_kernel(%arg0: i32, %arg1: i32, %arg2: memref<8x2x32xf32, #tpu.memory_space<vmem>>, %arg3: memref<1x2x32xf32, #tpu.memory_space<vmem>>, %arg4: memref<1x2x32xf32, #tpu.memory_space<vmem>>, %arg5: memref<1x32x128xbf16, #tpu.memory_space<vmem>>, %arg6: memref<1x32x128xbf16, #tpu.memory_space<vmem>>, %arg7: memref<1x1x128xf32, #tpu.memory_space<vmem>>, %arg8: memref<8x2x32xf32, #tpu.memory_space<vmem>>, %arg9: memref<1x2x32xf32, #tpu.memory_space<vmem>>, %arg10: memref<1x2x32xf32, #tpu.memory_space<vmem>>, %arg11: memref<8x2x32xf32, #tpu.memory_space<vmem>>, %arg12: memref<8x2x128xf32, #tpu.memory_space<vmem>>) attributes {dimension_semantics = [#tpu.dimension_semantics<parallel>, #tpu.dimension_semantics<arbitrary>], iteration_bounds = array<i64: 1, 2>, scalar_prefetch = 0 : i64, scratch_operands = 2 : i64, tpu.core_type = #tpu.core_type<tc>, window_params = [{transform_indices = @transform_0, window_bounds = array<i64: 8, 2, 32>}, {transform_indices = @transform_1, window_bounds = array<i64: 1, 2, 32>}, {transform_indices = @transform_2, window_bounds = array<i64: 1, 2, 32>}, {transform_indices = @transform_3, window_bounds = array<i64: 1, 32, 128>}, {transform_indices = @transform_4, window_bounds = array<i64: 1, 32, 128>}, {transform_indices = @transform_5, window_bounds = array<i64: 1, 1, 128>}, {transform_indices = @transform_6, window_bounds = array<i64: 8, 2, 32>}, {transform_indices = @transform_7, window_bounds = array<i64: 1, 2, 32>}, {transform_indices = @transform_8, window_bounds = array<i64: 1, 2, 32>}]} {
    %c0 = arith.constant 0 : index
    %c0_0 = arith.constant 0 : index
    %c0_1 = arith.constant 0 : index
    %0 = vector.load %arg3[%c0, %c0_0, %c0_1] : memref<1x2x32xf32, #tpu.memory_space<vmem>>, vector<1x2x32xf32>
    %1 = vector.shape_cast %0 : vector<1x2x32xf32> to vector<2x32xf32>
    %c0_2 = arith.constant 0 : index
    %c0_3 = arith.constant 0 : index
    %c0_4 = arith.constant 0 : index
    %2 = vector.load %arg4[%c0_2, %c0_3, %c0_4] : memref<1x2x32xf32, #tpu.memory_space<vmem>>, vector<1x2x32xf32>
    %3 = vector.shape_cast %2 : vector<1x2x32xf32> to vector<2x32xf32>
    %c0_i32 = arith.constant 0 : i32
    %4 = arith.cmpi eq, %arg1, %c0_i32 : i32
    %5 = arith.extui %4 : i1 to i32
    %c0_i32_5 = arith.constant 0 : i32
    %6 = arith.cmpi ne, %5, %c0_i32_5 : i32
    scf.if %6 {
      %c0_111 = arith.constant 0 : index
      %c0_112 = arith.constant 0 : index
      %c0_113 = arith.constant 0 : index
      %299 = vector.load %arg2[%c0_111, %c0_112, %c0_113] : memref<8x2x32xf32, #tpu.memory_space<vmem>>, vector<8x2x32xf32>
      %300 = vector.shape_cast %299 : vector<8x2x32xf32> to vector<16x32xf32>
      %301 = arith.truncf %300 : vector<16x32xf32> to vector<16x32xbf16>
      %c0_114 = arith.constant 0 : index
      %c0_115 = arith.constant 0 : index
      %c0_116 = arith.constant 0 : index
      %302 = vector.load %arg5[%c0_114, %c0_115, %c0_116] : memref<1x32x128xbf16, #tpu.memory_space<vmem>>, vector<1x32x128xbf16>
      %303 = vector.shape_cast %302 : vector<1x32x128xbf16> to vector<32x128xbf16>
      %cst_117 = arith.constant dense<0.000000e+00> : vector<16x128xf32>
      %304 = tpu.matmul %301, %303, %cst_117 {dimension_numbers = #tpu.dot_dimension_numbers<[1], [0], [0], [1], [0, 0, 1, 1], [], []>} : vector<16x32xbf16>, vector<32x128xbf16>, vector<16x128xf32> -> vector<16x128xf32>
      %305 = vector.shape_cast %304 : vector<16x128xf32> to vector<8x2x128xf32>
      %c0_118 = arith.constant 0 : index
      %c0_119 = arith.constant 0 : index
      %c0_120 = arith.constant 0 : index
      %306 = vector.load %arg7[%c0_118, %c0_119, %c0_120] : memref<1x1x128xf32, #tpu.memory_space<vmem>>, vector<1x1x128xf32>
      %307 = vector.shape_cast %306 : vector<1x1x128xf32> to vector<1x128xf32>
      %308 = vector.shape_cast %307 : vector<1x128xf32> to vector<1x1x128xf32>
      %309 = vector.broadcast %308 : vector<1x1x128xf32> to vector<8x2x128xf32>
      %310 = arith.addf %305, %309 : vector<8x2x128xf32>
      %c0_121 = arith.constant 0 : index
      %c0_122 = arith.constant 0 : index
      %c0_123 = arith.constant 0 : index
      %311 = vector.load %arg12[%c0_121, %c0_122, %c0_123] : memref<8x2x128xf32, #tpu.memory_space<vmem>>, vector<8x2x128xf32>
      tpu.vector_store %arg12[%c0_121, %c0_122, %c0_123], %310 {strides = array<i32>} : memref<8x2x128xf32, #tpu.memory_space<vmem>>, vector<8x2x128xf32>,
    } else {
    }
    %c0_i32_6 = arith.constant 0 : i32
    %7 = arith.cmpi ne, %arg1, %c0_i32_6 : i32
    %8 = arith.extui %7 : i1 to i32
    %c0_i32_7 = arith.constant 0 : i32
    %9 = arith.cmpi ne, %8, %c0_i32_7 : i32
    scf.if %9 {
      %c0_111 = arith.constant 0 : index
      %c0_112 = arith.constant 0 : index
      %c0_113 = arith.constant 0 : index
      %299 = vector.load %arg11[%c0_111, %c0_112, %c0_113] : memref<8x2x32xf32, #tpu.memory_space<vmem>>, vector<8x2x32xf32>
      %300 = vector.shape_cast %299 : vector<8x2x32xf32> to vector<16x32xf32>
      %301 = arith.truncf %300 : vector<16x32xf32> to vector<16x32xbf16>
      %c0_114 = arith.constant 0 : index
      %c0_115 = arith.constant 0 : index
      %c0_116 = arith.constant 0 : index
      %302 = vector.load %arg5[%c0_114, %c0_115, %c0_116] : memref<1x32x128xbf16, #tpu.memory_space<vmem>>, vector<1x32x128xbf16>
      %303 = vector.shape_cast %302 : vector<1x32x128xbf16> to vector<32x128xbf16>
      %cst_117 = arith.constant dense<0.000000e+00> : vector<16x128xf32>
      %304 = tpu.matmul %301, %303, %cst_117 {dimension_numbers = #tpu.dot_dimension_numbers<[1], [0], [0], [1], [0, 0, 1, 1], [], []>} : vector<16x32xbf16>, vector<32x128xbf16>, vector<16x128xf32> -> vector<16x128xf32>
      %305 = vector.shape_cast %304 : vector<16x128xf32> to vector<8x2x128xf32>
      %c0_118 = arith.constant 0 : index
      %c0_119 = arith.constant 0 : index
      %c0_120 = arith.constant 0 : index
      %306 = vector.load %arg7[%c0_118, %c0_119, %c0_120] : memref<1x1x128xf32, #tpu.memory_space<vmem>>, vector<1x1x128xf32>
      %307 = vector.shape_cast %306 : vector<1x1x128xf32> to vector<1x128xf32>
      %308 = vector.shape_cast %307 : vector<1x128xf32> to vector<1x1x128xf32>
      %309 = vector.broadcast %308 : vector<1x1x128xf32> to vector<8x2x128xf32>
      %310 = arith.addf %305, %309 : vector<8x2x128xf32>
      %c0_121 = arith.constant 0 : index
      %c0_122 = arith.constant 0 : index
      %c0_123 = arith.constant 0 : index
      %311 = vector.load %arg12[%c0_121, %c0_122, %c0_123] : memref<8x2x128xf32, #tpu.memory_space<vmem>>, vector<8x2x128xf32>
      tpu.vector_store %arg12[%c0_121, %c0_122, %c0_123], %310 {strides = array<i32>} : memref<8x2x128xf32, #tpu.memory_space<vmem>>, vector<8x2x128xf32>,
    } else {
    }
    %c0_8 = arith.constant 0 : index
    %c0_9 = arith.constant 0 : index
    %c0_10 = arith.constant 0 : index
    %10 = vector.load %arg12[%c0_8, %c0_9, %c0_10] : memref<8x2x128xf32, #tpu.memory_space<vmem>>, vector<1x2x128xf32>
    %11 = vector.shape_cast %10 : vector<1x2x128xf32> to vector<2x128xf32>
    %12 = arith.truncf %1 : vector<2x32xf32> to vector<2x32xbf16>
    %c0_11 = arith.constant 0 : index
    %c0_12 = arith.constant 0 : index
    %c0_13 = arith.constant 0 : index
    %13 = vector.load %arg6[%c0_11, %c0_12, %c0_13] : memref<1x32x128xbf16, #tpu.memory_space<vmem>>, vector<1x32x128xbf16>
    %14 = vector.shape_cast %13 : vector<1x32x128xbf16> to vector<32x128xbf16>
    %cst = arith.constant dense<0.000000e+00> : vector<2x128xf32>
    %15 = tpu.matmul %12, %14, %cst {dimension_numbers = #tpu.dot_dimension_numbers<[1], [0], [0], [1], [0, 0, 1, 1], [], []>} : vector<2x32xbf16>, vector<32x128xbf16>, vector<2x128xf32> -> vector<2x128xf32>
    %16 = arith.addf %11, %15 : vector<2x128xf32>
    %17 = vector.extract_strided_slice %16 {offsets = [0, 0], sizes = [2, 32], strides = [1, 1]} : vector<2x128xf32> to vector<2x32xf32>
    %18 = arith.negf %17 : vector<2x32xf32>
    %19 = math.exp %18 : vector<2x32xf32>
    %cst_14 = arith.constant 1.000000e+00 : f32
    %20 = vector.broadcast %cst_14 : f32 to vector<2x32xf32>
    %21 = arith.addf %20, %19 : vector<2x32xf32>
    %22 = arith.divf %20, %21 : vector<2x32xf32>
    %23 = vector.extract_strided_slice %16 {offsets = [0, 32], sizes = [2, 32], strides = [1, 1]} : vector<2x128xf32> to vector<2x32xf32>
    %24 = arith.negf %23 : vector<2x32xf32>
    %25 = math.exp %24 : vector<2x32xf32>
    %cst_15 = arith.constant 1.000000e+00 : f32
    %26 = vector.broadcast %cst_15 : f32 to vector<2x32xf32>
    %27 = arith.addf %26, %25 : vector<2x32xf32>
    %28 = arith.divf %26, %27 : vector<2x32xf32>
    %29 = vector.extract_strided_slice %16 {offsets = [0, 64], sizes = [2, 32], strides = [1, 1]} : vector<2x128xf32> to vector<2x32xf32>
    %30 = math.tanh %29 : vector<2x32xf32>
    %31 = vector.extract_strided_slice %16 {offsets = [0, 96], sizes = [2, 32], strides = [1, 1]} : vector<2x128xf32> to vector<2x32xf32>
    %32 = arith.negf %31 : vector<2x32xf32>
    %33 = math.exp %32 : vector<2x32xf32>
    %cst_16 = arith.constant 1.000000e+00 : f32
    %34 = vector.broadcast %cst_16 : f32 to vector<2x32xf32>
    %35 = arith.addf %34, %33 : vector<2x32xf32>
    %36 = arith.divf %34, %35 : vector<2x32xf32>
    %37 = arith.mulf %28, %3 : vector<2x32xf32>
    %38 = arith.mulf %22, %30 : vector<2x32xf32>
    %39 = arith.addf %37, %38 : vector<2x32xf32>
    %40 = math.tanh %39 : vector<2x32xf32>
    %41 = arith.mulf %36, %40 : vector<2x32xf32>
    %c0_17 = arith.constant 0 : index
    %c0_18 = arith.constant 0 : index
    %c0_19 = arith.constant 0 : index
    %42 = vector.load %arg11[%c0_17, %c0_18, %c0_19] : memref<8x2x32xf32, #tpu.memory_space<vmem>>, vector<1x2x32xf32>
    %43 = vector.shape_cast %42 : vector<1x2x32xf32> to vector<2x32xf32>
    %44 = vector.shape_cast %41 : vector<2x32xf32> to vector<1x2x32xf32>
    tpu.vector_store %arg11[%c0_17, %c0_18, %c0_19], %44 {strides = array<i32>} : memref<8x2x32xf32, #tpu.memory_space<vmem>>, vector<1x2x32xf32>,
    %c1 = arith.constant 1 : index
    %c0_20 = arith.constant 0 : index
    %c0_21 = arith.constant 0 : index
    %45 = vector.load %arg12[%c1, %c0_20, %c0_21] : memref<8x2x128xf32, #tpu.memory_space<vmem>>, vector<1x2x128xf32>
    %46 = vector.shape_cast %45 : vector<1x2x128xf32> to vector<2x128xf32>
    %47 = arith.truncf %41 : vector<2x32xf32> to vector<2x32xbf16>
    %c0_22 = arith.constant 0 : index
    %c0_23 = arith.constant 0 : index
    %c0_24 = arith.constant 0 : index
    %48 = vector.load %arg6[%c0_22, %c0_23, %c0_24] : memref<1x32x128xbf16, #tpu.memory_space<vmem>>, vector<1x32x128xbf16>
    %49 = vector.shape_cast %48 : vector<1x32x128xbf16> to vector<32x128xbf16>
    %cst_25 = arith.constant dense<0.000000e+00> : vector<2x128xf32>
    %50 = tpu.matmul %47, %49, %cst_25 {dimension_numbers = #tpu.dot_dimension_numbers<[1], [0], [0], [1], [0, 0, 1, 1], [], []>} : vector<2x32xbf16>, vector<32x128xbf16>, vector<2x128xf32> -> vector<2x128xf32>
    %51 = arith.addf %46, %50 : vector<2x128xf32>
    %52 = vector.extract_strided_slice %51 {offsets = [0, 0], sizes = [2, 32], strides = [1, 1]} : vector<2x128xf32> to vector<2x32xf32>
    %53 = arith.negf %52 : vector<2x32xf32>
    %54 = math.exp %53 : vector<2x32xf32>
    %cst_26 = arith.constant 1.000000e+00 : f32
    %55 = vector.broadcast %cst_26 : f32 to vector<2x32xf32>
    %56 = arith.addf %55, %54 : vector<2x32xf32>
    %57 = arith.divf %55, %56 : vector<2x32xf32>
    %58 = vector.extract_strided_slice %51 {offsets = [0, 32], sizes = [2, 32], strides = [1, 1]} : vector<2x128xf32> to vector<2x32xf32>
    %59 = arith.negf %58 : vector<2x32xf32>
    %60 = math.exp %59 : vector<2x32xf32>
    %cst_27 = arith.constant 1.000000e+00 : f32
    %61 = vector.broadcast %cst_27 : f32 to vector<2x32xf32>
    %62 = arith.addf %61, %60 : vector<2x32xf32>
    %63 = arith.divf %61, %62 : vector<2x32xf32>
    %64 = vector.extract_strided_slice %51 {offsets = [0, 64], sizes = [2, 32], strides = [1, 1]} : vector<2x128xf32> to vector<2x32xf32>
    %65 = math.tanh %64 : vector<2x32xf32>
    %66 = vector.extract_strided_slice %51 {offsets = [0, 96], sizes = [2, 32], strides = [1, 1]} : vector<2x128xf32> to vector<2x32xf32>
    %67 = arith.negf %66 : vector<2x32xf32>
    %68 = math.exp %67 : vector<2x32xf32>
    %cst_28 = arith.constant 1.000000e+00 : f32
    %69 = vector.broadcast %cst_28 : f32 to vector<2x32xf32>
    %70 = arith.addf %69, %68 : vector<2x32xf32>
    %71 = arith.divf %69, %70 : vector<2x32xf32>
    %72 = arith.mulf %63, %39 : vector<2x32xf32>
    %73 = arith.mulf %57, %65 : vector<2x32xf32>
    %74 = arith.addf %72, %73 : vector<2x32xf32>
    %75 = math.tanh %74 : vector<2x32xf32>
    %76 = arith.mulf %71, %75 : vector<2x32xf32>
    %c1_29 = arith.constant 1 : index
    %c0_30 = arith.constant 0 : index
    %c0_31 = arith.constant 0 : index
    %77 = vector.load %arg11[%c1_29, %c0_30, %c0_31] : memref<8x2x32xf32, #tpu.memory_space<vmem>>, vector<1x2x32xf32>
    %78 = vector.shape_cast %77 : vector<1x2x32xf32> to vector<2x32xf32>
    %79 = vector.shape_cast %76 : vector<2x32xf32> to vector<1x2x32xf32>
    tpu.vector_store %arg11[%c1_29, %c0_30, %c0_31], %79 {strides = array<i32>} : memref<8x2x32xf32, #tpu.memory_space<vmem>>, vector<1x2x32xf32>,
    %c2 = arith.constant 2 : index
    %c0_32 = arith.constant 0 : index
    %c0_33 = arith.constant 0 : index
    %80 = vector.load %arg12[%c2, %c0_32, %c0_33] : memref<8x2x128xf32, #tpu.memory_space<vmem>>, vector<1x2x128xf32>
    %81 = vector.shape_cast %80 : vector<1x2x128xf32> to vector<2x128xf32>
    %82 = arith.truncf %76 : vector<2x32xf32> to vector<2x32xbf16>
    %c0_34 = arith.constant 0 : index
    %c0_35 = arith.constant 0 : index
    %c0_36 = arith.constant 0 : index
    %83 = vector.load %arg6[%c0_34, %c0_35, %c0_36] : memref<1x32x128xbf16, #tpu.memory_space<vmem>>, vector<1x32x128xbf16>
    %84 = vector.shape_cast %83 : vector<1x32x128xbf16> to vector<32x128xbf16>
    %cst_37 = arith.constant dense<0.000000e+00> : vector<2x128xf32>
    %85 = tpu.matmul %82, %84, %cst_37 {dimension_numbers = #tpu.dot_dimension_numbers<[1], [0], [0], [1], [0, 0, 1, 1], [], []>} : vector<2x32xbf16>, vector<32x128xbf16>, vector<2x128xf32> -> vector<2x128xf32>
    %86 = arith.addf %81, %85 : vector<2x128xf32>
    %87 = vector.extract_strided_slice %86 {offsets = [0, 0], sizes = [2, 32], strides = [1, 1]} : vector<2x128xf32> to vector<2x32xf32>
    %88 = arith.negf %87 : vector<2x32xf32>
    %89 = math.exp %88 : vector<2x32xf32>
    %cst_38 = arith.constant 1.000000e+00 : f32
    %90 = vector.broadcast %cst_38 : f32 to vector<2x32xf32>
    %91 = arith.addf %90, %89 : vector<2x32xf32>
    %92 = arith.divf %90, %91 : vector<2x32xf32>
    %93 = vector.extract_strided_slice %86 {offsets = [0, 32], sizes = [2, 32], strides = [1, 1]} : vector<2x128xf32> to vector<2x32xf32>
    %94 = arith.negf %93 : vector<2x32xf32>
    %95 = math.exp %94 : vector<2x32xf32>
    %cst_39 = arith.constant 1.000000e+00 : f32
    %96 = vector.broadcast %cst_39 : f32 to vector<2x32xf32>
    %97 = arith.addf %96, %95 : vector<2x32xf32>
    %98 = arith.divf %96, %97 : vector<2x32xf32>
    %99 = vector.extract_strided_slice %86 {offsets = [0, 64], sizes = [2, 32], strides = [1, 1]} : vector<2x128xf32> to vector<2x32xf32>
    %100 = math.tanh %99 : vector<2x32xf32>
    %101 = vector.extract_strided_slice %86 {offsets = [0, 96], sizes = [2, 32], strides = [1, 1]} : vector<2x128xf32> to vector<2x32xf32>
    %102 = arith.negf %101 : vector<2x32xf32>
    %103 = math.exp %102 : vector<2x32xf32>
    %cst_40 = arith.constant 1.000000e+00 : f32
    %104 = vector.broadcast %cst_40 : f32 to vector<2x32xf32>
    %105 = arith.addf %104, %103 : vector<2x32xf32>
    %106 = arith.divf %104, %105 : vector<2x32xf32>
    %107 = arith.mulf %98, %74 : vector<2x32xf32>
    %108 = arith.mulf %92, %100 : vector<2x32xf32>
    %109 = arith.addf %107, %108 : vector<2x32xf32>
    %110 = math.tanh %109 : vector<2x32xf32>
    %111 = arith.mulf %106, %110 : vector<2x32xf32>
    %c2_41 = arith.constant 2 : index
    %c0_42 = arith.constant 0 : index
    %c0_43 = arith.constant 0 : index
    %112 = vector.load %arg11[%c2_41, %c0_42, %c0_43] : memref<8x2x32xf32, #tpu.memory_space<vmem>>, vector<1x2x32xf32>
    %113 = vector.shape_cast %112 : vector<1x2x32xf32> to vector<2x32xf32>
    %114 = vector.shape_cast %111 : vector<2x32xf32> to vector<1x2x32xf32>
    tpu.vector_store %arg11[%c2_41, %c0_42, %c0_43], %114 {strides = array<i32>} : memref<8x2x32xf32, #tpu.memory_space<vmem>>, vector<1x2x32xf32>,
    %c3 = arith.constant 3 : index
    %c0_44 = arith.constant 0 : index
    %c0_45 = arith.constant 0 : index
    %115 = vector.load %arg12[%c3, %c0_44, %c0_45] : memref<8x2x128xf32, #tpu.memory_space<vmem>>, vector<1x2x128xf32>
    %116 = vector.shape_cast %115 : vector<1x2x128xf32> to vector<2x128xf32>
    %117 = arith.truncf %111 : vector<2x32xf32> to vector<2x32xbf16>
    %c0_46 = arith.constant 0 : index
    %c0_47 = arith.constant 0 : index
    %c0_48 = arith.constant 0 : index
    %118 = vector.load %arg6[%c0_46, %c0_47, %c0_48] : memref<1x32x128xbf16, #tpu.memory_space<vmem>>, vector<1x32x128xbf16>
    %119 = vector.shape_cast %118 : vector<1x32x128xbf16> to vector<32x128xbf16>
    %cst_49 = arith.constant dense<0.000000e+00> : vector<2x128xf32>
    %120 = tpu.matmul %117, %119, %cst_49 {dimension_numbers = #tpu.dot_dimension_numbers<[1], [0], [0], [1], [0, 0, 1, 1], [], []>} : vector<2x32xbf16>, vector<32x128xbf16>, vector<2x128xf32> -> vector<2x128xf32>
    %121 = arith.addf %116, %120 : vector<2x128xf32>
    %122 = vector.extract_strided_slice %121 {offsets = [0, 0], sizes = [2, 32], strides = [1, 1]} : vector<2x128xf32> to vector<2x32xf32>
    %123 = arith.negf %122 : vector<2x32xf32>
    %124 = math.exp %123 : vector<2x32xf32>
    %cst_50 = arith.constant 1.000000e+00 : f32
    %125 = vector.broadcast %cst_50 : f32 to vector<2x32xf32>
    %126 = arith.addf %125, %124 : vector<2x32xf32>
    %127 = arith.divf %125, %126 : vector<2x32xf32>
    %128 = vector.extract_strided_slice %121 {offsets = [0, 32], sizes = [2, 32], strides = [1, 1]} : vector<2x128xf32> to vector<2x32xf32>
    %129 = arith.negf %128 : vector<2x32xf32>
    %130 = math.exp %129 : vector<2x32xf32>
    %cst_51 = arith.constant 1.000000e+00 : f32
    %131 = vector.broadcast %cst_51 : f32 to vector<2x32xf32>
    %132 = arith.addf %131, %130 : vector<2x32xf32>
    %133 = arith.divf %131, %132 : vector<2x32xf32>
    %134 = vector.extract_strided_slice %121 {offsets = [0, 64], sizes = [2, 32], strides = [1, 1]} : vector<2x128xf32> to vector<2x32xf32>
    %135 = math.tanh %134 : vector<2x32xf32>
    %136 = vector.extract_strided_slice %121 {offsets = [0, 96], sizes = [2, 32], strides = [1, 1]} : vector<2x128xf32> to vector<2x32xf32>
    %137 = arith.negf %136 : vector<2x32xf32>
    %138 = math.exp %137 : vector<2x32xf32>
    %cst_52 = arith.constant 1.000000e+00 : f32
    %139 = vector.broadcast %cst_52 : f32 to vector<2x32xf32>
    %140 = arith.addf %139, %138 : vector<2x32xf32>
    %141 = arith.divf %139, %140 : vector<2x32xf32>
    %142 = arith.mulf %133, %109 : vector<2x32xf32>
    %143 = arith.mulf %127, %135 : vector<2x32xf32>
    %144 = arith.addf %142, %143 : vector<2x32xf32>
    %145 = math.tanh %144 : vector<2x32xf32>
    %146 = arith.mulf %141, %145 : vector<2x32xf32>
    %c3_53 = arith.constant 3 : index
    %c0_54 = arith.constant 0 : index
    %c0_55 = arith.constant 0 : index
    %147 = vector.load %arg11[%c3_53, %c0_54, %c0_55] : memref<8x2x32xf32, #tpu.memory_space<vmem>>, vector<1x2x32xf32>
    %148 = vector.shape_cast %147 : vector<1x2x32xf32> to vector<2x32xf32>
    %149 = vector.shape_cast %146 : vector<2x32xf32> to vector<1x2x32xf32>
    tpu.vector_store %arg11[%c3_53, %c0_54, %c0_55], %149 {strides = array<i32>} : memref<8x2x32xf32, #tpu.memory_space<vmem>>, vector<1x2x32xf32>,
    %c4 = arith.constant 4 : index
    %c0_56 = arith.constant 0 : index
    %c0_57 = arith.constant 0 : index
    %150 = vector.load %arg12[%c4, %c0_56, %c0_57] : memref<8x2x128xf32, #tpu.memory_space<vmem>>, vector<1x2x128xf32>
    %151 = vector.shape_cast %150 : vector<1x2x128xf32> to vector<2x128xf32>
    %152 = arith.truncf %146 : vector<2x32xf32> to vector<2x32xbf16>
    %c0_58 = arith.constant 0 : index
    %c0_59 = arith.constant 0 : index
    %c0_60 = arith.constant 0 : index
    %153 = vector.load %arg6[%c0_58, %c0_59, %c0_60] : memref<1x32x128xbf16, #tpu.memory_space<vmem>>, vector<1x32x128xbf16>
    %154 = vector.shape_cast %153 : vector<1x32x128xbf16> to vector<32x128xbf16>
    %cst_61 = arith.constant dense<0.000000e+00> : vector<2x128xf32>
    %155 = tpu.matmul %152, %154, %cst_61 {dimension_numbers = #tpu.dot_dimension_numbers<[1], [0], [0], [1], [0, 0, 1, 1], [], []>} : vector<2x32xbf16>, vector<32x128xbf16>, vector<2x128xf32> -> vector<2x128xf32>
    %156 = arith.addf %151, %155 : vector<2x128xf32>
    %157 = vector.extract_strided_slice %156 {offsets = [0, 0], sizes = [2, 32], strides = [1, 1]} : vector<2x128xf32> to vector<2x32xf32>
    %158 = arith.negf %157 : vector<2x32xf32>
    %159 = math.exp %158 : vector<2x32xf32>
    %cst_62 = arith.constant 1.000000e+00 : f32
    %160 = vector.broadcast %cst_62 : f32 to vector<2x32xf32>
    %161 = arith.addf %160, %159 : vector<2x32xf32>
    %162 = arith.divf %160, %161 : vector<2x32xf32>
    %163 = vector.extract_strided_slice %156 {offsets = [0, 32], sizes = [2, 32], strides = [1, 1]} : vector<2x128xf32> to vector<2x32xf32>
    %164 = arith.negf %163 : vector<2x32xf32>
    %165 = math.exp %164 : vector<2x32xf32>
    %cst_63 = arith.constant 1.000000e+00 : f32
    %166 = vector.broadcast %cst_63 : f32 to vector<2x32xf32>
    %167 = arith.addf %166, %165 : vector<2x32xf32>
    %168 = arith.divf %166, %167 : vector<2x32xf32>
    %169 = vector.extract_strided_slice %156 {offsets = [0, 64], sizes = [2, 32], strides = [1, 1]} : vector<2x128xf32> to vector<2x32xf32>
    %170 = math.tanh %169 : vector<2x32xf32>
    %171 = vector.extract_strided_slice %156 {offsets = [0, 96], sizes = [2, 32], strides = [1, 1]} : vector<2x128xf32> to vector<2x32xf32>
    %172 = arith.negf %171 : vector<2x32xf32>
    %173 = math.exp %172 : vector<2x32xf32>
    %cst_64 = arith.constant 1.000000e+00 : f32
    %174 = vector.broadcast %cst_64 : f32 to vector<2x32xf32>
    %175 = arith.addf %174, %173 : vector<2x32xf32>
    %176 = arith.divf %174, %175 : vector<2x32xf32>
    %177 = arith.mulf %168, %144 : vector<2x32xf32>
    %178 = arith.mulf %162, %170 : vector<2x32xf32>
    %179 = arith.addf %177, %178 : vector<2x32xf32>
    %180 = math.tanh %179 : vector<2x32xf32>
    %181 = arith.mulf %176, %180 : vector<2x32xf32>
    %c4_65 = arith.constant 4 : index
    %c0_66 = arith.constant 0 : index
    %c0_67 = arith.constant 0 : index
    %182 = vector.load %arg11[%c4_65, %c0_66, %c0_67] : memref<8x2x32xf32, #tpu.memory_space<vmem>>, vector<1x2x32xf32>
    %183 = vector.shape_cast %182 : vector<1x2x32xf32> to vector<2x32xf32>
    %184 = vector.shape_cast %181 : vector<2x32xf32> to vector<1x2x32xf32>
    tpu.vector_store %arg11[%c4_65, %c0_66, %c0_67], %184 {strides = array<i32>} : memref<8x2x32xf32, #tpu.memory_space<vmem>>, vector<1x2x32xf32>,
    %c5 = arith.constant 5 : index
    %c0_68 = arith.constant 0 : index
    %c0_69 = arith.constant 0 : index
    %185 = vector.load %arg12[%c5, %c0_68, %c0_69] : memref<8x2x128xf32, #tpu.memory_space<vmem>>, vector<1x2x128xf32>
    %186 = vector.shape_cast %185 : vector<1x2x128xf32> to vector<2x128xf32>
    %187 = arith.truncf %181 : vector<2x32xf32> to vector<2x32xbf16>
    %c0_70 = arith.constant 0 : index
    %c0_71 = arith.constant 0 : index
    %c0_72 = arith.constant 0 : index
    %188 = vector.load %arg6[%c0_70, %c0_71, %c0_72] : memref<1x32x128xbf16, #tpu.memory_space<vmem>>, vector<1x32x128xbf16>
    %189 = vector.shape_cast %188 : vector<1x32x128xbf16> to vector<32x128xbf16>
    %cst_73 = arith.constant dense<0.000000e+00> : vector<2x128xf32>
    %190 = tpu.matmul %187, %189, %cst_73 {dimension_numbers = #tpu.dot_dimension_numbers<[1], [0], [0], [1], [0, 0, 1, 1], [], []>} : vector<2x32xbf16>, vector<32x128xbf16>, vector<2x128xf32> -> vector<2x128xf32>
    %191 = arith.addf %186, %190 : vector<2x128xf32>
    %192 = vector.extract_strided_slice %191 {offsets = [0, 0], sizes = [2, 32], strides = [1, 1]} : vector<2x128xf32> to vector<2x32xf32>
    %193 = arith.negf %192 : vector<2x32xf32>
    %194 = math.exp %193 : vector<2x32xf32>
    %cst_74 = arith.constant 1.000000e+00 : f32
    %195 = vector.broadcast %cst_74 : f32 to vector<2x32xf32>
    %196 = arith.addf %195, %194 : vector<2x32xf32>
    %197 = arith.divf %195, %196 : vector<2x32xf32>
    %198 = vector.extract_strided_slice %191 {offsets = [0, 32], sizes = [2, 32], strides = [1, 1]} : vector<2x128xf32> to vector<2x32xf32>
    %199 = arith.negf %198 : vector<2x32xf32>
    %200 = math.exp %199 : vector<2x32xf32>
    %cst_75 = arith.constant 1.000000e+00 : f32
    %201 = vector.broadcast %cst_75 : f32 to vector<2x32xf32>
    %202 = arith.addf %201, %200 : vector<2x32xf32>
    %203 = arith.divf %201, %202 : vector<2x32xf32>
    %204 = vector.extract_strided_slice %191 {offsets = [0, 64], sizes = [2, 32], strides = [1, 1]} : vector<2x128xf32> to vector<2x32xf32>
    %205 = math.tanh %204 : vector<2x32xf32>
    %206 = vector.extract_strided_slice %191 {offsets = [0, 96], sizes = [2, 32], strides = [1, 1]} : vector<2x128xf32> to vector<2x32xf32>
    %207 = arith.negf %206 : vector<2x32xf32>
    %208 = math.exp %207 : vector<2x32xf32>
    %cst_76 = arith.constant 1.000000e+00 : f32
    %209 = vector.broadcast %cst_76 : f32 to vector<2x32xf32>
    %210 = arith.addf %209, %208 : vector<2x32xf32>
    %211 = arith.divf %209, %210 : vector<2x32xf32>
    %212 = arith.mulf %203, %179 : vector<2x32xf32>
    %213 = arith.mulf %197, %205 : vector<2x32xf32>
    %214 = arith.addf %212, %213 : vector<2x32xf32>
    %215 = math.tanh %214 : vector<2x32xf32>
    %216 = arith.mulf %211, %215 : vector<2x32xf32>
    %c5_77 = arith.constant 5 : index
    %c0_78 = arith.constant 0 : index
    %c0_79 = arith.constant 0 : index
    %217 = vector.load %arg11[%c5_77, %c0_78, %c0_79] : memref<8x2x32xf32, #tpu.memory_space<vmem>>, vector<1x2x32xf32>
    %218 = vector.shape_cast %217 : vector<1x2x32xf32> to vector<2x32xf32>
    %219 = vector.shape_cast %216 : vector<2x32xf32> to vector<1x2x32xf32>
    tpu.vector_store %arg11[%c5_77, %c0_78, %c0_79], %219 {strides = array<i32>} : memref<8x2x32xf32, #tpu.memory_space<vmem>>, vector<1x2x32xf32>,
    %c6 = arith.constant 6 : index
    %c0_80 = arith.constant 0 : index
    %c0_81 = arith.constant 0 : index
    %220 = vector.load %arg12[%c6, %c0_80, %c0_81] : memref<8x2x128xf32, #tpu.memory_space<vmem>>, vector<1x2x128xf32>
    %221 = vector.shape_cast %220 : vector<1x2x128xf32> to vector<2x128xf32>
    %222 = arith.truncf %216 : vector<2x32xf32> to vector<2x32xbf16>
    %c0_82 = arith.constant 0 : index
    %c0_83 = arith.constant 0 : index
    %c0_84 = arith.constant 0 : index
    %223 = vector.load %arg6[%c0_82, %c0_83, %c0_84] : memref<1x32x128xbf16, #tpu.memory_space<vmem>>, vector<1x32x128xbf16>
    %224 = vector.shape_cast %223 : vector<1x32x128xbf16> to vector<32x128xbf16>
    %cst_85 = arith.constant dense<0.000000e+00> : vector<2x128xf32>
    %225 = tpu.matmul %222, %224, %cst_85 {dimension_numbers = #tpu.dot_dimension_numbers<[1], [0], [0], [1], [0, 0, 1, 1], [], []>} : vector<2x32xbf16>, vector<32x128xbf16>, vector<2x128xf32> -> vector<2x128xf32>
    %226 = arith.addf %221, %225 : vector<2x128xf32>
    %227 = vector.extract_strided_slice %226 {offsets = [0, 0], sizes = [2, 32], strides = [1, 1]} : vector<2x128xf32> to vector<2x32xf32>
    %228 = arith.negf %227 : vector<2x32xf32>
    %229 = math.exp %228 : vector<2x32xf32>
    %cst_86 = arith.constant 1.000000e+00 : f32
    %230 = vector.broadcast %cst_86 : f32 to vector<2x32xf32>
    %231 = arith.addf %230, %229 : vector<2x32xf32>
    %232 = arith.divf %230, %231 : vector<2x32xf32>
    %233 = vector.extract_strided_slice %226 {offsets = [0, 32], sizes = [2, 32], strides = [1, 1]} : vector<2x128xf32> to vector<2x32xf32>
    %234 = arith.negf %233 : vector<2x32xf32>
    %235 = math.exp %234 : vector<2x32xf32>
    %cst_87 = arith.constant 1.000000e+00 : f32
    %236 = vector.broadcast %cst_87 : f32 to vector<2x32xf32>
    %237 = arith.addf %236, %235 : vector<2x32xf32>
    %238 = arith.divf %236, %237 : vector<2x32xf32>
    %239 = vector.extract_strided_slice %226 {offsets = [0, 64], sizes = [2, 32], strides = [1, 1]} : vector<2x128xf32> to vector<2x32xf32>
    %240 = math.tanh %239 : vector<2x32xf32>
    %241 = vector.extract_strided_slice %226 {offsets = [0, 96], sizes = [2, 32], strides = [1, 1]} : vector<2x128xf32> to vector<2x32xf32>
    %242 = arith.negf %241 : vector<2x32xf32>
    %243 = math.exp %242 : vector<2x32xf32>
    %cst_88 = arith.constant 1.000000e+00 : f32
    %244 = vector.broadcast %cst_88 : f32 to vector<2x32xf32>
    %245 = arith.addf %244, %243 : vector<2x32xf32>
    %246 = arith.divf %244, %245 : vector<2x32xf32>
    %247 = arith.mulf %238, %214 : vector<2x32xf32>
    %248 = arith.mulf %232, %240 : vector<2x32xf32>
    %249 = arith.addf %247, %248 : vector<2x32xf32>
    %250 = math.tanh %249 : vector<2x32xf32>
    %251 = arith.mulf %246, %250 : vector<2x32xf32>
    %c6_89 = arith.constant 6 : index
    %c0_90 = arith.constant 0 : index
    %c0_91 = arith.constant 0 : index
    %252 = vector.load %arg11[%c6_89, %c0_90, %c0_91] : memref<8x2x32xf32, #tpu.memory_space<vmem>>, vector<1x2x32xf32>
    %253 = vector.shape_cast %252 : vector<1x2x32xf32> to vector<2x32xf32>
    %254 = vector.shape_cast %251 : vector<2x32xf32> to vector<1x2x32xf32>
    tpu.vector_store %arg11[%c6_89, %c0_90, %c0_91], %254 {strides = array<i32>} : memref<8x2x32xf32, #tpu.memory_space<vmem>>, vector<1x2x32xf32>,
    %c7 = arith.constant 7 : index
    %c0_92 = arith.constant 0 : index
    %c0_93 = arith.constant 0 : index
    %255 = vector.load %arg12[%c7, %c0_92, %c0_93] : memref<8x2x128xf32, #tpu.memory_space<vmem>>, vector<1x2x128xf32>
    %256 = vector.shape_cast %255 : vector<1x2x128xf32> to vector<2x128xf32>
    %257 = arith.truncf %251 : vector<2x32xf32> to vector<2x32xbf16>
    %c0_94 = arith.constant 0 : index
    %c0_95 = arith.constant 0 : index
    %c0_96 = arith.constant 0 : index
    %258 = vector.load %arg6[%c0_94, %c0_95, %c0_96] : memref<1x32x128xbf16, #tpu.memory_space<vmem>>, vector<1x32x128xbf16>
    %259 = vector.shape_cast %258 : vector<1x32x128xbf16> to vector<32x128xbf16>
    %cst_97 = arith.constant dense<0.000000e+00> : vector<2x128xf32>
    %260 = tpu.matmul %257, %259, %cst_97 {dimension_numbers = #tpu.dot_dimension_numbers<[1], [0], [0], [1], [0, 0, 1, 1], [], []>} : vector<2x32xbf16>, vector<32x128xbf16>, vector<2x128xf32> -> vector<2x128xf32>
    %261 = arith.addf %256, %260 : vector<2x128xf32>
    %262 = vector.extract_strided_slice %261 {offsets = [0, 0], sizes = [2, 32], strides = [1, 1]} : vector<2x128xf32> to vector<2x32xf32>
    %263 = arith.negf %262 : vector<2x32xf32>
    %264 = math.exp %263 : vector<2x32xf32>
    %cst_98 = arith.constant 1.000000e+00 : f32
    %265 = vector.broadcast %cst_98 : f32 to vector<2x32xf32>
    %266 = arith.addf %265, %264 : vector<2x32xf32>
    %267 = arith.divf %265, %266 : vector<2x32xf32>
    %268 = vector.extract_strided_slice %261 {offsets = [0, 32], sizes = [2, 32], strides = [1, 1]} : vector<2x128xf32> to vector<2x32xf32>
    %269 = arith.negf %268 : vector<2x32xf32>
    %270 = math.exp %269 : vector<2x32xf32>
    %cst_99 = arith.constant 1.000000e+00 : f32
    %271 = vector.broadcast %cst_99 : f32 to vector<2x32xf32>
    %272 = arith.addf %271, %270 : vector<2x32xf32>
    %273 = arith.divf %271, %272 : vector<2x32xf32>
    %274 = vector.extract_strided_slice %261 {offsets = [0, 64], sizes = [2, 32], strides = [1, 1]} : vector<2x128xf32> to vector<2x32xf32>
    %275 = math.tanh %274 : vector<2x32xf32>
    %276 = vector.extract_strided_slice %261 {offsets = [0, 96], sizes = [2, 32], strides = [1, 1]} : vector<2x128xf32> to vector<2x32xf32>
    %277 = arith.negf %276 : vector<2x32xf32>
    %278 = math.exp %277 : vector<2x32xf32>
    %cst_100 = arith.constant 1.000000e+00 : f32
    %279 = vector.broadcast %cst_100 : f32 to vector<2x32xf32>
    %280 = arith.addf %279, %278 : vector<2x32xf32>
    %281 = arith.divf %279, %280 : vector<2x32xf32>
    %282 = arith.mulf %273, %249 : vector<2x32xf32>
    %283 = arith.mulf %267, %275 : vector<2x32xf32>
    %284 = arith.addf %282, %283 : vector<2x32xf32>
    %285 = math.tanh %284 : vector<2x32xf32>
    %286 = arith.mulf %281, %285 : vector<2x32xf32>
    %c7_101 = arith.constant 7 : index
    %c0_102 = arith.constant 0 : index
    %c0_103 = arith.constant 0 : index
    %287 = vector.load %arg11[%c7_101, %c0_102, %c0_103] : memref<8x2x32xf32, #tpu.memory_space<vmem>>, vector<1x2x32xf32>
    %288 = vector.shape_cast %287 : vector<1x2x32xf32> to vector<2x32xf32>
    %289 = vector.shape_cast %286 : vector<2x32xf32> to vector<1x2x32xf32>
    tpu.vector_store %arg11[%c7_101, %c0_102, %c0_103], %289 {strides = array<i32>} : memref<8x2x32xf32, #tpu.memory_space<vmem>>, vector<1x2x32xf32>,
    %c0_104 = arith.constant 0 : index
    %c0_105 = arith.constant 0 : index
    %c0_106 = arith.constant 0 : index
    %290 = vector.load %arg9[%c0_104, %c0_105, %c0_106] : memref<1x2x32xf32, #tpu.memory_space<vmem>>, vector<1x2x32xf32>
    %291 = vector.shape_cast %290 : vector<1x2x32xf32> to vector<2x32xf32>
    %292 = vector.shape_cast %286 : vector<2x32xf32> to vector<1x2x32xf32>
    tpu.vector_store %arg9[%c0_104, %c0_105, %c0_106], %292 {strides = array<i32>} : memref<1x2x32xf32, #tpu.memory_space<vmem>>, vector<1x2x32xf32>,
    %c0_107 = arith.constant 0 : index
    %c0_108 = arith.constant 0 : index
    %c0_109 = arith.constant 0 : index
    %293 = vector.load %arg10[%c0_107, %c0_108, %c0_109] : memref<1x2x32xf32, #tpu.memory_space<vmem>>, vector<1x2x32xf32>
    %294 = vector.shape_cast %293 : vector<1x2x32xf32> to vector<2x32xf32>
    %295 = vector.shape_cast %284 : vector<2x32xf32> to vector<1x2x32xf32>
    tpu.vector_store %arg10[%c0_107, %c0_108, %c0_109], %295 {strides = array<i32>} : memref<1x2x32xf32, #tpu.memory_space<vmem>>, vector<1x2x32xf32>,
    %c1_i32 = arith.constant 1 : i32
    %296 = arith.cmpi eq, %arg1, %c1_i32 : i32
    %297 = arith.extui %296 : i1 to i32
    %c0_i32_110 = arith.constant 0 : i32
    %298 = arith.cmpi ne, %297, %c0_i32_110 : i32
    scf.if %298 {
      %c0_111 = arith.constant 0 : index
      %c0_112 = arith.constant 0 : index
      %c0_113 = arith.constant 0 : index
      %299 = vector.load %arg11[%c0_111, %c0_112, %c0_113] : memref<8x2x32xf32, #tpu.memory_space<vmem>>, vector<8x2x32xf32>
      %c0_114 = arith.constant 0 : index
      %c0_115 = arith.constant 0 : index
      %c0_116 = arith.constant 0 : index
      %300 = vector.load %arg8[%c0_114, %c0_115, %c0_116] : memref<8x2x32xf32, #tpu.memory_space<vmem>>, vector<8x2x32xf32>
      tpu.vector_store %arg8[%c0_114, %c0_115, %c0_116], %299 {strides = array<i32>} : memref<8x2x32xf32, #tpu.memory_space<vmem>>, vector<8x2x32xf32>,
    } else {
    }
    return
  }
  func.func @transform_0(%arg0: i32, %arg1: i32) -> (i32, i32, i32) {
    %c0_i32 = arith.constant 0 : i32
    %c0_i32_0 = arith.constant 0 : i32
    %c0_i32_1 = arith.constant 0 : i32
    return %c0_i32, %arg0, %c0_i32_0 : i32, i32, i32
  }
  func.func @transform_1(%arg0: i32, %arg1: i32) -> (i32, i32, i32) {
    %c0_i32 = arith.constant 0 : i32
    %c0_i32_0 = arith.constant 0 : i32
    return %arg1, %arg0, %c0_i32 : i32, i32, i32
  }
  func.func @transform_2(%arg0: i32, %arg1: i32) -> (i32, i32, i32) {
    %c0_i32 = arith.constant 0 : i32
    %c0_i32_0 = arith.constant 0 : i32
    return %arg1, %arg0, %c0_i32 : i32, i32, i32
  }
  func.func @transform_3(%arg0: i32, %arg1: i32) -> (i32, i32, i32) {
    %c0_i32 = arith.constant 0 : i32
    %c0_i32_0 = arith.constant 0 : i32
    %c0_i32_1 = arith.constant 0 : i32
    return %arg1, %c0_i32, %c0_i32_0 : i32, i32, i32
  }
  func.func @transform_4(%arg0: i32, %arg1: i32) -> (i32, i32, i32) {
    %c0_i32 = arith.constant 0 : i32
    %c0_i32_0 = arith.constant 0 : i32
    %c0_i32_1 = arith.constant 0 : i32
    return %arg1, %c0_i32, %c0_i32_0 : i32, i32, i32
  }
  func.func @transform_5(%arg0: i32, %arg1: i32) -> (i32, i32, i32) {
    %c0_i32 = arith.constant 0 : i32
    %c0_i32_0 = arith.constant 0 : i32
    %c0_i32_1 = arith.constant 0 : i32
    return %arg1, %c0_i32, %c0_i32_0 : i32, i32, i32
  }
  func.func @transform_6(%arg0: i32, %arg1: i32) -> (i32, i32, i32) {
    %c0_i32 = arith.constant 0 : i32
    %c0_i32_0 = arith.constant 0 : i32
    %c0_i32_1 = arith.constant 0 : i32
    return %c0_i32, %arg0, %c0_i32_0 : i32, i32, i32
  }
  func.func @transform_7(%arg0: i32, %arg1: i32) -> (i32, i32, i32) {
    %c0_i32 = arith.constant 0 : i32
    %c0_i32_0 = arith.constant 0 : i32
    return %arg1, %arg0, %c0_i32 : i32, i32, i32
  }
  func.func @transform_8(%arg0: i32, %arg1: i32) -> (i32, i32, i32) {
    %c0_i32 = arith.constant 0 : i32
    %c0_i32_0 = arith.constant 0 : i32
    return %arg1, %arg0, %c0_i32 : i32, i32, i32
  }
}

module attributes {stable_mosaic.version = 11 : i64} {
  func.func @_out_proj_kernel(%arg0: i32, %arg1: i32, %arg2: memref<16x32xf32, #tpu.memory_space<vmem>>, %arg3: memref<32x256xbf16, #tpu.memory_space<vmem>>, %arg4: memref<1x256xf32, #tpu.memory_space<vmem>>, %arg5: memref<16x256xf32, #tpu.memory_space<vmem>>) attributes {dimension_semantics = [#tpu.dimension_semantics<parallel>, #tpu.dimension_semantics<parallel>], iteration_bounds = array<i64: 1, 1>, scalar_prefetch = 0 : i64, scratch_operands = 0 : i64, tpu.core_type = #tpu.core_type<tc>, window_params = [{transform_indices = @transform_0, window_bounds = array<i64: 16, 32>}, {transform_indices = @transform_1, window_bounds = array<i64: 32, 256>}, {transform_indices = @transform_2, window_bounds = array<i64: 1, 256>}, {transform_indices = @transform_3, window_bounds = array<i64: 16, 256>}]} {
    %c0 = arith.constant 0 : index
    %c0_0 = arith.constant 0 : index
    %0 = vector.load %arg2[%c0, %c0_0] : memref<16x32xf32, #tpu.memory_space<vmem>>, vector<16x32xf32>
    %1 = arith.truncf %0 : vector<16x32xf32> to vector<16x32xbf16>
    %c0_1 = arith.constant 0 : index
    %c0_2 = arith.constant 0 : index
    %2 = vector.load %arg3[%c0_1, %c0_2] : memref<32x256xbf16, #tpu.memory_space<vmem>>, vector<32x256xbf16>
    %cst = arith.constant dense<0.000000e+00> : vector<16x256xf32>
    %3 = tpu.matmul %1, %2, %cst {dimension_numbers = #tpu.dot_dimension_numbers<[1], [0], [0], [1], [0, 0, 1, 1], [], []>} : vector<16x32xbf16>, vector<32x256xbf16>, vector<16x256xf32> -> vector<16x256xf32>
    %c0_3 = arith.constant 0 : index
    %c0_4 = arith.constant 0 : index
    %4 = vector.load %arg4[%c0_3, %c0_4] : memref<1x256xf32, #tpu.memory_space<vmem>>, vector<1x256xf32>
    %5 = vector.broadcast %4 : vector<1x256xf32> to vector<16x256xf32>
    %6 = arith.addf %3, %5 : vector<16x256xf32>
    %c0_5 = arith.constant 0 : index
    %c0_6 = arith.constant 0 : index
    %7 = vector.load %arg5[%c0_5, %c0_6] : memref<16x256xf32, #tpu.memory_space<vmem>>, vector<16x256xf32>
    tpu.vector_store %arg5[%c0_5, %c0_6], %6 {strides = array<i32>} : memref<16x256xf32, #tpu.memory_space<vmem>>, vector<16x256xf32>,
    return
  }
  func.func @transform_0(%arg0: i32, %arg1: i32) -> (i32, i32) {
    %c0_i32 = arith.constant 0 : i32
    %c0_i32_0 = arith.constant 0 : i32
    return %arg0, %c0_i32 : i32, i32
  }
  func.func @transform_1(%arg0: i32, %arg1: i32) -> (i32, i32) {
    %c0_i32 = arith.constant 0 : i32
    %c0_i32_0 = arith.constant 0 : i32
    return %c0_i32, %arg1 : i32, i32
  }
  func.func @transform_2(%arg0: i32, %arg1: i32) -> (i32, i32) {
    %c0_i32 = arith.constant 0 : i32
    %c0_i32_0 = arith.constant 0 : i32
    return %c0_i32, %arg1 : i32, i32
  }
  func.func @transform_3(%arg0: i32, %arg1: i32) -> (i32, i32) {
    %c0_i32 = arith.constant 0 : i32
    return %arg0, %arg1 : i32, i32
  }
}

module attributes {stable_mosaic.version = 11 : i64} {
  func.func @_attn_kernel(%arg0: i32, %arg1: memref<1x8x32xf32, #tpu.memory_space<vmem>>, %arg2: memref<1x8x32xf32, #tpu.memory_space<vmem>>, %arg3: memref<1x8x32xf32, #tpu.memory_space<vmem>>, %arg4: memref<1x1x8xf32, #tpu.memory_space<vmem>>, %arg5: memref<8x32xf32, #tpu.memory_space<vmem>>, %arg6: memref<64x32xbf16, #tpu.memory_space<vmem>>, %arg7: memref<1x8x8xf32, #tpu.memory_space<vmem>>, %arg8: memref<1x1x8xf32, #tpu.memory_space<vmem>>, %arg9: memref<1x8x32xf32, #tpu.memory_space<vmem>>) attributes {dimension_semantics = [#tpu.dimension_semantics<parallel>], iteration_bounds = array<i64: 2>, scalar_prefetch = 0 : i64, scratch_operands = 0 : i64, tpu.core_type = #tpu.core_type<tc>, window_params = [{transform_indices = @transform_0, window_bounds = array<i64: 1, 8, 32>}, {transform_indices = @transform_1, window_bounds = array<i64: 1, 8, 32>}, {transform_indices = @transform_2, window_bounds = array<i64: 1, 8, 32>}, {transform_indices = @transform_3, window_bounds = array<i64: 1, 1, 8>}, {pipeline_mode = #tpu.pipeline_mode<synchronous>, transform_indices = @transform_4, window_bounds = array<i64: 8, 32>}, {pipeline_mode = #tpu.pipeline_mode<synchronous>, transform_indices = @transform_5, window_bounds = array<i64: 64, 32>}, {transform_indices = @transform_6, window_bounds = array<i64: 1, 8, 8>}, {transform_indices = @transform_7, window_bounds = array<i64: 1, 1, 8>}, {transform_indices = @transform_8, window_bounds = array<i64: 1, 8, 32>}]} {
    %c0 = arith.constant 0 : index
    %c0_0 = arith.constant 0 : index
    %c0_1 = arith.constant 0 : index
    %0 = vector.load %arg1[%c0, %c0_0, %c0_1] : memref<1x8x32xf32, #tpu.memory_space<vmem>>, vector<1x8x32xf32>
    %c0_2 = arith.constant 0 : index
    %c0_3 = arith.constant 0 : index
    %c0_4 = arith.constant 0 : index
    %1 = vector.load %arg2[%c0_2, %c0_3, %c0_4] : memref<1x8x32xf32, #tpu.memory_space<vmem>>, vector<1x8x32xf32>
    %c0_5 = arith.constant 0 : index
    %c0_6 = arith.constant 0 : index
    %c0_7 = arith.constant 0 : index
    %2 = vector.load %arg3[%c0_5, %c0_6, %c0_7] : memref<1x8x32xf32, #tpu.memory_space<vmem>>, vector<1x8x32xf32>
    "tpu.trace_start"() <{level = 10 : i32, message = "bmh,bnh->bmn"}> : () -> ()
    %cst = arith.constant dense<0.000000e+00> : vector<1x8x8xf32>
    %3 = tpu.matmul %1, %0, %cst {dimension_numbers = #tpu.dot_dimension_numbers<[2], [2], [1], [1], [0, 0, 0, 1, 1, 1], [0], [0]>} : vector<1x8x32xf32>, vector<1x8x32xf32>, vector<1x8x8xf32> -> vector<1x8x8xf32>
    "tpu.trace_stop"() : () -> ()
    %c0_8 = arith.constant 0 : index
    %c0_9 = arith.constant 0 : index
    %c0_10 = arith.constant 0 : index
    %4 = vector.load %arg4[%c0_8, %c0_9, %c0_10] : memref<1x1x8xf32, #tpu.memory_space<vmem>>, vector<1x1x8xf32>
    %cst_11 = arith.constant 5.000000e-01 : f32
    %5 = vector.broadcast %cst_11 : f32 to vector<1x1x8xf32>
    %6 = arith.cmpf ogt, %4, %5 : vector<1x1x8xf32>
    %cst_12 = arith.constant 1.000000e-10 : f32
    %7 = vector.shape_cast %6 : vector<1x1x8xi1> to vector<1x1x8xi1>
    %8 = vector.broadcast %7 : vector<1x1x8xi1> to vector<1x8x8xi1>
    %9 = vector.broadcast %cst_12 : f32 to vector<1x8x8xf32>
    %10 = arith.select %8, %9, %3 : vector<1x8x8xi1>, vector<1x8x8xf32>
    %cst_13 = arith.constant dense<0xFF800000> : vector<1x8xf32>
    %11 = vector.multi_reduction <maximumf>, %10, %cst_13 [2] : vector<1x8x8xf32> to vector<1x8xf32>
    %12 = vector.shape_cast %11 : vector<1x8xf32> to vector<1x8x1xf32>
    %13 = vector.broadcast %12 : vector<1x8x1xf32> to vector<1x8x8xf32>
    %14 = arith.subf %10, %13 : vector<1x8x8xf32>
    %15 = math.exp %14 : vector<1x8x8xf32>
    %cst_14 = arith.constant dense<0.000000e+00> : vector<1x8xf32>
    %16 = vector.multi_reduction <add>, %15, %cst_14 [2] : vector<1x8x8xf32> to vector<1x8xf32>
    %17 = vector.shape_cast %16 : vector<1x8xf32> to vector<1x8x1xf32>
    %18 = tpu.reciprocal %17 {approx = true} : vector<1x8x1xf32> -> vector<1x8x1xf32>
    %19 = vector.broadcast %18 : vector<1x8x1xf32> to vector<1x8x8xf32>
    %20 = arith.mulf %15, %19 : vector<1x8x8xf32>
    %c0_15 = arith.constant 0 : index
    %c0_16 = arith.constant 0 : index
    %c0_17 = arith.constant 0 : index
    %21 = vector.load %arg7[%c0_15, %c0_16, %c0_17] : memref<1x8x8xf32, #tpu.memory_space<vmem>>, vector<1x8x8xf32>
    tpu.vector_store %arg7[%c0_15, %c0_16, %c0_17], %20 {strides = array<i32>} : memref<1x8x8xf32, #tpu.memory_space<vmem>>, vector<1x8x8xf32>,
    "tpu.trace_start"() <{level = 10 : i32, message = "bmn,bnd->bmd"}> : () -> ()
    %cst_18 = arith.constant dense<0.000000e+00> : vector<1x8x32xf32>
    %22 = tpu.matmul %20, %0, %cst_18 {dimension_numbers = #tpu.dot_dimension_numbers<[2], [1], [1], [2], [0, 0, 0, 1, 1, 2], [0], [0]>} : vector<1x8x8xf32>, vector<1x8x32xf32>, vector<1x8x32xf32> -> vector<1x8x32xf32>
    "tpu.trace_stop"() : () -> ()
    %c0_19 = arith.constant 0 : index
    %c0_20 = arith.constant 0 : index
    %23 = vector.load %arg5[%c0_19, %c0_20] : memref<8x32xf32, #tpu.memory_space<vmem>>, vector<1x32xf32>
    %c1 = arith.constant 1 : index
    %c0_21 = arith.constant 0 : index
    %24 = vector.load %arg5[%c1, %c0_21] : memref<8x32xf32, #tpu.memory_space<vmem>>, vector<1x32xf32>
    %c2 = arith.constant 2 : index
    %c0_22 = arith.constant 0 : index
    %25 = vector.load %arg5[%c2, %c0_22] : memref<8x32xf32, #tpu.memory_space<vmem>>, vector<1x32xf32>
    %c3 = arith.constant 3 : index
    %c0_23 = arith.constant 0 : index
    %26 = vector.load %arg5[%c3, %c0_23] : memref<8x32xf32, #tpu.memory_space<vmem>>, vector<1x32xf32>
    %c4 = arith.constant 4 : index
    %c0_24 = arith.constant 0 : index
    %27 = vector.load %arg5[%c4, %c0_24] : memref<8x32xf32, #tpu.memory_space<vmem>>, vector<1x32xf32>
    %28 = vector.shape_cast %23 : vector<1x32xf32> to vector<1x1x32xf32>
    %29 = vector.broadcast %28 : vector<1x1x32xf32> to vector<1x8x32xf32>
    %30 = arith.mulf %22, %29 : vector<1x8x32xf32>
    %31 = vector.shape_cast %24 : vector<1x32xf32> to vector<1x1x32xf32>
    %32 = vector.broadcast %31 : vector<1x1x32xf32> to vector<1x8x32xf32>
    %33 = arith.mulf %1, %32 : vector<1x8x32xf32>
    %34 = arith.addf %30, %33 : vector<1x8x32xf32>
    %35 = vector.shape_cast %25 : vector<1x32xf32> to vector<1x1x32xf32>
    %36 = vector.broadcast %35 : vector<1x1x32xf32> to vector<1x8x32xf32>
    %37 = arith.mulf %2, %36 : vector<1x8x32xf32>
    %38 = arith.addf %34, %37 : vector<1x8x32xf32>
    %39 = vector.shape_cast %27 : vector<1x32xf32> to vector<1x1x32xf32>
    %40 = vector.broadcast %39 : vector<1x1x32xf32> to vector<1x8x32xf32>
    %41 = arith.addf %38, %40 : vector<1x8x32xf32>
    %cst_25 = arith.constant dense<0.000000e+00> : vector<1x8xf32>
    %42 = vector.multi_reduction <add>, %41, %cst_25 [2] : vector<1x8x32xf32> to vector<1x8xf32>
    %43 = arith.negf %42 : vector<1x8xf32>
    %44 = math.exp %43 : vector<1x8xf32>
    %cst_26 = arith.constant 1.000000e+00 : f32
    %45 = vector.broadcast %cst_26 : f32 to vector<1x8xf32>
    %46 = arith.addf %45, %44 : vector<1x8xf32>
    %47 = arith.divf %45, %46 : vector<1x8xf32>
    %c0_27 = arith.constant 0 : index
    %c0_28 = arith.constant 0 : index
    %c0_29 = arith.constant 0 : index
    %48 = vector.load %arg8[%c0_27, %c0_28, %c0_29] : memref<1x1x8xf32, #tpu.memory_space<vmem>>, vector<1x1x8xf32>
    %49 = vector.shape_cast %48 : vector<1x1x8xf32> to vector<1x8xf32>
    %50 = vector.shape_cast %47 : vector<1x8xf32> to vector<1x1x8xf32>
    tpu.vector_store %arg8[%c0_27, %c0_28, %c0_29], %50 {strides = array<i32>} : memref<1x1x8xf32, #tpu.memory_space<vmem>>, vector<1x1x8xf32>,
    %c0_30 = arith.constant 0 : index
    %c0_31 = arith.constant 0 : index
    %51 = vector.load %arg6[%c0_30, %c0_31] : memref<64x32xbf16, #tpu.memory_space<vmem>>, vector<32x32xbf16>
    %c32 = arith.constant 32 : index
    %c0_32 = arith.constant 0 : index
    %52 = vector.load %arg6[%c32, %c0_32] : memref<64x32xbf16, #tpu.memory_space<vmem>>, vector<32x32xbf16>
    %53 = vector.shape_cast %1 : vector<1x8x32xf32> to vector<8x32xf32>
    %54 = arith.truncf %53 : vector<8x32xf32> to vector<8x32xbf16>
    %cst_33 = arith.constant dense<0.000000e+00> : vector<8x32xf32>
    %55 = tpu.matmul %54, %51, %cst_33 {dimension_numbers = #tpu.dot_dimension_numbers<[1], [0], [0], [1], [0, 0, 1, 1], [], []>} : vector<8x32xbf16>, vector<32x32xbf16>, vector<8x32xf32> -> vector<8x32xf32>
    %56 = vector.shape_cast %22 : vector<1x8x32xf32> to vector<8x32xf32>
    %57 = arith.truncf %56 : vector<8x32xf32> to vector<8x32xbf16>
    %cst_34 = arith.constant dense<0.000000e+00> : vector<8x32xf32>
    %58 = tpu.matmul %57, %52, %cst_34 {dimension_numbers = #tpu.dot_dimension_numbers<[1], [0], [0], [1], [0, 0, 1, 1], [], []>} : vector<8x32xbf16>, vector<32x32xbf16>, vector<8x32xf32> -> vector<8x32xf32>
    %59 = arith.addf %55, %58 : vector<8x32xf32>
    %60 = vector.broadcast %26 : vector<1x32xf32> to vector<8x32xf32>
    %61 = arith.addf %59, %60 : vector<8x32xf32>
    %62 = math.tanh %61 : vector<8x32xf32>
    %c0_35 = arith.constant 0 : index
    %c0_36 = arith.constant 0 : index
    %c0_37 = arith.constant 0 : index
    %63 = vector.load %arg9[%c0_35, %c0_36, %c0_37] : memref<1x8x32xf32, #tpu.memory_space<vmem>>, vector<1x8x32xf32>
    %64 = vector.shape_cast %63 : vector<1x8x32xf32> to vector<8x32xf32>
    %65 = vector.shape_cast %62 : vector<8x32xf32> to vector<1x8x32xf32>
    tpu.vector_store %arg9[%c0_35, %c0_36, %c0_37], %65 {strides = array<i32>} : memref<1x8x32xf32, #tpu.memory_space<vmem>>, vector<1x8x32xf32>,
    return
  }
  func.func @transform_0(%arg0: i32) -> (i32, i32, i32) {
    %c0_i32 = arith.constant 0 : i32
    %c0_i32_0 = arith.constant 0 : i32
    %c0_i32_1 = arith.constant 0 : i32
    return %arg0, %c0_i32, %c0_i32_0 : i32, i32, i32
  }
  func.func @transform_1(%arg0: i32) -> (i32, i32, i32) {
    %c0_i32 = arith.constant 0 : i32
    %c0_i32_0 = arith.constant 0 : i32
    %c0_i32_1 = arith.constant 0 : i32
    return %arg0, %c0_i32, %c0_i32_0 : i32, i32, i32
  }
  func.func @transform_2(%arg0: i32) -> (i32, i32, i32) {
    %c0_i32 = arith.constant 0 : i32
    %c0_i32_0 = arith.constant 0 : i32
    %c0_i32_1 = arith.constant 0 : i32
    return %arg0, %c0_i32, %c0_i32_0 : i32, i32, i32
  }
  func.func @transform_3(%arg0: i32) -> (i32, i32, i32) {
    %c0_i32 = arith.constant 0 : i32
    %c0_i32_0 = arith.constant 0 : i32
    %c0_i32_1 = arith.constant 0 : i32
    return %arg0, %c0_i32, %c0_i32_0 : i32, i32, i32
  }
  func.func @transform_4(%arg0: i32) -> (i32, i32) {
    %c0_i32 = arith.constant 0 : i32
    %c0_i32_0 = arith.constant 0 : i32
    %c0_i32_1 = arith.constant 0 : i32
    return %c0_i32, %c0_i32_0 : i32, i32
  }
  func.func @transform_5(%arg0: i32) -> (i32, i32) {
    %c0_i32 = arith.constant 0 : i32
    %c0_i32_0 = arith.constant 0 : i32
    %c0_i32_1 = arith.constant 0 : i32
    return %c0_i32, %c0_i32_0 : i32, i32
  }
  func.func @transform_6(%arg0: i32) -> (i32, i32, i32) {
    %c0_i32 = arith.constant 0 : i32
    %c0_i32_0 = arith.constant 0 : i32
    %c0_i32_1 = arith.constant 0 : i32
    return %arg0, %c0_i32, %c0_i32_0 : i32, i32, i32
  }
  func.func @transform_7(%arg0: i32) -> (i32, i32, i32) {
    %c0_i32 = arith.constant 0 : i32
    %c0_i32_0 = arith.constant 0 : i32
    %c0_i32_1 = arith.constant 0 : i32
    return %arg0, %c0_i32, %c0_i32_0 : i32, i32, i32
  }
  func.func @transform_8(%arg0: i32) -> (i32, i32, i32) {
    %c0_i32 = arith.constant 0 : i32
    %c0_i32_0 = arith.constant 0 : i32
    %c0_i32_1 = arith.constant 0 : i32
    return %arg0, %c0_i32, %c0_i32_0 : i32, i32, i32
  }
}

</mosaic_0001>

<llo_original>
// kernel: pointer_generator_forward.5
$region0: #{pointer_generator_forward.5}
  #allocation0 [shape = 'u32[]', space=smem, size = 0x4, offset = 0x4, fixed_abs, tag = 'smem constant byte address 0x4 - core index']
  #allocation1 [shape = 'u32[144,128]{1,0:T(1,128)}', space=vmem, size = 0x12000, scoped, tag = 'internal scratch']
  %s0 = inlined_call_operand.vmem [shape: f32[16,32], index: 0, kind: input, shape index: {}]
  %s1 = inlined_call_operand.vmem [shape: bf16[32,256], index: 1, kind: input, shape index: {}]
  %s2 = inlined_call_operand.vmem [shape: f32[1,256], index: 2, kind: input, shape index: {}]
  %s3 = inlined_call_operand.vmem [shape: f32[16,256], index: 3, kind: output, shape index: {}]
  %s4 = sld [smem:[#allocation0]]
  $region22: #{pointer_generator_forward.5} parent=0
    _
  %s6 = ssub.s32 1, %s4
  %s7 = scalar_select 0, %s6, %s4
  // Predicated region
  $region2: #{pointer_generator_forward.5} parent=0 // pred_check
    _
  $region3: #{pointer_generator_forward.5} parent=0 // pred_check_branch
    %9 = sbr.rel (0) target = $region5
  $region4: #{pointer_generator_forward.5} parent=0 // pred_region
    _
  $region5: #{pointer_generator_forward.5} parent=0 // pred_fallthru
    _
  // Predicated region
  $region6: #{pointer_generator_forward.5} parent=0 // pred_check
    _
  $region7: #{pointer_generator_forward.5} parent=0 // pred_check_branch
    %11 = sbr.rel (0) target = $region9
  $region8: #{pointer_generator_forward.5} parent=0 // pred_region
    _
  $region9: #{pointer_generator_forward.5} parent=0 // pred_fallthru
    _
  // Predicated region
  $region10: #{pointer_generator_forward.5} parent=0 // pred_check
    _
  $region11: #{pointer_generator_forward.5} parent=0 // pred_check_branch
    %13 = sbr.rel (0) target = $region13
  $region12: #{pointer_generator_forward.5} parent=0 // pred_region
    _
  $region13: #{pointer_generator_forward.5} parent=0 // pred_fallthru
    _
  %v15 = vld [vmem:[%s0] sm:$0xff]
  %v16 = vld [vmem:[%s0 + $0x8] sm:$0xff]
  %v17 = vpack.c.bf16 %v16, %v15
  %v18 = vld [vmem:[%s1] sm:$0xff]
  %v19 = vld [vmem:[%s1 + $0x8] sm:$0xff]
  %v20 = vld [vmem:[%s1 + $0x10] sm:$0xff]
  %v21 = vld [vmem:[%s1 + $0x18] sm:$0xff]
  %v22 = vld [vmem:[%s2] sm:$0x3]
  %v24 = vlaneseq
  %v25 = vshrl.u32 %v24, 7
  %v26 = vsub.s32 0, %v25
  %v27 = vrot.slane %v22, %v26
  %v28 = vlaneseq
  %v29 = vshrl.u32 %v28, 7
  %v30 = vsub.s32 1, %v29
  %v31 = vrot.slane %v22, %v30
  %v38 = vunpack.c.l.b16 %v18
  %v39 = vunpack.c.h.b16 %v18
  %v40 = vunpack.c.l.b16 %v19
  %v41 = vunpack.c.h.b16 %v19
  %v42 = vunpack.c.l.b16 %v20
  %v43 = vunpack.c.h.b16 %v20
  %v44 = vunpack.c.l.b16 %v21
  %v45 = vunpack.c.h.b16 %v21
  %v46 = vpack.c.b16 %v40, %v38
  %v47 = vpack.c.b16 %v41, %v39
  %v48 = vpack.c.b16 %v44, %v42
  %v49 = vpack.c.b16 %v45, %v43
  %vm54 = vcmask 261120
  %v56 = vsel %vm54, %v17, 0
  %58 = vmatprep.subr.bf16.mxu0 0
  %59 = vmatpush1.bf16.msra.mxu0 0
  %60 = vmatprep.subr.bf16.mxu0 0
  %61 = vmatpush1.bf16.msra.mxu0 0
  %62 = vmatprep.subr.bf16.mxu0 0
  %63 = vmatpush1.bf16.msra.mxu0 0
  %64 = vmatprep.subr.bf16.mxu0 0
  %65 = vmatpush1.bf16.msra.mxu0 0
  %66 = vmatprep.subr.bf16.mxu0 0
  %67 = vmatpush1.bf16.msra.mxu0 0
  %68 = vmatprep.subr.bf16.mxu0 0
  %69 = vmatpush1.bf16.msra.mxu0 0
  %70 = vmatprep.subr.bf16.mxu0 %v49
  %71 = vmatpush1.bf16.msra.mxu0 %v48
  %72 = vmatprep.subr.bf16.mxu0 %v47
  %73 = vmatpush1.bf16.msra.mxu0 %v46
  %74 = vmatprep.subr.bf16.mxu0 0
  %75 = vmatpush2.bf16.msra.mxu0 0
  %76 = vmatprep.subr.bf16.mxu0 0
  %77 = vmatpush2.bf16.msra.mxu0 0
  %78 = vmatprep.subr.bf16.mxu0 0
  %79 = vmatpush2.bf16.msra.mxu0 0
  %80 = vmatprep.subr.bf16.mxu0 0
  %81 = vmatpush2.bf16.msra.mxu0 0
  %82 = vmatprep.subr.bf16.mxu0 0
  %83 = vmatpush2.bf16.msra.mxu0 0
  %84 = vmatprep.subr.bf16.mxu0 0
  %85 = vmatpush2.bf16.msra.mxu0 0
  %86 = vmatprep.subr.bf16.mxu0 0
  %87 = vmatpush2.bf16.msra.mxu0 0
  %88 = vmatprep.subr.bf16.mxu0 0
  %89 = vmatpush2.bf16.msra.mxu0 0
  %90 = vmatprep.mubr.bf16.mxu0 0
  %91 = vmatmul.mubr.bf16.gmra.mxu0 %v56
  %v92 = vpop.f32.mrf.mxu0
  %v93 = vadd.f32 %v27, %v92
  %v94 = vpop.f32.mrf.mxu0
  %v95 = vadd.f32 %v31, %v94
  %v96 = vpop.f32.mrf.mxu0
  %v97 = vadd.f32 %v27, %v96
  %v98 = vpop.f32.mrf.mxu0
  %v99 = vadd.f32 %v31, %v98
  %100 = vdwg.mxu0
  %101 = vst [vmem:[%s3] sm:$0xff] %v93
  %102 = vst [vmem:[%s3 + $0x8] sm:$0xff] %v95
  %103 = vst [vmem:[%s3 + $0x10] sm:$0xff] %v97
  %104 = vst [vmem:[%s3 + $0x18] sm:$0xff] %v99
  // Predicated region
  $region14: #{pointer_generator_forward.5} parent=0 // pred_check
    _
  $region15: #{pointer_generator_forward.5} parent=0 // pred_check_branch
    %106 = sbr.rel (0) target = $region17
  $region16: #{pointer_generator_forward.5} parent=0 // pred_region
    _
  $region17: #{pointer_generator_forward.5} parent=0 // pred_fallthru
    _
  // Predicated region
  $region18: #{pointer_generator_forward.5} parent=0 // pred_check
    _
  $region19: #{pointer_generator_forward.5} parent=0 // pred_check_branch
    %108 = sbr.rel (0) target = $region21
  $region20: #{pointer_generator_forward.5} parent=0 // pred_region
    _
  $region21: #{pointer_generator_forward.5} parent=0 // pred_fallthru
    _

// kernel: pointer_generator_forward.4
$region0: #{pointer_generator_forward.4}
  #allocation0 [shape = 'u32[]', space=smem, size = 0x4, offset = 0x4, fixed_abs, tag = 'smem constant byte address 0x4 - core index']
  #allocation1 [shape = 'u32[144,128]{1,0:T(1,128)}', space=vmem, size = 0x12000, scoped, tag = 'internal scratch']
  %s0 = inlined_call_operand.vmem [shape: f32[2,8,32], index: 0, kind: input, shape index: {}]
  %s1 = inlined_call_operand.vmem [shape: f32[2,8,32], index: 1, kind: input, shape index: {}]
  %s2 = inlined_call_operand.vmem [shape: f32[2,8,32], index: 2, kind: input, shape index: {}]
  %s3 = inlined_call_operand.vmem [shape: f32[2,1,8], index: 3, kind: input, shape index: {}]
  %s4 = inlined_call_operand.vmem [shape: f32[8,32], index: 4, kind: input, shape index: {}]
  %s5 = inlined_call_operand.vmem [shape: bf16[64,32], index: 5, kind: input, shape index: {}]
  %s6 = inlined_call_operand.vmem [shape: f32[2,8,8], index: 6, kind: output, shape index: {0}]
  %s7 = inlined_call_operand.hbm [shape: f32[2,1,8], index: 7, kind: output, shape index: {1}]
  %s8 = inlined_call_operand.vmem [shape: f32[2,8,32], index: 8, kind: output, shape index: {2}]
  %9 = xla_tuple %s6, %s7, %s8
  %s10 = sld [smem:[#allocation0]]
  $region73: #{pointer_generator_forward.4} parent=0
    _
  %s12 = ssub.s32 1, %s10
  %s13 = scalar_select 0, %s12, %s10
  $region1: #{pointer_generator_forward.4} parent=0
    #allocation2 [shape = 'u8[1024]{0}', space=vmem, size = 0x400, scoped, tag = 'output window, operand 1']
    #allocation3 [shape = 's32[2]{0}', space=sflag, size = 0x8, scoped, tag = 'scoped memory for pointer_generator_forward.4']
    %14 = vsyncpa [#allocation3], 0
    %s15 = scalar_lea.sflag [#allocation3], 1
    %16 = vsyncpa %s15, 0
    loop: start=0, step=1, limit=4
    $region2: #{pointer_generator_forward.4} parent=1 // loop_pre_header
      _
    $region3: #{pointer_generator_forward.4} parent=1 // loop_header
      %s18 = sphi 0, %s22
      %p19 = scmp.ge.s32.totalorder %s18, 4
      %s28 = sphi 0, %s30
      %s31 = sphi 0, %s28
      %s32 = sphi 0, %s31
      %s48 = sphi 0, %s32
      %s54 = sphi 0, %s56
      %s57 = sphi 0, %s54
      %s58 = sphi 0, %s57
      %s74 = sphi 0, %s58
      %s80 = sphi 0, %s82
      %s83 = sphi 0, %s80
      %s84 = sphi 0, %s83
      %s100 = sphi 0, %s84
      %s106 = sphi 0, %s108
      %s109 = sphi 0, %s106
      %s110 = sphi 0, %s109
      %s126 = sphi 0, %s110
      %s130 = sphi 0, %s130
      %s132 = sphi 0, %s130
      %s133 = sphi 0, %s132
      %s147 = sphi 0, %s133
      %s151 = sphi 0, %s151
      %s153 = sphi 0, %s151
      %s154 = sphi 0, %s153
      %s168 = sphi 0, %s154
      %s174 = sphi 0, %s176
      %s177 = sphi 0, %s174
      %s178 = sphi 0, %s177
      %s194 = sphi 0, %s178
      %s200 = sphi 0, %s202
      %s203 = sphi 0, %s200
      %s204 = sphi 0, %s203
      %s220 = sphi 0, %s204
      %s226 = sphi 0, %s228
      %s229 = sphi 0, %s226
      %s230 = sphi 0, %s229
      %s246 = sphi 0, %s230
    $region4: #{pointer_generator_forward.4} parent=1 // loop_header_branch
      %21 = sbr.rel (%p19) target = $region8
    $region5: #{pointer_generator_forward.4} parent=1 // loop_body
      %s23 = ssub.s32 %s18, 1
      %s24 = ssub.s32 %s18, 2
      %s25 = sadd.s32 %s18, 1
      %s26 = ssub.s32 %s18, %s25
      %p27 = scmp.eq.s32.totalorder %s26, 0
      %s29 = sadd.s32 %s28, 1
      %s30 = scalar_select %p27, %s28, %s29
      %p33 = pneg %p27
      %p34 = scmp.eq.s32.totalorder %s18, 1
      %p35 = por %p33, %p34
      %p36 = scmp.ne.s32.totalorder %s28, %s31
      %p37 = scmp.eq.s32.totalorder %s18, 0
      %p38 = por %p36, %p37
      %p39 = scmp.ne.s32.totalorder %s28, %s31
      %p40 = scmp.eq.s32.totalorder %s23, 1
      %p41 = por %p39, %p40
      %p42 = scmp.ne.s32.totalorder %s31, %s32
      %p43 = scmp.eq.s32.totalorder %s23, 0
      %p44 = por %p42, %p43
      %p45 = scmp.ne.s32.totalorder %s31, %s32
      %p46 = scmp.eq.s32.totalorder %s24, 1
      %p47 = por %p45, %p46
      %p49 = scmp.ne.s32.totalorder %s32, %s48
      %p50 = scmp.eq.s32.totalorder %s24, 0
      %p51 = por %p49, %p50
      %s52 = ssub.s32 %s18, %s25
      %p53 = scmp.eq.s32.totalorder %s52, 0
      %s55 = sadd.s32 %s54, 1
      %s56 = scalar_select %p53, %s54, %s55
      %p59 = pneg %p53
      %p60 = scmp.eq.s32.totalorder %s18, 1
      %p61 = por %p59, %p60
      %p62 = scmp.ne.s32.totalorder %s54, %s57
      %p63 = scmp.eq.s32.totalorder %s18, 0
      %p64 = por %p62, %p63
      %p65 = scmp.ne.s32.totalorder %s54, %s57
      %p66 = scmp.eq.s32.totalorder %s23, 1
      %p67 = por %p65, %p66
      %p68 = scmp.ne.s32.totalorder %s57, %s58
      %p69 = scmp.eq.s32.totalorder %s23, 0
      %p70 = por %p68, %p69
      %p71 = scmp.ne.s32.totalorder %s57, %s58
      %p72 = scmp.eq.s32.totalorder %s24, 1
      %p73 = por %p71, %p72
      %p75 = scmp.ne.s32.totalorder %s58, %s74
      %p76 = scmp.eq.s32.totalorder %s24, 0
      %p77 = por %p75, %p76
      %s78 = ssub.s32 %s18, %s25
      %p79 = scmp.eq.s32.totalorder %s78, 0
      %s81 = sadd.s32 %s80, 1
      %s82 = scalar_select %p79, %s80, %s81
      %p85 = pneg %p79
      %p86 = scmp.eq.s32.totalorder %s18, 1
      %p87 = por %p85, %p86
      %p88 = scmp.ne.s32.totalorder %s80, %s83
      %p89 = scmp.eq.s32.totalorder %s18, 0
      %p90 = por %p88, %p89
      %p91 = scmp.ne.s32.totalorder %s80, %s83
      %p92 = scmp.eq.s32.totalorder %s23, 1
      %p93 = por %p91, %p92
      %p94 = scmp.ne.s32.totalorder %s83, %s84
      %p95 = scmp.eq.s32.totalorder %s23, 0
      %p96 = por %p94, %p95
      %p97 = scmp.ne.s32.totalorder %s83, %s84
      %p98 = scmp.eq.s32.totalorder %s24, 1
      %p99 = por %p97, %p98
      %p101 = scmp.ne.s32.totalorder %s84, %s100
      %p102 = scmp.eq.s32.totalorder %s24, 0
      %p103 = por %p101, %p102
      %s104 = ssub.s32 %s18, %s25
      %p105 = scmp.eq.s32.totalorder %s104, 0
      %s107 = sadd.s32 %s106, 1
      %s108 = scalar_select %p105, %s106, %s107
      %p111 = pneg %p105
      %p112 = scmp.eq.s32.totalorder %s18, 1
      %p113 = por %p111, %p112
      %p114 = scmp.ne.s32.totalorder %s106, %s109
      %p115 = scmp.eq.s32.totalorder %s18, 0
      %p116 = por %p114, %p115
      %p117 = scmp.ne.s32.totalorder %s106, %s109
      %p118 = scmp.eq.s32.totalorder %s23, 1
      %p119 = por %p117, %p118
      %p120 = scmp.ne.s32.totalorder %s109, %s110
      %p121 = scmp.eq.s32.totalorder %s23, 0
      %p122 = por %p120, %p121
      %p123 = scmp.ne.s32.totalorder %s109, %s110
      %p124 = scmp.eq.s32.totalorder %s24, 1
      %p125 = por %p123, %p124
      %p127 = scmp.ne.s32.totalorder %s110, %s126
      %p128 = scmp.eq.s32.totalorder %s24, 0
      %p129 = por %p127, %p128
      %s131 = sadd.s32 %s130, 1
      %p134 = scmp.eq.s32.totalorder %s18, 1
      %p135 = scmp.ne.s32.totalorder %s130, %s132
      %p136 = scmp.eq.s32.totalorder %s18, 0
      %p137 = por %p135, %p136
      %p138 = scmp.ne.s32.totalorder %s130, %s132
      %p139 = scmp.eq.s32.totalorder %s23, 1
      %p140 = por %p138, %p139
      %p141 = scmp.ne.s32.totalorder %s132, %s133
      %p142 = scmp.eq.s32.totalorder %s23, 0
      %p143 = por %p141, %p142
      %p144 = scmp.ne.s32.totalorder %s132, %s133
      %p145 = scmp.eq.s32.totalorder %s24, 1
      %p146 = por %p144, %p145
      %p148 = scmp.ne.s32.totalorder %s133, %s147
      %p149 = scmp.eq.s32.totalorder %s24, 0
      %p150 = por %p148, %p149
      %s152 = sadd.s32 %s151, 1
      %p155 = scmp.eq.s32.totalorder %s18, 1
      %p156 = scmp.ne.s32.totalorder %s151, %s153
      %p157 = scmp.eq.s32.totalorder %s18, 0
      %p158 = por %p156, %p157
      %p159 = scmp.ne.s32.totalorder %s151, %s153
      %p160 = scmp.eq.s32.totalorder %s23, 1
      %p161 = por %p159, %p160
      %p162 = scmp.ne.s32.totalorder %s153, %s154
      %p163 = scmp.eq.s32.totalorder %s23, 0
      %p164 = por %p162, %p163
      %p165 = scmp.ne.s32.totalorder %s153, %s154
      %p166 = scmp.eq.s32.totalorder %s24, 1
      %p167 = por %p165, %p166
      %p169 = scmp.ne.s32.totalorder %s154, %s168
      %p170 = scmp.eq.s32.totalorder %s24, 0
      %p171 = por %p169, %p170
      %s172 = ssub.s32 %s18, %s25
      %p173 = scmp.eq.s32.totalorder %s172, 0
      %s175 = sadd.s32 %s174, 1
      %s176 = scalar_select %p173, %s174, %s175
      %p179 = pneg %p173
      %p180 = scmp.eq.s32.totalorder %s18, 1
      %p181 = por %p179, %p180
      %p182 = scmp.ne.s32.totalorder %s174, %s177
      %p183 = scmp.eq.s32.totalorder %s18, 0
      %p184 = por %p182, %p183
      %p185 = scmp.ne.s32.totalorder %s174, %s177
      %p186 = scmp.eq.s32.totalorder %s23, 1
      %p187 = por %p185, %p186
      %p188 = scmp.ne.s32.totalorder %s177, %s178
      %p189 = scmp.eq.s32.totalorder %s23, 0
      %p190 = por %p188, %p189
      %p191 = scmp.ne.s32.totalorder %s177, %s178
      %p192 = scmp.eq.s32.totalorder %s24, 1
      %p193 = por %p191, %p192
      %p195 = scmp.ne.s32.totalorder %s178, %s194
      %p196 = scmp.eq.s32.totalorder %s24, 0
      %p197 = por %p195, %p196
      %s198 = ssub.s32 %s18, %s25
      %p199 = scmp.eq.s32.totalorder %s198, 0
      %s201 = sadd.s32 %s200, 1
      %s202 = scalar_select %p199, %s200, %s201
      %p205 = pneg %p199
      %p206 = scmp.eq.s32.totalorder %s18, 1
      %p207 = por %p205, %p206
      %p208 = scmp.ne.s32.totalorder %s200, %s203
      %p209 = scmp.eq.s32.totalorder %s18, 0
      %p210 = por %p208, %p209
      %p211 = scmp.ne.s32.totalorder %s200, %s203
      %p212 = scmp.eq.s32.totalorder %s23, 1
      %p213 = por %p211, %p212
      %p214 = scmp.ne.s32.totalorder %s203, %s204
      %p215 = scmp.eq.s32.totalorder %s23, 0
      %p216 = por %p214, %p215
      %p217 = scmp.ne.s32.totalorder %s203, %s204
      %p218 = scmp.eq.s32.totalorder %s24, 1
      %p219 = por %p217, %p218
      %p221 = scmp.ne.s32.totalorder %s204, %s220
      %p222 = scmp.eq.s32.totalorder %s24, 0
      %p223 = por %p221, %p222
      %s224 = ssub.s32 %s18, %s25
      %p225 = scmp.eq.s32.totalorder %s224, 0
      %s227 = sadd.s32 %s226, 1
      %s228 = scalar_select %p225, %s226, %s227
      %p231 = pneg %p225
      %p232 = scmp.eq.s32.totalorder %s18, 1
      %p233 = por %p231, %p232
      %p234 = scmp.ne.s32.totalorder %s226, %s229
      %p235 = scmp.eq.s32.totalorder %s18, 0
      %p236 = por %p234, %p235
      %p237 = scmp.ne.s32.totalorder %s226, %s229
      %p238 = scmp.eq.s32.totalorder %s23, 1
      %p239 = por %p237, %p238
      %p240 = scmp.ne.s32.totalorder %s229, %s230
      %p241 = scmp.eq.s32.totalorder %s23, 0
      %p242 = por %p240, %p241
      %p243 = scmp.ne.s32.totalorder %s229, %s230
      %p244 = scmp.eq.s32.totalorder %s24, 1
      %p245 = por %p243, %p244
      %p247 = scmp.ne.s32.totalorder %s230, %s246
      %p248 = scmp.eq.s32.totalorder %s24, 0
      %p249 = por %p247, %p248
      %p250 = scmp.le.s32.totalorder 1, %s18
      %p251 = scmp.lt.s32.totalorder %s18, 3
      %p252 = pnand %p250, %p251
      %p253 = pneg %p252
      // Predicated region
      $region9: #{pointer_generator_forward.4} parent=5 // pred_check
        _
      $region10: #{pointer_generator_forward.4} parent=5 // pred_check_branch
        %255 = sbr.rel (%p252) target = $region12
      $region11: #{pointer_generator_forward.4} parent=5 // pred_region
        %s256 = ssub.s32 %s18, 1
        // Predicated region
        $region13: #{pointer_generator_forward.4} parent=11 // pred_check
          %p257 = pneg %p143
        $region14: #{pointer_generator_forward.4} parent=11 // pred_check_branch
          %259 = sbr.rel (%p257) target = $region16
        $region15: #{pointer_generator_forward.4} parent=11 // pred_region
          _
        $region16: #{pointer_generator_forward.4} parent=11 // pred_fallthru
          _
        // Predicated region
        $region17: #{pointer_generator_forward.4} parent=11 // pred_check
          %p260 = pneg %p164
        $region18: #{pointer_generator_forward.4} parent=11 // pred_check_branch
          %262 = sbr.rel (%p260) target = $region20
        $region19: #{pointer_generator_forward.4} parent=11 // pred_region
          _
        $region20: #{pointer_generator_forward.4} parent=11 // pred_fallthru
          _
      $region12: #{pointer_generator_forward.4} parent=5 // pred_fallthru
        _
      %p263 = scmp.lt.s32.totalorder %s18, 2
      // Predicated region
      $region21: #{pointer_generator_forward.4} parent=5 // pred_check
        %p264 = pneg %p263
      $region22: #{pointer_generator_forward.4} parent=5 // pred_check_branch
        %266 = sbr.rel (%p264) target = $region24
      $region23: #{pointer_generator_forward.4} parent=5 // pred_region
        // Predicated region
        $region25: #{pointer_generator_forward.4} parent=23 // pred_check
          %p267 = pneg %p38
        $region26: #{pointer_generator_forward.4} parent=23 // pred_check_branch
          %269 = sbr.rel (%p267) target = $region28
        $region27: #{pointer_generator_forward.4} parent=23 // pred_region
          %p270 = scmp.lt.s32.totalorder %s18, 1
          %s271 = scalar_select %p270, %s18, 1
          %s272 = smul.addr %s271, 8
          %s273 = scalar_lea.vmem %s0, %s272
        $region28: #{pointer_generator_forward.4} parent=23 // pred_fallthru
          _
        // Predicated region
        $region29: #{pointer_generator_forward.4} parent=23 // pred_check
          %p274 = pneg %p64
        $region30: #{pointer_generator_forward.4} parent=23 // pred_check_branch
          %276 = sbr.rel (%p274) target = $region32
        $region31: #{pointer_generator_forward.4} parent=23 // pred_region
          %p277 = scmp.lt.s32.totalorder %s18, 1
          %s278 = scalar_select %p277, %s18, 1
          %s279 = smul.addr %s278, 8
          %s280 = scalar_lea.vmem %s1, %s279
        $region32: #{pointer_generator_forward.4} parent=23 // pred_fallthru
          _
        // Predicated region
        $region33: #{pointer_generator_forward.4} parent=23 // pred_check
          %p281 = pneg %p90
        $region34: #{pointer_generator_forward.4} parent=23 // pred_check_branch
          %283 = sbr.rel (%p281) target = $region36
        $region35: #{pointer_generator_forward.4} parent=23 // pred_region
          %p284 = scmp.lt.s32.totalorder %s18, 1
          %s285 = scalar_select %p284, %s18, 1
          %s286 = smul.addr %s285, 8
          %s287 = scalar_lea.vmem %s2, %s286
        $region36: #{pointer_generator_forward.4} parent=23 // pred_fallthru
          _
        // Predicated region
        $region37: #{pointer_generator_forward.4} parent=23 // pred_check
          %p288 = pneg %p116
        $region38: #{pointer_generator_forward.4} parent=23 // pred_check_branch
          %290 = sbr.rel (%p288) target = $region40
        $region39: #{pointer_generator_forward.4} parent=23 // pred_region
          %p291 = scmp.lt.s32.totalorder %s18, 1
          %s292 = scalar_select %p291, %s18, 1
          %s293 = scalar_lea.vmem %s3, %s292
        $region40: #{pointer_generator_forward.4} parent=23 // pred_fallthru
          _
      $region24: #{pointer_generator_forward.4} parent=5 // pred_fallthru
        _
      %p294 = scmp.le.s32.totalorder 1, %s18
      %p295 = scmp.lt.s32.totalorder %s18, 3
      %p296 = pnand %p294, %p295
      %p297 = pneg %p296
      // Predicated region
      $region41: #{pointer_generator_forward.4} parent=5 // pred_check
        _
      $region42: #{pointer_generator_forward.4} parent=5 // pred_check_branch
        %299 = sbr.rel (%p296) target = $region44
      $region43: #{pointer_generator_forward.4} parent=5 // pred_region
        %s300 = ssub.s32 %s18, 1
        %p301 = scmp.lt.s32.totalorder %s23, 1
        %s302 = scalar_select %p301, %s23, 1
        %s303 = smul.addr %s302, 8
        %s304 = scalar_lea.vmem %s0, %s303
        %p305 = pneg %p44
        %p306 = pneg %p41
        %p307 = scmp.lt.s32.totalorder %s23, 1
        %s308 = scalar_select %p307, %s23, 1
        %s309 = smul.addr %s308, 8
        %s310 = scalar_lea.vmem %s1, %s309
        %p311 = pneg %p70
        %p312 = pneg %p67
        %p313 = scmp.lt.s32.totalorder %s23, 1
        %s314 = scalar_select %p313, %s23, 1
        %s315 = smul.addr %s314, 8
        %s316 = scalar_lea.vmem %s2, %s315
        %p317 = pneg %p96
        %p318 = pneg %p93
        %p319 = scmp.lt.s32.totalorder %s23, 1
        %s320 = scalar_select %p319, %s23, 1
        %s321 = scalar_lea.vmem %s3, %s320
        %p322 = pneg %p122
        %p323 = pneg %p119
        %p324 = pneg %p143
        %p325 = pneg %p140
        %p326 = pneg %p164
        %p327 = pneg %p161
        %p328 = pneg %p190
        %p329 = pneg %p187
        %p330 = scmp.lt.s32.totalorder %s23, 1
        %s331 = scalar_select %p330, %s23, 1
        %s332 = smul.addr %s331, 8
        %s333 = scalar_lea.vmem %s6, %s332
        %p334 = pneg %p216
        %p335 = pneg %p213
        %s336 = sand.u32 %s203, 1
        %s337 = scalar_lea.sflag [#allocation3], %s336
        %s338 = sand.u32 %s203, 1
        %s339 = scalar_lea.vmem [#allocation2], %s338
        %p340 = pneg %p242
        %p341 = pneg %p239
        %p342 = scmp.lt.s32.totalorder %s23, 1
        %s343 = scalar_select %p342, %s23, 1
        %s344 = smul.addr %s343, 8
        %s345 = scalar_lea.vmem %s8, %s344
        %p346 = scmp.lt.s32.totalorder %s23, 1
        %s347 = scalar_select %p346, %s23, 1
        %s348 = smul.addr %s347, 8
        %s349 = scalar_lea.vmem %s0, %s348
        %p350 = scmp.lt.s32.totalorder %s23, 1
        %s351 = scalar_select %p350, %s23, 1
        %s352 = smul.addr %s351, 8
        %s353 = scalar_lea.vmem %s1, %s352
        %p354 = scmp.lt.s32.totalorder %s23, 1
        %s355 = scalar_select %p354, %s23, 1
        %s356 = smul.addr %s355, 8
        %s357 = scalar_lea.vmem %s2, %s356
        %p358 = scmp.lt.s32.totalorder %s23, 1
        %s359 = scalar_select %p358, %s23, 1
        %s360 = scalar_lea.vmem %s3, %s359
        %p361 = scmp.lt.s32.totalorder %s23, 1
        %s362 = scalar_select %p361, %s23, 1
        %s363 = smul.addr %s362, 8
        %s364 = scalar_lea.vmem %s6, %s363
        %p365 = scmp.lt.s32.totalorder %s23, 1
        %s366 = scalar_select %p365, %s23, 1
        %s367 = smul.addr %s366, 8
        %s368 = scalar_lea.vmem %s8, %s367
        %v370 = vld [vmem:[%s349] sm:$0xff]
        %v371 = vld [vmem:[%s353] sm:$0xff]
        %v372 = vld [vmem:[%s357] sm:$0xff]
        %vm373 = vcmask 261120
        %v375 = vsel %vm373, %v371, 0
        %v378 = vsel %vm373, %v370, 0
        %380 = vmatprep.subr.mxu0 0.0
        %381 = vmatpush1.xpose.msra.mxu0 0.0
        %382 = vmatprep.subr.mxu0 0.0
        %383 = vmatpush1.xpose.msra.mxu0 0.0
        %384 = vmatprep.subr.mxu0 0.0
        %385 = vmatpush1.xpose.msra.mxu0 0.0
        %386 = vmatprep.subr.mxu0 0.0
        %387 = vmatpush1.xpose.msra.mxu0 0.0
        %388 = vmatprep.subr.mxu0 0.0
        %389 = vmatpush1.xpose.msra.mxu0 0.0
        %390 = vmatprep.subr.mxu0 0.0
        %391 = vmatpush1.xpose.msra.mxu0 0.0
        %392 = vmatprep.subr.mxu0 0.0
        %393 = vmatpush1.xpose.msra.mxu0 0.0
        %394 = vmatprep.subr.mxu0 0.0
        %395 = vmatpush1.xpose.msra.mxu0 0.0
        %396 = vmatprep.subr.mxu0 0.0
        %397 = vmatpush1.xpose.msra.mxu0 0.0
        %398 = vmatprep.subr.mxu0 0.0
        %399 = vmatpush1.xpose.msra.mxu0 0.0
        %400 = vmatprep.subr.mxu0 0.0
        %401 = vmatpush1.xpose.msra.mxu0 0.0
        %402 = vmatprep.subr.mxu0 0.0
        %403 = vmatpush1.xpose.msra.mxu0 0.0
        %404 = vmatprep.subr.mxu0 0.0
        %405 = vmatpush1.xpose.msra.mxu0 0.0
        %406 = vmatprep.subr.mxu0 0.0
        %407 = vmatpush1.xpose.msra.mxu0 0.0
        %408 = vmatprep.subr.mxu0 0.0
        %409 = vmatpush1.xpose.msra.mxu0 0.0
        %410 = vmatprep.subr.mxu0 0.0
        %411 = vmatpush1.xpose.msra.mxu0 %v378
        %412 = vmatprep.subr.mxu0 0.0
        %413 = vmatpush2.xpose.msra.mxu0 0.0
        %414 = vmatprep.subr.mxu0 0.0
        %415 = vmatpush2.xpose.msra.mxu0 0.0
        %416 = vmatprep.subr.mxu0 0.0
        %417 = vmatpush2.xpose.msra.mxu0 0.0
        %418 = vmatprep.subr.mxu0 0.0
        %419 = vmatpush2.xpose.msra.mxu0 0.0
        %420 = vmatprep.subr.mxu0 0.0
        %421 = vmatpush2.xpose.msra.mxu0 0.0
        %422 = vmatprep.subr.mxu0 0.0
        %423 = vmatpush2.xpose.msra.mxu0 0.0
        %424 = vmatprep.subr.mxu0 0.0
        %425 = vmatpush2.xpose.msra.mxu0 0.0
        %426 = vmatprep.subr.mxu0 0.0
        %427 = vmatpush2.xpose.msra.mxu0 0.0
        %428 = vmatprep.subr.mxu0 0.0
        %429 = vmatpush2.xpose.msra.mxu0 0.0
        %430 = vmatprep.subr.mxu0 0.0
        %431 = vmatpush2.xpose.msra.mxu0 0.0
        %432 = vmatprep.subr.mxu0 0.0
        %433 = vmatpush2.xpose.msra.mxu0 0.0
        %434 = vmatprep.subr.mxu0 0.0
        %435 = vmatpush2.xpose.msra.mxu0 0.0
        %436 = vmatprep.subr.mxu0 0.0
        %437 = vmatpush2.xpose.msra.mxu0 0.0
        %438 = vmatprep.subr.mxu0 0.0
        %439 = vmatpush2.xpose.msra.mxu0 0.0
        %440 = vmatprep.subr.mxu0 0.0
        %441 = vmatpush2.xpose.msra.mxu0 0.0
        %442 = vmatprep.subr.mxu0 0.0
        %443 = vmatpush2.xpose.msra.mxu0 0.0
        %444 = vmatprep.mubr.f32.mxu0 0.0
        %445 = vmatmul.mubr.f32.gmra.mxu0 %v375
        %v446 = vpop.f32.mrf.mxu0
        %v447 = vadd.f32 0.0, %v446
        %v448 = vpop.f32.mrf.mxu0
        %449 = vdwg.mxu0
        %v450 = vld [vmem:[%s360] sm:$0x1]
        %vm451 = vcmp.gt.f32.partialorder %v450, 0.5
        %v452 = vsel %vm451, 1, 0
        %v453 = vlaneseq
        %v454 = vshrl.u32 %v453, 7
        %v455 = vsub.s32 0, %v454
        %v456 = vrot.slane %v452, %v455
        %vm457 = vcmp.eq.s32.totalorder %v456, 1
        %v458 = vsel %vm457, 1e-10, %v447
        %vm459 = vcmask 64512
        %v460 = vsel %vm459, %v458, -inf
        %461 = vmax.xlane.f32.xlu0 %v460
        %v462 = vpop.xlane.xlu0 %461
        %v463 = vsub.f32 %v458, %v462
        %v464 = vmul.f32 %v463, 1.442695
        %v465 = vpow.pop %v464
        %v466 = vsel %vm459, %v465, 0.0
        %467 = vadd.xlane.f32.xlu0 %v466
        %v468 = vpop.xlane.xlu0 %467
        %v469 = vrcp.pop %v468
        %v470 = vmul.f32 %v465, %v469
        %471 = vst.msk [vmem:[%s364] sm:$0xff] %vm459, %v470
        %v473 = vsel %vm459, %v470, 0
        %475 = vmatprep.subr.mxu0 0.0
        %476 = vmatpush1.msra.mxu0 0.0
        %477 = vmatprep.subr.mxu0 0.0
        %478 = vmatpush1.msra.mxu0 0.0
        %479 = vmatprep.subr.mxu0 0.0
        %480 = vmatpush1.msra.mxu0 0.0
        %481 = vmatprep.subr.mxu0 0.0
        %482 = vmatpush1.msra.mxu0 0.0
        %483 = vmatprep.subr.mxu0 0.0
        %484 = vmatpush1.msra.mxu0 0.0
        %485 = vmatprep.subr.mxu0 0.0
        %486 = vmatpush1.msra.mxu0 0.0
        %487 = vmatprep.subr.mxu0 0.0
        %488 = vmatpush1.msra.mxu0 0.0
        %489 = vmatprep.subr.mxu0 0.0
        %490 = vmatpush1.msra.mxu0 0.0
        %491 = vmatprep.subr.mxu0 0.0
        %492 = vmatpush1.msra.mxu0 0.0
        %493 = vmatprep.subr.mxu0 0.0
        %494 = vmatpush1.msra.mxu0 0.0
        %495 = vmatprep.subr.mxu0 0.0
        %496 = vmatpush1.msra.mxu0 0.0
        %497 = vmatprep.subr.mxu0 0.0
        %498 = vmatpush1.msra.mxu0 0.0
        %499 = vmatprep.subr.mxu0 0.0
        %500 = vmatpush1.msra.mxu0 0.0
        %501 = vmatprep.subr.mxu0 0.0
        %502 = vmatpush1.msra.mxu0 0.0
        %503 = vmatprep.subr.mxu0 0.0
        %504 = vmatpush1.msra.mxu0 0.0
        %505 = vmatprep.subr.mxu0 0.0
        %506 = vmatpush1.msra.mxu0 %v370
        %507 = vmatprep.subr.mxu0 0.0
        %508 = vmatpush2.msra.mxu0 0.0
        %509 = vmatprep.subr.mxu0 0.0
        %510 = vmatpush2.msra.mxu0 0.0
        %511 = vmatprep.subr.mxu0 0.0
        %512 = vmatpush2.msra.mxu0 0.0
        %513 = vmatprep.subr.mxu0 0.0
        %514 = vmatpush2.msra.mxu0 0.0
        %515 = vmatprep.subr.mxu0 0.0
        %516 = vmatpush2.msra.mxu0 0.0
        %517 = vmatprep.subr.mxu0 0.0
        %518 = vmatpush2.msra.mxu0 0.0
        %519 = vmatprep.subr.mxu0 0.0
        %520 = vmatpush2.msra.mxu0 0.0
        %521 = vmatprep.subr.mxu0 0.0
        %522 = vmatpush2.msra.mxu0 0.0
        %523 = vmatprep.subr.mxu0 0.0
        %524 = vmatpush2.msra.mxu0 0.0
        %525 = vmatprep.subr.mxu0 0.0
        %526 = vmatpush2.msra.mxu0 0.0
        %527 = vmatprep.subr.mxu0 0.0
        %528 = vmatpush2.msra.mxu0 0.0
        %529 = vmatprep.subr.mxu0 0.0
        %530 = vmatpush2.msra.mxu0 0.0
        %531 = vmatprep.subr.mxu0 0.0
        %532 = vmatpush2.msra.mxu0 0.0
        %533 = vmatprep.subr.mxu0 0.0
        %534 = vmatpush2.msra.mxu0 0.0
        %535 = vmatprep.subr.mxu0 0.0
        %536 = vmatpush2.msra.mxu0 0.0
        %537 = vmatprep.subr.mxu0 0.0
        %538 = vmatpush2.msra.mxu0 0.0
        %539 = vmatprep.mubr.f32.mxu0 0.0
        %540 = vmatmul.mubr.f32.gmra.mxu0 %v473
        %v541 = vpop.f32.mrf.mxu0
        %v542 = vadd.f32 0.0, %v541
        %v543 = vpop.f32.mrf.mxu0
        %544 = vdwg.mxu0
        %v545 = vld [vmem:[%s4] sm:$0x1]
        %v546 = vld [vmem:[%s4 + $0x1] sm:$0x1]
        %v547 = vld [vmem:[%s4 + $0x2] sm:$0x1]
        %v548 = vld [vmem:[%s4 + $0x3] sm:$0x1]
        %v549 = vld [vmem:[%s4 + $0x4] sm:$0x1]
        %v550 = vlaneseq
        %v551 = vshrl.u32 %v550, 7
        %v552 = vsub.s32 0, %v551
        %v553 = vrot.slane %v545, %v552
        %v554 = vmul.f32 %v542, %v553
        %v555 = vlaneseq
        %v556 = vshrl.u32 %v555, 7
        %v557 = vsub.s32 0, %v556
        %v558 = vrot.slane %v546, %v557
        %v559 = vmul.f32 %v371, %v558
        %v560 = vadd.f32 %v554, %v559
        %v561 = vlaneseq
        %v562 = vshrl.u32 %v561, 7
        %v563 = vsub.s32 0, %v562
        %v564 = vrot.slane %v547, %v563
        %v565 = vmul.f32 %v372, %v564
        %v566 = vadd.f32 %v560, %v565
        %v567 = vlaneseq
        %v568 = vshrl.u32 %v567, 7
        %v569 = vsub.s32 0, %v568
        %v570 = vrot.slane %v549, %v569
        %v571 = vadd.f32 %v566, %v570
        %v572 = vsel %vm373, %v571, 0.0
        %573 = vadd.xlane.f32.xlu0 %v572
        %v574 = vpop.xlane.xlu0 %573
        %v575 = vxor.u32 %v574, 2147483648
        %v576 = vmul.f32 %v575, 1.442695
        %v577 = vpow.pop %v576
        %v578 = vadd.f32 %v577, 1.0
        %v579 = vrcp.pop %v578
        %v580 = vmul.f32 1.0, %v579
        %v582 = vlaneseq
        %v583 = vand.u32 %v582, 127
        %v584 = vlaneseq
        %v585 = vshrl.u32 %v584, 7
        %v586 = vsub.s32 %v583, %v585
        %v587 = vrot.slane %v580, %v586
        %vm589 = vcmask 57344
        %590 = vst.msk [vmem:[%s339] sm:$0x1] %vm589, %v587
        %v591 = vld [vmem:[%s5] sm:$0xf]
        %v592 = vld [vmem:[%s5 + $0x4] sm:$0xf]
        %v593 = vld [vmem:[%s5 + $0x8] sm:$0xf]
        %v594 = vld [vmem:[%s5 + $0xc] sm:$0xf]
        %v595 = vld [vmem:[%s5 + $0x10] sm:$0xf]
        %v596 = vld [vmem:[%s5 + $0x14] sm:$0xf]
        %v597 = vld [vmem:[%s5 + $0x18] sm:$0xf]
        %v598 = vld [vmem:[%s5 + $0x1c] sm:$0xf]
        %v599 = vpack.c.bf16 %v371, %v371
        %v600 = vpack.c.bf16 %v542, %v542
        %v605 = vunpack.c.l.b16 %v595
        %v606 = vunpack.c.l.b16 %v596
        %v607 = vunpack.c.l.b16 %v597
        %v608 = vunpack.c.l.b16 %v598
        %v609 = vpack.c.b16 %v606, %v605
        %v610 = vpack.c.b16 %v608, %v607
        %v614 = vsel %vm373, %v600, 0
        %616 = vmatprep.subr.bf16.mxu0 0
        %617 = vmatpush1.bf16.msra.mxu0 0
        %618 = vmatprep.subr.bf16.mxu0 0
        %619 = vmatpush1.bf16.msra.mxu0 0
        %620 = vmatprep.subr.bf16.mxu0 0
        %621 = vmatpush1.bf16.msra.mxu0 0
        %622 = vmatprep.subr.bf16.mxu0 0
        %623 = vmatpush1.bf16.msra.mxu0 0
        %624 = vmatprep.subr.bf16.mxu0 0
        %625 = vmatpush1.bf16.msra.mxu0 0
        %626 = vmatprep.subr.bf16.mxu0 0
        %627 = vmatpush1.bf16.msra.mxu0 0
        %628 = vmatprep.subr.bf16.mxu0 0
        %629 = vmatpush1.bf16.msra.mxu0 %v610
        %630 = vmatprep.subr.bf16.mxu0 0
        %631 = vmatpush1.bf16.msra.mxu0 %v609
        %632 = vmatprep.subr.bf16.mxu0 0
        %633 = vmatpush2.bf16.msra.mxu0 0
        %634 = vmatprep.subr.bf16.mxu0 0
        %635 = vmatpush2.bf16.msra.mxu0 0
        %636 = vmatprep.subr.bf16.mxu0 0
        %637 = vmatpush2.bf16.msra.mxu0 0
        %638 = vmatprep.subr.bf16.mxu0 0
        %639 = vmatpush2.bf16.msra.mxu0 0
        %640 = vmatprep.subr.bf16.mxu0 0
        %641 = vmatpush2.bf16.msra.mxu0 0
        %642 = vmatprep.subr.bf16.mxu0 0
        %643 = vmatpush2.bf16.msra.mxu0 0
        %644 = vmatprep.subr.bf16.mxu0 0
        %645 = vmatpush2.bf16.msra.mxu0 0
        %646 = vmatprep.subr.bf16.mxu0 0
        %647 = vmatpush2.bf16.msra.mxu0 0
        %648 = vmatprep.mubr.bf16.mxu0 0
        %649 = vmatmul.mubr.bf16.gmra.mxu0 %v614
        %v650 = vpop.f32.mrf.mxu0
        %v651 = vadd.f32 0.0, %v650
        %v652 = vpop.f32.mrf.mxu0
        %v653 = vpop.f32.mrf.mxu0
        %v654 = vpop.f32.mrf.mxu0
        %655 = vdwg.mxu0
        %v660 = vunpack.c.l.b16 %v591
        %v661 = vunpack.c.l.b16 %v592
        %v662 = vunpack.c.l.b16 %v593
        %v663 = vunpack.c.l.b16 %v594
        %v664 = vpack.c.b16 %v661, %v660
        %v665 = vpack.c.b16 %v663, %v662
        %v669 = vsel %vm373, %v599, 0
        %671 = vmatprep.subr.bf16.mxu0 0
        %672 = vmatpush1.bf16.msra.mxu0 0
        %673 = vmatprep.subr.bf16.mxu0 0
        %674 = vmatpush1.bf16.msra.mxu0 0
        %675 = vmatprep.subr.bf16.mxu0 0
        %676 = vmatpush1.bf16.msra.mxu0 0
        %677 = vmatprep.subr.bf16.mxu0 0
        %678 = vmatpush1.bf16.msra.mxu0 0
        %679 = vmatprep.subr.bf16.mxu0 0
        %680 = vmatpush1.bf16.msra.mxu0 0
        %681 = vmatprep.subr.bf16.mxu0 0
        %682 = vmatpush1.bf16.msra.mxu0 0
        %683 = vmatprep.subr.bf16.mxu0 0
        %684 = vmatpush1.bf16.msra.mxu0 %v665
        %685 = vmatprep.subr.bf16.mxu0 0
        %686 = vmatpush1.bf16.msra.mxu0 %v664
        %687 = vmatprep.subr.bf16.mxu0 0
        %688 = vmatpush2.bf16.msra.mxu0 0
        %689 = vmatprep.subr.bf16.mxu0 0
        %690 = vmatpush2.bf16.msra.mxu0 0
        %691 = vmatprep.subr.bf16.mxu0 0
        %692 = vmatpush2.bf16.msra.mxu0 0
        %693 = vmatprep.subr.bf16.mxu0 0
        %694 = vmatpush2.bf16.msra.mxu0 0
        %695 = vmatprep.subr.bf16.mxu0 0
        %696 = vmatpush2.bf16.msra.mxu0 0
        %697 = vmatprep.subr.bf16.mxu0 0
        %698 = vmatpush2.bf16.msra.mxu0 0
        %699 = vmatprep.subr.bf16.mxu0 0
        %700 = vmatpush2.bf16.msra.mxu0 0
        %701 = vmatprep.subr.bf16.mxu0 0
        %702 = vmatpush2.bf16.msra.mxu0 0
        %703 = vmatprep.mubr.bf16.mxu0 0
        %704 = vmatmul.mubr.bf16.gmra.mxu0 %v669
        %v705 = vpop.f32.mrf.mxu0
        %v706 = vadd.f32 %v651, %v705
        %v707 = vpop.f32.mrf.mxu0
        %v708 = vpop.f32.mrf.mxu0
        %v709 = vpop.f32.mrf.mxu0
        %710 = vdwg.mxu0
        %v711 = vlaneseq
        %v712 = vshrl.u32 %v711, 7
        %v713 = vsub.s32 0, %v712
        %v714 = vrot.slane %v548, %v713
        %v715 = vadd.f32 %v706, %v714
        %v716 = vtanh.pop %v715
        %717 = vst.msk [vmem:[%s368] sm:$0xff] %vm373, %v716
        %p718 = scmp.lt.s32.totalorder %s23, 1
        %s719 = scalar_select %p718, %s23, 1
        %s720 = smul.addr %s719, 8
        %s721 = scalar_lea.vmem %s6, %s720
        %s722 = sand.u32 %s203, 1
        %s723 = scalar_lea.sflag [#allocation3], %s722
        %s724 = sand.u32 %s203, 1
        %s725 = scalar_lea.vmem [#allocation2], %s724
        %p726 = scmp.lt.s32.totalorder %s23, 1
        %s727 = scalar_select %p726, %s23, 1
        %s728 = smul.addr %s727, 8
        %s729 = scalar_lea.vmem %s8, %s728
        // Predicated region
        $region45: #{pointer_generator_forward.4} parent=43 // pred_check
          %p730 = pneg %p187
        $region46: #{pointer_generator_forward.4} parent=43 // pred_check_branch
          %732 = sbr.rel (%p730) target = $region48
        $region47: #{pointer_generator_forward.4} parent=43 // pred_region
          _
        $region48: #{pointer_generator_forward.4} parent=43 // pred_fallthru
          _
        // Predicated region
        $region49: #{pointer_generator_forward.4} parent=43 // pred_check
          %p733 = pneg %p213
        $region50: #{pointer_generator_forward.4} parent=43 // pred_check_branch
          %735 = sbr.rel (%p733) target = $region52
        $region51: #{pointer_generator_forward.4} parent=43 // pred_region
          %s737 = ssub.s32 16, 16
          %738 = vsyncadd %s723, %s737
          %s739 = smul.addr %s23, 16
          %s740 = scalar_lea.hbm %s7, %s739
          %s742 = sshll.u32 %s725, 4
          %s743 = int_to_ptr.vmem [resolvable:$true] %s742
          %745 = dma.vmem_to_hbm [thread:$0]  %s743, 16, %s740, %s723
        $region52: #{pointer_generator_forward.4} parent=43 // pred_fallthru
          _
        // Predicated region
        $region53: #{pointer_generator_forward.4} parent=43 // pred_check
          %p746 = pneg %p239
        $region54: #{pointer_generator_forward.4} parent=43 // pred_check_branch
          %748 = sbr.rel (%p746) target = $region56
        $region55: #{pointer_generator_forward.4} parent=43 // pred_region
          _
        $region56: #{pointer_generator_forward.4} parent=43 // pred_fallthru
          _
      $region44: #{pointer_generator_forward.4} parent=5 // pred_fallthru
        _
      %p749 = scmp.le.s32.totalorder 2, %s18
      // Predicated region
      $region57: #{pointer_generator_forward.4} parent=5 // pred_check
        %p750 = pneg %p749
      $region58: #{pointer_generator_forward.4} parent=5 // pred_check_branch
        %752 = sbr.rel (%p750) target = $region60
      $region59: #{pointer_generator_forward.4} parent=5 // pred_region
        %s753 = ssub.s32 %s18, 2
        // Predicated region
        $region61: #{pointer_generator_forward.4} parent=59 // pred_check
          %p754 = pneg %p193
        $region62: #{pointer_generator_forward.4} parent=59 // pred_check_branch
          %756 = sbr.rel (%p754) target = $region64
        $region63: #{pointer_generator_forward.4} parent=59 // pred_region
          %p757 = scmp.lt.s32.totalorder %s24, 1
          %s758 = scalar_select %p757, %s24, 1
          %s759 = smul.addr %s758, 8
          %s760 = scalar_lea.vmem %s6, %s759
        $region64: #{pointer_generator_forward.4} parent=59 // pred_fallthru
          _
        // Predicated region
        $region65: #{pointer_generator_forward.4} parent=59 // pred_check
          %p761 = pneg %p219
        $region66: #{pointer_generator_forward.4} parent=59 // pred_check_branch
          %763 = sbr.rel (%p761) target = $region68
        $region67: #{pointer_generator_forward.4} parent=59 // pred_region
          %s764 = sand.u32 %s204, 1
          %s765 = scalar_lea.sflag [#allocation3], %s764
          %s766 = sand.u32 %s204, 1
          %s767 = scalar_lea.vmem [#allocation2], %s766
          %768 = dma.done %s765, 16
        $region68: #{pointer_generator_forward.4} parent=59 // pred_fallthru
          _
        // Predicated region
        $region69: #{pointer_generator_forward.4} parent=59 // pred_check
          %p769 = pneg %p245
        $region70: #{pointer_generator_forward.4} parent=59 // pred_check_branch
          %771 = sbr.rel (%p769) target = $region72
        $region71: #{pointer_generator_forward.4} parent=59 // pred_region
          %p772 = scmp.lt.s32.totalorder %s24, 1
          %s773 = scalar_select %p772, %s24, 1
          %s774 = smul.addr %s773, 8
          %s775 = scalar_lea.vmem %s8, %s774
        $region72: #{pointer_generator_forward.4} parent=59 // pred_fallthru
          _
      $region60: #{pointer_generator_forward.4} parent=5 // pred_fallthru
        _
    $region6: #{pointer_generator_forward.4} parent=1 // loop_footer
      %s22 = sadd.s32 1, %s18
    $region7: #{pointer_generator_forward.4} parent=1 // loop_footer_branch
      %17 = sbr.rel target = $region3
    $region8: #{pointer_generator_forward.4} parent=1 // loop_exit
      _
    %776 = vsyncpa [#allocation3], 1
    %s777 = scalar_lea.sflag [#allocation3], 1
    %778 = vsyncpa %s777, 1

// kernel: pointer_generator_forward.3
$region0: #{pointer_generator_forward.3}
  #allocation0 [shape = 'u32[]', space=smem, size = 0x4, offset = 0x4, fixed_abs, tag = 'smem constant byte address 0x4 - core index']
  #allocation1 [shape = 'u32[144,128]{1,0:T(1,128)}', space=vmem, size = 0x12000, scoped, tag = 'internal scratch']
  #allocation2 [shape = 'f32[8,2,32]{2,1,0:T(2,128)}', space=vmem, size = 0x2000, scoped, tag = 'scratch operand']
  #allocation3 [shape = 'f32[8,2,128]{2,1,0:T(2,128)}', space=vmem, size = 0x2000, scoped, tag = 'scratch operand']
  %s0 = inlined_call_operand.vmem [shape: f32[8,2,32], index: 0, kind: input, shape index: {}]
  %s1 = inlined_call_operand.vmem [shape: f32[2,2,32], index: 1, kind: input, shape index: {}]
  %s2 = inlined_call_operand.vmem [shape: f32[2,2,32], index: 2, kind: input, shape index: {}]
  %s3 = inlined_call_operand.vmem [shape: bf16[2,32,128], index: 3, kind: input, shape index: {}]
  %s4 = inlined_call_operand.vmem [shape: bf16[2,32,128], index: 4, kind: input, shape index: {}]
  %s5 = inlined_call_operand.vmem [shape: f32[2,1,128], index: 5, kind: input, shape index: {}]
  %s6 = inlined_call_operand.vmem [shape: f32[8,2,32], index: 6, kind: output, shape index: {0}]
  %s7 = inlined_call_operand.hbm [shape: f32[2,2,32], index: 7, kind: output, shape index: {1}]
  %s8 = inlined_call_operand.hbm [shape: f32[2,2,32], index: 8, kind: output, shape index: {2}]
  %9 = xla_tuple %s6, %s7, %s8
  %s10 = sld [smem:[#allocation0]]
  $region85: #{pointer_generator_forward.3} parent=0
    _
  %s12 = ssub.s32 1, %s10
  %s13 = scalar_select 0, %s12, %s10
  $region1: #{pointer_generator_forward.3} parent=0
    #allocation4 [shape = 'u8[2048]{0}', space=vmem, size = 0x800, scoped, tag = 'output window, operand 1']
    #allocation5 [shape = 's32[2]{0}', space=sflag, size = 0x8, scoped, tag = 'scoped memory for pointer_generator_forward.3']
    #allocation6 [shape = 'u8[2048]{0}', space=vmem, size = 0x800, scoped, tag = 'output window, operand 2']
    #allocation7 [shape = 's32[2]{0}', space=sflag, size = 0x8, scoped, tag = 'scoped memory for pointer_generator_forward.3']
    %14 = vsyncpa [#allocation5], 0
    %s15 = scalar_lea.sflag [#allocation5], 1
    %16 = vsyncpa %s15, 0
    %17 = vsyncpa [#allocation7], 0
    %s18 = scalar_lea.sflag [#allocation7], 1
    %19 = vsyncpa %s18, 0
    loop: start=0, step=1, limit=4
    $region2: #{pointer_generator_forward.3} parent=1 // loop_pre_header
      _
    $region3: #{pointer_generator_forward.3} parent=1 // loop_header
      %s21 = sphi 0, %s25
      %p22 = scmp.ge.s32.totalorder %s21, 4
      %s28 = sphi 0, %s40
      %s29 = sphi 0, %s36
      %s30 = sphi 0, %s28
      %s31 = sphi 0, %s29
      %s32 = sphi 0, %s30
      %s33 = sphi 0, %s31
      %s43 = sphi 0, %s45
      %s46 = sphi 0, %s43
      %s47 = sphi 0, %s46
      %s63 = sphi 0, %s47
      %s71 = sphi 0, %s73
      %s74 = sphi 0, %s71
      %s75 = sphi 0, %s74
      %s91 = sphi 0, %s75
      %s99 = sphi 0, %s101
      %s102 = sphi 0, %s99
      %s103 = sphi 0, %s102
      %s119 = sphi 0, %s103
      %s125 = sphi 0, %s127
      %s128 = sphi 0, %s125
      %s129 = sphi 0, %s128
      %s145 = sphi 0, %s129
      %s151 = sphi 0, %s153
      %s154 = sphi 0, %s151
      %s155 = sphi 0, %s154
      %s171 = sphi 0, %s155
      %s177 = sphi 0, %s179
      %s180 = sphi 0, %s177
      %s181 = sphi 0, %s180
      %s197 = sphi 0, %s181
      %s203 = sphi 0, %s205
      %s206 = sphi 0, %s203
      %s207 = sphi 0, %s206
      %s223 = sphi 0, %s207
      %s231 = sphi 0, %s233
      %s234 = sphi 0, %s231
      %s235 = sphi 0, %s234
      %s251 = sphi 0, %s235
      %s259 = sphi 0, %s261
      %s262 = sphi 0, %s259
      %s263 = sphi 0, %s262
      %s279 = sphi 0, %s263
    $region4: #{pointer_generator_forward.3} parent=1 // loop_header_branch
      %24 = sbr.rel (%p22) target = $region8
    $region5: #{pointer_generator_forward.3} parent=1 // loop_body
      %s26 = ssub.s32 %s21, 1
      %s27 = ssub.s32 %s21, 2
      %s34 = sadd.s32 1, %s29
      %p35 = scmp.ge.s32.totalorder %s34, 2
      %s36 = scalar_select %p35, 0, %s34
      %s37 = sadd.s32 1, %s28
      %s38 = scalar_select %p35, %s37, %s28
      %p39 = scmp.ge.s32.totalorder %s38, 1
      %s40 = scalar_select %p39, 0, %s38
      %s41 = ssub.s32 %s28, %s40
      %p42 = scmp.eq.s32.totalorder %s41, 0
      %s44 = sadd.s32 %s43, 1
      %s45 = scalar_select %p42, %s43, %s44
      %p48 = pneg %p42
      %p49 = scmp.eq.s32.totalorder %s21, 1
      %p50 = por %p48, %p49
      %p51 = scmp.ne.s32.totalorder %s43, %s46
      %p52 = scmp.eq.s32.totalorder %s21, 0
      %p53 = por %p51, %p52
      %p54 = scmp.ne.s32.totalorder %s43, %s46
      %p55 = scmp.eq.s32.totalorder %s26, 1
      %p56 = por %p54, %p55
      %p57 = scmp.ne.s32.totalorder %s46, %s47
      %p58 = scmp.eq.s32.totalorder %s26, 0
      %p59 = por %p57, %p58
      %p60 = scmp.ne.s32.totalorder %s46, %s47
      %p61 = scmp.eq.s32.totalorder %s27, 1
      %p62 = por %p60, %p61
      %p64 = scmp.ne.s32.totalorder %s47, %s63
      %p65 = scmp.eq.s32.totalorder %s27, 0
      %p66 = por %p64, %p65
      %s67 = ssub.s32 %s29, %s36
      %s68 = ssub.s32 %s28, %s40
      %s69 = sor.u32 %s67, %s68
      %p70 = scmp.eq.s32.totalorder %s69, 0
      %s72 = sadd.s32 %s71, 1
      %s73 = scalar_select %p70, %s71, %s72
      %p76 = pneg %p70
      %p77 = scmp.eq.s32.totalorder %s21, 1
      %p78 = por %p76, %p77
      %p79 = scmp.ne.s32.totalorder %s71, %s74
      %p80 = scmp.eq.s32.totalorder %s21, 0
      %p81 = por %p79, %p80
      %p82 = scmp.ne.s32.totalorder %s71, %s74
      %p83 = scmp.eq.s32.totalorder %s26, 1
      %p84 = por %p82, %p83
      %p85 = scmp.ne.s32.totalorder %s74, %s75
      %p86 = scmp.eq.s32.totalorder %s26, 0
      %p87 = por %p85, %p86
      %p88 = scmp.ne.s32.totalorder %s74, %s75
      %p89 = scmp.eq.s32.totalorder %s27, 1
      %p90 = por %p88, %p89
      %p92 = scmp.ne.s32.totalorder %s75, %s91
      %p93 = scmp.eq.s32.totalorder %s27, 0
      %p94 = por %p92, %p93
      %s95 = ssub.s32 %s29, %s36
      %s96 = ssub.s32 %s28, %s40
      %s97 = sor.u32 %s95, %s96
      %p98 = scmp.eq.s32.totalorder %s97, 0
      %s100 = sadd.s32 %s99, 1
      %s101 = scalar_select %p98, %s99, %s100
      %p104 = pneg %p98
      %p105 = scmp.eq.s32.totalorder %s21, 1
      %p106 = por %p104, %p105
      %p107 = scmp.ne.s32.totalorder %s99, %s102
      %p108 = scmp.eq.s32.totalorder %s21, 0
      %p109 = por %p107, %p108
      %p110 = scmp.ne.s32.totalorder %s99, %s102
      %p111 = scmp.eq.s32.totalorder %s26, 1
      %p112 = por %p110, %p111
      %p113 = scmp.ne.s32.totalorder %s102, %s103
      %p114 = scmp.eq.s32.totalorder %s26, 0
      %p115 = por %p113, %p114
      %p116 = scmp.ne.s32.totalorder %s102, %s103
      %p117 = scmp.eq.s32.totalorder %s27, 1
      %p118 = por %p116, %p117
      %p120 = scmp.ne.s32.totalorder %s103, %s119
      %p121 = scmp.eq.s32.totalorder %s27, 0
      %p122 = por %p120, %p121
      %s123 = ssub.s32 %s29, %s36
      %p124 = scmp.eq.s32.totalorder %s123, 0
      %s126 = sadd.s32 %s125, 1
      %s127 = scalar_select %p124, %s125, %s126
      %p130 = pneg %p124
      %p131 = scmp.eq.s32.totalorder %s21, 1
      %p132 = por %p130, %p131
      %p133 = scmp.ne.s32.totalorder %s125, %s128
      %p134 = scmp.eq.s32.totalorder %s21, 0
      %p135 = por %p133, %p134
      %p136 = scmp.ne.s32.totalorder %s125, %s128
      %p137 = scmp.eq.s32.totalorder %s26, 1
      %p138 = por %p136, %p137
      %p139 = scmp.ne.s32.totalorder %s128, %s129
      %p140 = scmp.eq.s32.totalorder %s26, 0
      %p141 = por %p139, %p140
      %p142 = scmp.ne.s32.totalorder %s128, %s129
      %p143 = scmp.eq.s32.totalorder %s27, 1
      %p144 = por %p142, %p143
      %p146 = scmp.ne.s32.totalorder %s129, %s145
      %p147 = scmp.eq.s32.totalorder %s27, 0
      %p148 = por %p146, %p147
      %s149 = ssub.s32 %s29, %s36
      %p150 = scmp.eq.s32.totalorder %s149, 0
      %s152 = sadd.s32 %s151, 1
      %s153 = scalar_select %p150, %s151, %s152
      %p156 = pneg %p150
      %p157 = scmp.eq.s32.totalorder %s21, 1
      %p158 = por %p156, %p157
      %p159 = scmp.ne.s32.totalorder %s151, %s154
      %p160 = scmp.eq.s32.totalorder %s21, 0
      %p161 = por %p159, %p160
      %p162 = scmp.ne.s32.totalorder %s151, %s154
      %p163 = scmp.eq.s32.totalorder %s26, 1
      %p164 = por %p162, %p163
      %p165 = scmp.ne.s32.totalorder %s154, %s155
      %p166 = scmp.eq.s32.totalorder %s26, 0
      %p167 = por %p165, %p166
      %p168 = scmp.ne.s32.totalorder %s154, %s155
      %p169 = scmp.eq.s32.totalorder %s27, 1
      %p170 = por %p168, %p169
      %p172 = scmp.ne.s32.totalorder %s155, %s171
      %p173 = scmp.eq.s32.totalorder %s27, 0
      %p174 = por %p172, %p173
      %s175 = ssub.s32 %s29, %s36
      %p176 = scmp.eq.s32.totalorder %s175, 0
      %s178 = sadd.s32 %s177, 1
      %s179 = scalar_select %p176, %s177, %s178
      %p182 = pneg %p176
      %p183 = scmp.eq.s32.totalorder %s21, 1
      %p184 = por %p182, %p183
      %p185 = scmp.ne.s32.totalorder %s177, %s180
      %p186 = scmp.eq.s32.totalorder %s21, 0
      %p187 = por %p185, %p186
      %p188 = scmp.ne.s32.totalorder %s177, %s180
      %p189 = scmp.eq.s32.totalorder %s26, 1
      %p190 = por %p188, %p189
      %p191 = scmp.ne.s32.totalorder %s180, %s181
      %p192 = scmp.eq.s32.totalorder %s26, 0
      %p193 = por %p191, %p192
      %p194 = scmp.ne.s32.totalorder %s180, %s181
      %p195 = scmp.eq.s32.totalorder %s27, 1
      %p196 = por %p194, %p195
      %p198 = scmp.ne.s32.totalorder %s181, %s197
      %p199 = scmp.eq.s32.totalorder %s27, 0
      %p200 = por %p198, %p199
      %s201 = ssub.s32 %s28, %s40
      %p202 = scmp.eq.s32.totalorder %s201, 0
      %s204 = sadd.s32 %s203, 1
      %s205 = scalar_select %p202, %s203, %s204
      %p208 = pneg %p202
      %p209 = scmp.eq.s32.totalorder %s21, 1
      %p210 = por %p208, %p209
      %p211 = scmp.ne.s32.totalorder %s203, %s206
      %p212 = scmp.eq.s32.totalorder %s21, 0
      %p213 = por %p211, %p212
      %p214 = scmp.ne.s32.totalorder %s203, %s206
      %p215 = scmp.eq.s32.totalorder %s26, 1
      %p216 = por %p214, %p215
      %p217 = scmp.ne.s32.totalorder %s206, %s207
      %p218 = scmp.eq.s32.totalorder %s26, 0
      %p219 = por %p217, %p218
      %p220 = scmp.ne.s32.totalorder %s206, %s207
      %p221 = scmp.eq.s32.totalorder %s27, 1
      %p222 = por %p220, %p221
      %p224 = scmp.ne.s32.totalorder %s207, %s223
      %p225 = scmp.eq.s32.totalorder %s27, 0
      %p226 = por %p224, %p225
      %s227 = ssub.s32 %s29, %s36
      %s228 = ssub.s32 %s28, %s40
      %s229 = sor.u32 %s227, %s228
      %p230 = scmp.eq.s32.totalorder %s229, 0
      %s232 = sadd.s32 %s231, 1
      %s233 = scalar_select %p230, %s231, %s232
      %p236 = pneg %p230
      %p237 = scmp.eq.s32.totalorder %s21, 1
      %p238 = por %p236, %p237
      %p239 = scmp.ne.s32.totalorder %s231, %s234
      %p240 = scmp.eq.s32.totalorder %s21, 0
      %p241 = por %p239, %p240
      %p242 = scmp.ne.s32.totalorder %s231, %s234
      %p243 = scmp.eq.s32.totalorder %s26, 1
      %p244 = por %p242, %p243
      %p245 = scmp.ne.s32.totalorder %s234, %s235
      %p246 = scmp.eq.s32.totalorder %s26, 0
      %p247 = por %p245, %p246
      %p248 = scmp.ne.s32.totalorder %s234, %s235
      %p249 = scmp.eq.s32.totalorder %s27, 1
      %p250 = por %p248, %p249
      %p252 = scmp.ne.s32.totalorder %s235, %s251
      %p253 = scmp.eq.s32.totalorder %s27, 0
      %p254 = por %p252, %p253
      %s255 = ssub.s32 %s29, %s36
      %s256 = ssub.s32 %s28, %s40
      %s257 = sor.u32 %s255, %s256
      %p258 = scmp.eq.s32.totalorder %s257, 0
      %s260 = sadd.s32 %s259, 1
      %s261 = scalar_select %p258, %s259, %s260
      %p264 = pneg %p258
      %p265 = scmp.eq.s32.totalorder %s21, 1
      %p266 = por %p264, %p265
      %p267 = scmp.ne.s32.totalorder %s259, %s262
      %p268 = scmp.eq.s32.totalorder %s21, 0
      %p269 = por %p267, %p268
      %p270 = scmp.ne.s32.totalorder %s259, %s262
      %p271 = scmp.eq.s32.totalorder %s26, 1
      %p272 = por %p270, %p271
      %p273 = scmp.ne.s32.totalorder %s262, %s263
      %p274 = scmp.eq.s32.totalorder %s26, 0
      %p275 = por %p273, %p274
      %p276 = scmp.ne.s32.totalorder %s262, %s263
      %p277 = scmp.eq.s32.totalorder %s27, 1
      %p278 = por %p276, %p277
      %p280 = scmp.ne.s32.totalorder %s263, %s279
      %p281 = scmp.eq.s32.totalorder %s27, 0
      %p282 = por %p280, %p281
      %p283 = scmp.le.s32.totalorder 1, %s21
      %p284 = scmp.lt.s32.totalorder %s21, 3
      %p285 = pnand %p283, %p284
      %p286 = pneg %p285
      // Predicated region
      $region9: #{pointer_generator_forward.3} parent=5 // pred_check
        _
      $region10: #{pointer_generator_forward.3} parent=5 // pred_check_branch
        %288 = sbr.rel (%p285) target = $region12
      $region11: #{pointer_generator_forward.3} parent=5 // pred_region
        %s289 = ssub.s32 %s21, 1
        // Predicated region
        $region13: #{pointer_generator_forward.3} parent=11 // pred_check
          %p290 = pneg %p59
        $region14: #{pointer_generator_forward.3} parent=11 // pred_check_branch
          %292 = sbr.rel (%p290) target = $region16
        $region15: #{pointer_generator_forward.3} parent=11 // pred_region
          %p293 = scmp.lt.s32.totalorder %s30, 0
          %s294 = scalar_select %p293, %s30, 0
          %s295 = smul.addr %s294, 2
          %s296 = scalar_lea.vmem %s0, %s295
        $region16: #{pointer_generator_forward.3} parent=11 // pred_fallthru
          _
      $region12: #{pointer_generator_forward.3} parent=5 // pred_fallthru
        _
      %p297 = scmp.lt.s32.totalorder %s21, 2
      // Predicated region
      $region17: #{pointer_generator_forward.3} parent=5 // pred_check
        %p298 = pneg %p297
      $region18: #{pointer_generator_forward.3} parent=5 // pred_check_branch
        %300 = sbr.rel (%p298) target = $region20
      $region19: #{pointer_generator_forward.3} parent=5 // pred_region
        // Predicated region
        $region21: #{pointer_generator_forward.3} parent=19 // pred_check
          %p301 = pneg %p81
        $region22: #{pointer_generator_forward.3} parent=19 // pred_check_branch
          %303 = sbr.rel (%p301) target = $region24
        $region23: #{pointer_generator_forward.3} parent=19 // pred_region
          %p304 = scmp.lt.s32.totalorder %s29, 1
          %s305 = scalar_select %p304, %s29, 1
          %p306 = scmp.lt.s32.totalorder %s28, 0
          %s307 = scalar_select %p306, %s28, 0
          %s308 = sadd.s32 %s307, %s305
          %s309 = smul.addr %s308, 2
          %s310 = scalar_lea.vmem %s1, %s309
        $region24: #{pointer_generator_forward.3} parent=19 // pred_fallthru
          _
        // Predicated region
        $region25: #{pointer_generator_forward.3} parent=19 // pred_check
          %p311 = pneg %p109
        $region26: #{pointer_generator_forward.3} parent=19 // pred_check_branch
          %313 = sbr.rel (%p311) target = $region28
        $region27: #{pointer_generator_forward.3} parent=19 // pred_region
          %p314 = scmp.lt.s32.totalorder %s29, 1
          %s315 = scalar_select %p314, %s29, 1
          %p316 = scmp.lt.s32.totalorder %s28, 0
          %s317 = scalar_select %p316, %s28, 0
          %s318 = sadd.s32 %s317, %s315
          %s319 = smul.addr %s318, 2
          %s320 = scalar_lea.vmem %s2, %s319
        $region28: #{pointer_generator_forward.3} parent=19 // pred_fallthru
          _
        // Predicated region
        $region29: #{pointer_generator_forward.3} parent=19 // pred_check
          %p321 = pneg %p135
        $region30: #{pointer_generator_forward.3} parent=19 // pred_check_branch
          %323 = sbr.rel (%p321) target = $region32
        $region31: #{pointer_generator_forward.3} parent=19 // pred_region
          %p324 = scmp.lt.s32.totalorder %s29, 1
          %s325 = scalar_select %p324, %s29, 1
          %s326 = smul.addr %s325, 4
          %s327 = smul.addr %s326, 4
          %s328 = scalar_lea.vmem %s3, %s327
        $region32: #{pointer_generator_forward.3} parent=19 // pred_fallthru
          _
        // Predicated region
        $region33: #{pointer_generator_forward.3} parent=19 // pred_check
          %p329 = pneg %p161
        $region34: #{pointer_generator_forward.3} parent=19 // pred_check_branch
          %331 = sbr.rel (%p329) target = $region36
        $region35: #{pointer_generator_forward.3} parent=19 // pred_region
          %p332 = scmp.lt.s32.totalorder %s29, 1
          %s333 = scalar_select %p332, %s29, 1
          %s334 = smul.addr %s333, 4
          %s335 = smul.addr %s334, 4
          %s336 = scalar_lea.vmem %s4, %s335
        $region36: #{pointer_generator_forward.3} parent=19 // pred_fallthru
          _
        // Predicated region
        $region37: #{pointer_generator_forward.3} parent=19 // pred_check
          %p337 = pneg %p187
        $region38: #{pointer_generator_forward.3} parent=19 // pred_check_branch
          %339 = sbr.rel (%p337) target = $region40
        $region39: #{pointer_generator_forward.3} parent=19 // pred_region
          %p340 = scmp.lt.s32.totalorder %s29, 1
          %s341 = scalar_select %p340, %s29, 1
          %s342 = scalar_lea.vmem %s5, %s341
        $region40: #{pointer_generator_forward.3} parent=19 // pred_fallthru
          _
      $region20: #{pointer_generator_forward.3} parent=5 // pred_fallthru
        _
      %p343 = scmp.le.s32.totalorder 1, %s21
      %p344 = scmp.lt.s32.totalorder %s21, 3
      %p345 = pnand %p343, %p344
      %p346 = pneg %p345
      // Predicated region
      $region41: #{pointer_generator_forward.3} parent=5 // pred_check
        _
      $region42: #{pointer_generator_forward.3} parent=5 // pred_check_branch
        %348 = sbr.rel (%p345) target = $region44
      $region43: #{pointer_generator_forward.3} parent=5 // pred_region
        %s349 = ssub.s32 %s21, 1
        %p350 = scmp.lt.s32.totalorder %s30, 0
        %s351 = scalar_select %p350, %s30, 0
        %s352 = smul.addr %s351, 2
        %s353 = scalar_lea.vmem %s0, %s352
        %p354 = pneg %p59
        %p355 = pneg %p56
        %p356 = scmp.lt.s32.totalorder %s31, 1
        %s357 = scalar_select %p356, %s31, 1
        %p358 = scmp.lt.s32.totalorder %s30, 0
        %s359 = scalar_select %p358, %s30, 0
        %s360 = sadd.s32 %s359, %s357
        %s361 = smul.addr %s360, 2
        %s362 = scalar_lea.vmem %s1, %s361
        %p363 = pneg %p87
        %p364 = pneg %p84
        %p365 = scmp.lt.s32.totalorder %s31, 1
        %s366 = scalar_select %p365, %s31, 1
        %p367 = scmp.lt.s32.totalorder %s30, 0
        %s368 = scalar_select %p367, %s30, 0
        %s369 = sadd.s32 %s368, %s366
        %s370 = smul.addr %s369, 2
        %s371 = scalar_lea.vmem %s2, %s370
        %p372 = pneg %p115
        %p373 = pneg %p112
        %p374 = scmp.lt.s32.totalorder %s31, 1
        %s375 = scalar_select %p374, %s31, 1
        %s376 = smul.addr %s375, 4
        %s377 = smul.addr %s376, 4
        %s378 = scalar_lea.vmem %s3, %s377
        %p379 = pneg %p141
        %p380 = pneg %p138
        %p381 = scmp.lt.s32.totalorder %s31, 1
        %s382 = scalar_select %p381, %s31, 1
        %s383 = smul.addr %s382, 4
        %s384 = smul.addr %s383, 4
        %s385 = scalar_lea.vmem %s4, %s384
        %p386 = pneg %p167
        %p387 = pneg %p164
        %p388 = scmp.lt.s32.totalorder %s31, 1
        %s389 = scalar_select %p388, %s31, 1
        %s390 = scalar_lea.vmem %s5, %s389
        %p391 = pneg %p193
        %p392 = pneg %p190
        %p393 = pneg %p219
        %p394 = pneg %p216
        %p395 = scmp.lt.s32.totalorder %s30, 0
        %s396 = scalar_select %p395, %s30, 0
        %s397 = smul.addr %s396, 2
        %s398 = scalar_lea.vmem %s6, %s397
        %p399 = pneg %p247
        %p400 = pneg %p244
        %s401 = sand.u32 %s234, 1
        %s402 = scalar_lea.sflag [#allocation5], %s401
        %s403 = sand.u32 %s234, 1
        %s404 = smul.addr %s403, 2
        %s405 = scalar_lea.vmem [#allocation4], %s404
        %p406 = pneg %p275
        %p407 = pneg %p272
        %s408 = sand.u32 %s262, 1
        %s409 = scalar_lea.sflag [#allocation7], %s408
        %s410 = sand.u32 %s262, 1
        %s411 = smul.addr %s410, 2
        %s412 = scalar_lea.vmem [#allocation6], %s411
        %p413 = scmp.lt.s32.totalorder %s30, 0
        %s414 = scalar_select %p413, %s30, 0
        %s415 = smul.addr %s414, 2
        %s416 = scalar_lea.vmem %s0, %s415
        %p417 = scmp.lt.s32.totalorder %s31, 1
        %s418 = scalar_select %p417, %s31, 1
        %p419 = scmp.lt.s32.totalorder %s30, 0
        %s420 = scalar_select %p419, %s30, 0
        %s421 = sadd.s32 %s420, %s418
        %s422 = smul.addr %s421, 2
        %s423 = scalar_lea.vmem %s1, %s422
        %p424 = scmp.lt.s32.totalorder %s31, 1
        %s425 = scalar_select %p424, %s31, 1
        %p426 = scmp.lt.s32.totalorder %s30, 0
        %s427 = scalar_select %p426, %s30, 0
        %s428 = sadd.s32 %s427, %s425
        %s429 = smul.addr %s428, 2
        %s430 = scalar_lea.vmem %s2, %s429
        %p431 = scmp.lt.s32.totalorder %s31, 1
        %s432 = scalar_select %p431, %s31, 1
        %s433 = smul.addr %s432, 4
        %s434 = smul.addr %s433, 4
        %s435 = scalar_lea.vmem %s3, %s434
        %p436 = scmp.lt.s32.totalorder %s31, 1
        %s437 = scalar_select %p436, %s31, 1
        %s438 = smul.addr %s437, 4
        %s439 = smul.addr %s438, 4
        %s440 = scalar_lea.vmem %s4, %s439
        %p441 = scmp.lt.s32.totalorder %s31, 1
        %s442 = scalar_select %p441, %s31, 1
        %s443 = scalar_lea.vmem %s5, %s442
        %p444 = scmp.lt.s32.totalorder %s30, 0
        %s445 = scalar_select %p444, %s30, 0
        %s446 = smul.addr %s445, 2
        %s447 = scalar_lea.vmem %s6, %s446
        %v449 = vld [vmem:[%s423] sm:$0x3]
        %v450 = vld [vmem:[%s430] sm:$0x3]
        %p451 = scmp.eq.s32.totalorder %s31, 0
        // Predicated region
        $region45: #{pointer_generator_forward.3} parent=43 // pred_check
          %p452 = pneg %p451
        $region46: #{pointer_generator_forward.3} parent=43 // pred_check_branch
          %454 = sbr.rel (%p452) target = $region48
        $region47: #{pointer_generator_forward.3} parent=43 // pred_region
          %v455 = vld [vmem:[%s416] sm:$0x3]
          %v456 = vld [vmem:[%s416 + $0x2] sm:$0x3]
          %v457 = vld [vmem:[%s416 + $0x4] sm:$0x3]
          %v458 = vld [vmem:[%s416 + $0x6] sm:$0x3]
          %v459 = vld [vmem:[%s416 + $0x8] sm:$0x3]
          %v460 = vld [vmem:[%s416 + $0xa] sm:$0x3]
          %v461 = vld [vmem:[%s416 + $0xc] sm:$0x3]
          %v462 = vld [vmem:[%s416 + $0xe] sm:$0x3]
          %v471 = vcombine.low %v455, %v456
          %v472 = vcombine.low %v457, %v458
          %v474 = vunpack.c.l.s4 1983009808
          %v475 = vunpack.c.0.s8 %v474
          %v476 = vlaneseq
          %v477 = vshrl.u32 %v476, 7
          %v478 = vsub.s32 %v475, %v477
          %v479 = vrot.slane %v471, %v478
          %v481 = vunpack.c.l.s4 1983009808
          %v482 = vunpack.c.0.s8 %v481
          %v483 = vlaneseq
          %v484 = vshrl.u32 %v483, 7
          %v485 = vsub.s32 %v482, %v484
          %v486 = vrot.slane %v472, %v485
          %v487 = vcombine.low %v479, %v486
          %v488 = vcombine.low %v459, %v460
          %v489 = vcombine.low %v461, %v462
          %v491 = vunpack.c.l.s4 1983009808
          %v492 = vunpack.c.0.s8 %v491
          %v493 = vlaneseq
          %v494 = vshrl.u32 %v493, 7
          %v495 = vsub.s32 %v492, %v494
          %v496 = vrot.slane %v488, %v495
          %v498 = vunpack.c.l.s4 1983009808
          %v499 = vunpack.c.0.s8 %v498
          %v500 = vlaneseq
          %v501 = vshrl.u32 %v500, 7
          %v502 = vsub.s32 %v499, %v501
          %v503 = vrot.slane %v489, %v502
          %v504 = vcombine.low %v496, %v503
          %v507 = vpack.c.bf16 %v504, %v487
          %v508 = vld [vmem:[%s435] sm:$0xf]
          %v509 = vld [vmem:[%s435 + $0x4] sm:$0xf]
          %v510 = vld [vmem:[%s435 + $0x8] sm:$0xf]
          %v511 = vld [vmem:[%s435 + $0xc] sm:$0xf]
          %v516 = vunpack.c.l.b16 %v508
          %v517 = vunpack.c.l.b16 %v509
          %v518 = vunpack.c.l.b16 %v510
          %v519 = vunpack.c.l.b16 %v511
          %v520 = vpack.c.b16 %v517, %v516
          %v521 = vpack.c.b16 %v519, %v518
          %vm524 = vcmask 261120
          %v526 = vsel %vm524, %v507, 0
          %528 = vmatprep.subr.bf16.mxu0 0
          %529 = vmatpush1.bf16.msra.mxu0 0
          %530 = vmatprep.subr.bf16.mxu0 0
          %531 = vmatpush1.bf16.msra.mxu0 0
          %532 = vmatprep.subr.bf16.mxu0 0
          %533 = vmatpush1.bf16.msra.mxu0 0
          %534 = vmatprep.subr.bf16.mxu0 0
          %535 = vmatpush1.bf16.msra.mxu0 0
          %536 = vmatprep.subr.bf16.mxu0 0
          %537 = vmatpush1.bf16.msra.mxu0 0
          %538 = vmatprep.subr.bf16.mxu0 0
          %539 = vmatpush1.bf16.msra.mxu0 0
          %540 = vmatprep.subr.bf16.mxu0 0
          %541 = vmatpush1.bf16.msra.mxu0 %v521
          %542 = vmatprep.subr.bf16.mxu0 0
          %543 = vmatpush1.bf16.msra.mxu0 %v520
          %544 = vmatprep.subr.bf16.mxu0 0
          %545 = vmatpush2.bf16.msra.mxu0 0
          %546 = vmatprep.subr.bf16.mxu0 0
          %547 = vmatpush2.bf16.msra.mxu0 0
          %548 = vmatprep.subr.bf16.mxu0 0
          %549 = vmatpush2.bf16.msra.mxu0 0
          %550 = vmatprep.subr.bf16.mxu0 0
          %551 = vmatpush2.bf16.msra.mxu0 0
          %552 = vmatprep.subr.bf16.mxu0 0
          %553 = vmatpush2.bf16.msra.mxu0 0
          %554 = vmatprep.subr.bf16.mxu0 0
          %555 = vmatpush2.bf16.msra.mxu0 0
          %556 = vmatprep.subr.bf16.mxu0 0
          %557 = vmatpush2.bf16.msra.mxu0 0
          %558 = vmatprep.subr.bf16.mxu0 0
          %559 = vmatpush2.bf16.msra.mxu0 0
          %560 = vmatprep.mubr.bf16.mxu0 0
          %561 = vmatmul.mubr.bf16.gmra.mxu0 %v526
          %v562 = vpop.f32.mrf.mxu0
          %v563 = vadd.f32 0.0, %v562
          %v564 = vpop.f32.mrf.mxu0
          %v565 = vpop.f32.mrf.mxu0
          %v566 = vadd.f32 0.0, %v565
          %v567 = vpop.f32.mrf.mxu0
          %568 = vdwg.mxu0
          %v571 = vcombine.high %v563, %v563
          %v573 = vunpack.c.l.s4 1983009808
          %v574 = vunpack.c.0.s8 %v573
          %v575 = vlaneseq
          %v576 = vshrl.u32 %v575, 7
          %v577 = vsub.s32 %v574, %v576
          %v578 = vrot.slane %v563, %v577
          %v580 = vunpack.c.l.s4 1983009808
          %v581 = vunpack.c.0.s8 %v580
          %v582 = vlaneseq
          %v583 = vshrl.u32 %v582, 7
          %v584 = vsub.s32 %v581, %v583
          %v585 = vrot.slane %v571, %v584
          %v586 = vcombine.high %v578, %v578
          %v587 = vcombine.high %v585, %v585
          %v588 = vcombine.high %v566, %v566
          %v590 = vunpack.c.l.s4 1983009808
          %v591 = vunpack.c.0.s8 %v590
          %v592 = vlaneseq
          %v593 = vshrl.u32 %v592, 7
          %v594 = vsub.s32 %v591, %v593
          %v595 = vrot.slane %v566, %v594
          %v597 = vunpack.c.l.s4 1983009808
          %v598 = vunpack.c.0.s8 %v597
          %v599 = vlaneseq
          %v600 = vshrl.u32 %v599, 7
          %v601 = vsub.s32 %v598, %v600
          %v602 = vrot.slane %v588, %v601
          %v603 = vcombine.high %v595, %v595
          %v604 = vcombine.high %v602, %v602
          %v613 = vld [vmem:[%s443] sm:$0x1]
          %v615 = vlaneseq
          %v616 = vshrl.u32 %v615, 7
          %v617 = vsub.s32 0, %v616
          %v618 = vrot.slane %v613, %v617
          %v620 = vadd.f32 %v578, %v618
          %v621 = vadd.f32 %v586, %v618
          %v622 = vadd.f32 %v585, %v618
          %v623 = vadd.f32 %v587, %v618
          %v624 = vadd.f32 %v595, %v618
          %v625 = vadd.f32 %v603, %v618
          %v626 = vadd.f32 %v602, %v618
          %v627 = vadd.f32 %v604, %v618
          %628 = vst [vmem:[#allocation3] sm:$0x3] %v620
          %629 = vst [vmem:[#allocation3 + $0x2] sm:$0x3] %v621
          %630 = vst [vmem:[#allocation3 + $0x4] sm:$0x3] %v622
          %631 = vst [vmem:[#allocation3 + $0x6] sm:$0x3] %v623
          %632 = vst [vmem:[#allocation3 + $0x8] sm:$0x3] %v624
          %633 = vst [vmem:[#allocation3 + $0xa] sm:$0x3] %v625
          %634 = vst [vmem:[#allocation3 + $0xc] sm:$0x3] %v626
          %635 = vst [vmem:[#allocation3 + $0xe] sm:$0x3] %v627
        $region48: #{pointer_generator_forward.3} parent=43 // pred_fallthru
          _
        %p636 = scmp.ne.s32.totalorder %s31, 0
        // Predicated region
        $region49: #{pointer_generator_forward.3} parent=43 // pred_check
          %p637 = pneg %p636
        $region50: #{pointer_generator_forward.3} parent=43 // pred_check_branch
          %639 = sbr.rel (%p637) target = $region52
        $region51: #{pointer_generator_forward.3} parent=43 // pred_region
          %v640 = vld [vmem:[#allocation2] sm:$0x3]
          %v641 = vld [vmem:[#allocation2 + $0x2] sm:$0x3]
          %v642 = vld [vmem:[#allocation2 + $0x4] sm:$0x3]
          %v643 = vld [vmem:[#allocation2 + $0x6] sm:$0x3]
          %v644 = vld [vmem:[#allocation2 + $0x8] sm:$0x3]
          %v645 = vld [vmem:[#allocation2 + $0xa] sm:$0x3]
          %v646 = vld [vmem:[#allocation2 + $0xc] sm:$0x3]
          %v647 = vld [vmem:[#allocation2 + $0xe] sm:$0x3]
          %v656 = vcombine.low %v640, %v641
          %v657 = vcombine.low %v642, %v643
          %v659 = vunpack.c.l.s4 1983009808
          %v660 = vunpack.c.0.s8 %v659
          %v661 = vlaneseq
          %v662 = vshrl.u32 %v661, 7
          %v663 = vsub.s32 %v660, %v662
          %v664 = vrot.slane %v656, %v663
          %v666 = vunpack.c.l.s4 1983009808
          %v667 = vunpack.c.0.s8 %v666
          %v668 = vlaneseq
          %v669 = vshrl.u32 %v668, 7
          %v670 = vsub.s32 %v667, %v669
          %v671 = vrot.slane %v657, %v670
          %v672 = vcombine.low %v664, %v671
          %v673 = vcombine.low %v644, %v645
          %v674 = vcombine.low %v646, %v647
          %v676 = vunpack.c.l.s4 1983009808
          %v677 = vunpack.c.0.s8 %v676
          %v678 = vlaneseq
          %v679 = vshrl.u32 %v678, 7
          %v680 = vsub.s32 %v677, %v679
          %v681 = vrot.slane %v673, %v680
          %v683 = vunpack.c.l.s4 1983009808
          %v684 = vunpack.c.0.s8 %v683
          %v685 = vlaneseq
          %v686 = vshrl.u32 %v685, 7
          %v687 = vsub.s32 %v684, %v686
          %v688 = vrot.slane %v674, %v687
          %v689 = vcombine.low %v681, %v688
          %v692 = vpack.c.bf16 %v689, %v672
          %v693 = vld [vmem:[%s435] sm:$0xf]
          %v694 = vld [vmem:[%s435 + $0x4] sm:$0xf]
          %v695 = vld [vmem:[%s435 + $0x8] sm:$0xf]
          %v696 = vld [vmem:[%s435 + $0xc] sm:$0xf]
          %v701 = vunpack.c.l.b16 %v693
          %v702 = vunpack.c.l.b16 %v694
          %v703 = vunpack.c.l.b16 %v695
          %v704 = vunpack.c.l.b16 %v696
          %v705 = vpack.c.b16 %v702, %v701
          %v706 = vpack.c.b16 %v704, %v703
          %vm709 = vcmask 261120
          %v711 = vsel %vm709, %v692, 0
          %713 = vmatprep.subr.bf16.mxu0 0
          %714 = vmatpush1.bf16.msra.mxu0 0
          %715 = vmatprep.subr.bf16.mxu0 0
          %716 = vmatpush1.bf16.msra.mxu0 0
          %717 = vmatprep.subr.bf16.mxu0 0
          %718 = vmatpush1.bf16.msra.mxu0 0
          %719 = vmatprep.subr.bf16.mxu0 0
          %720 = vmatpush1.bf16.msra.mxu0 0
          %721 = vmatprep.subr.bf16.mxu0 0
          %722 = vmatpush1.bf16.msra.mxu0 0
          %723 = vmatprep.subr.bf16.mxu0 0
          %724 = vmatpush1.bf16.msra.mxu0 0
          %725 = vmatprep.subr.bf16.mxu0 0
          %726 = vmatpush1.bf16.msra.mxu0 %v706
          %727 = vmatprep.subr.bf16.mxu0 0
          %728 = vmatpush1.bf16.msra.mxu0 %v705
          %729 = vmatprep.subr.bf16.mxu0 0
          %730 = vmatpush2.bf16.msra.mxu0 0
          %731 = vmatprep.subr.bf16.mxu0 0
          %732 = vmatpush2.bf16.msra.mxu0 0
          %733 = vmatprep.subr.bf16.mxu0 0
          %734 = vmatpush2.bf16.msra.mxu0 0
          %735 = vmatprep.subr.bf16.mxu0 0
          %736 = vmatpush2.bf16.msra.mxu0 0
          %737 = vmatprep.subr.bf16.mxu0 0
          %738 = vmatpush2.bf16.msra.mxu0 0
          %739 = vmatprep.subr.bf16.mxu0 0
          %740 = vmatpush2.bf16.msra.mxu0 0
          %741 = vmatprep.subr.bf16.mxu0 0
          %742 = vmatpush2.bf16.msra.mxu0 0
          %743 = vmatprep.subr.bf16.mxu0 0
          %744 = vmatpush2.bf16.msra.mxu0 0
          %745 = vmatprep.mubr.bf16.mxu0 0
          %746 = vmatmul.mubr.bf16.gmra.mxu0 %v711
          %v747 = vpop.f32.mrf.mxu0
          %v748 = vadd.f32 0.0, %v747
          %v749 = vpop.f32.mrf.mxu0
          %v750 = vpop.f32.mrf.mxu0
          %v751 = vadd.f32 0.0, %v750
          %v752 = vpop.f32.mrf.mxu0
          %753 = vdwg.mxu0
          %v756 = vcombine.high %v748, %v748
          %v758 = vunpack.c.l.s4 1983009808
          %v759 = vunpack.c.0.s8 %v758
          %v760 = vlaneseq
          %v761 = vshrl.u32 %v760, 7
          %v762 = vsub.s32 %v759, %v761
          %v763 = vrot.slane %v748, %v762
          %v765 = vunpack.c.l.s4 1983009808
          %v766 = vunpack.c.0.s8 %v765
          %v767 = vlaneseq
          %v768 = vshrl.u32 %v767, 7
          %v769 = vsub.s32 %v766, %v768
          %v770 = vrot.slane %v756, %v769
          %v771 = vcombine.high %v763, %v763
          %v772 = vcombine.high %v770, %v770
          %v773 = vcombine.high %v751, %v751
          %v775 = vunpack.c.l.s4 1983009808
          %v776 = vunpack.c.0.s8 %v775
          %v777 = vlaneseq
          %v778 = vshrl.u32 %v777, 7
          %v779 = vsub.s32 %v776, %v778
          %v780 = vrot.slane %v751, %v779
          %v782 = vunpack.c.l.s4 1983009808
          %v783 = vunpack.c.0.s8 %v782
          %v784 = vlaneseq
          %v785 = vshrl.u32 %v784, 7
          %v786 = vsub.s32 %v783, %v785
          %v787 = vrot.slane %v773, %v786
          %v788 = vcombine.high %v780, %v780
          %v789 = vcombine.high %v787, %v787
          %v798 = vld [vmem:[%s443] sm:$0x1]
          %v800 = vlaneseq
          %v801 = vshrl.u32 %v800, 7
          %v802 = vsub.s32 0, %v801
          %v803 = vrot.slane %v798, %v802
          %v805 = vadd.f32 %v763, %v803
          %v806 = vadd.f32 %v771, %v803
          %v807 = vadd.f32 %v770, %v803
          %v808 = vadd.f32 %v772, %v803
          %v809 = vadd.f32 %v780, %v803
          %v810 = vadd.f32 %v788, %v803
          %v811 = vadd.f32 %v787, %v803
          %v812 = vadd.f32 %v789, %v803
          %813 = vst [vmem:[#allocation3] sm:$0x3] %v805
          %814 = vst [vmem:[#allocation3 + $0x2] sm:$0x3] %v806
          %815 = vst [vmem:[#allocation3 + $0x4] sm:$0x3] %v807
          %816 = vst [vmem:[#allocation3 + $0x6] sm:$0x3] %v808
          %817 = vst [vmem:[#allocation3 + $0x8] sm:$0x3] %v809
          %818 = vst [vmem:[#allocation3 + $0xa] sm:$0x3] %v810
          %819 = vst [vmem:[#allocation3 + $0xc] sm:$0x3] %v811
          %820 = vst [vmem:[#allocation3 + $0xe] sm:$0x3] %v812
        $region52: #{pointer_generator_forward.3} parent=43 // pred_fallthru
          _
        %v821 = vld [vmem:[#allocation3] sm:$0x3]
        %v822 = vpack.c.bf16 %v449, %v449
        %v823 = vld [vmem:[%s440] sm:$0xf]
        %v824 = vld [vmem:[%s440 + $0x4] sm:$0xf]
        %v825 = vld [vmem:[%s440 + $0x8] sm:$0xf]
        %v826 = vld [vmem:[%s440 + $0xc] sm:$0xf]
        %v831 = vunpack.c.l.b16 %v823
        %v832 = vunpack.c.l.b16 %v824
        %v833 = vunpack.c.l.b16 %v825
        %v834 = vunpack.c.l.b16 %v826
        %v835 = vpack.c.b16 %v832, %v831
        %v836 = vpack.c.b16 %v834, %v833
        %vm839 = vcmask 261120
        %v841 = vsel %vm839, %v822, 0
        %843 = vmatprep.subr.bf16.mxu0 0
        %844 = vmatpush1.bf16.msra.mxu0 0
        %845 = vmatprep.subr.bf16.mxu0 0
        %846 = vmatpush1.bf16.msra.mxu0 0
        %847 = vmatprep.subr.bf16.mxu0 0
        %848 = vmatpush1.bf16.msra.mxu0 0
        %849 = vmatprep.subr.bf16.mxu0 0
        %850 = vmatpush1.bf16.msra.mxu0 0
        %851 = vmatprep.subr.bf16.mxu0 0
        %852 = vmatpush1.bf16.msra.mxu0 0
        %853 = vmatprep.subr.bf16.mxu0 0
        %854 = vmatpush1.bf16.msra.mxu0 0
        %855 = vmatprep.subr.bf16.mxu0 0
        %856 = vmatpush1.bf16.msra.mxu0 %v836
        %857 = vmatprep.subr.bf16.mxu0 0
        %858 = vmatpush1.bf16.msra.mxu0 %v835
        %859 = vmatprep.subr.bf16.mxu0 0
        %860 = vmatpush2.bf16.msra.mxu0 0
        %861 = vmatprep.subr.bf16.mxu0 0
        %862 = vmatpush2.bf16.msra.mxu0 0
        %863 = vmatprep.subr.bf16.mxu0 0
        %864 = vmatpush2.bf16.msra.mxu0 0
        %865 = vmatprep.subr.bf16.mxu0 0
        %866 = vmatpush2.bf16.msra.mxu0 0
        %867 = vmatprep.subr.bf16.mxu0 0
        %868 = vmatpush2.bf16.msra.mxu0 0
        %869 = vmatprep.subr.bf16.mxu0 0
        %870 = vmatpush2.bf16.msra.mxu0 0
        %871 = vmatprep.subr.bf16.mxu0 0
        %872 = vmatpush2.bf16.msra.mxu0 0
        %873 = vmatprep.subr.bf16.mxu0 0
        %874 = vmatpush2.bf16.msra.mxu0 0
        %875 = vmatprep.mubr.bf16.mxu0 0
        %876 = vmatmul.mubr.bf16.gmra.mxu0 %v841
        %v877 = vpop.f32.mrf.mxu0
        %v878 = vadd.f32 0.0, %v877
        %v879 = vpop.f32.mrf.mxu0
        %v880 = vpop.f32.mrf.mxu0
        %v881 = vpop.f32.mrf.mxu0
        %882 = vdwg.mxu0
        %v883 = vadd.f32 %v821, %v878
        %v884 = vxor.u32 %v883, 2147483648
        %v885 = vmul.f32 %v884, 1.442695
        %v886 = vpow.pop %v885
        %v887 = vadd.f32 %v886, 1.0
        %v888 = vrcp.pop %v887
        %v889 = vmul.f32 1.0, %v888
        %v890 = vtanh.pop %v883
        %892 = vrot.lane.b32.xlu0 %v450, 32
        %v893 = vpop.permute.xlu0 %892
        %v895 = vmul.f32 %v889, %v893
        %897 = vrot.lane.b32.xlu0 %v890, 64
        %v898 = vpop.permute.xlu0 %897
        %v900 = vmul.f32 %v889, %v898
        %902 = vrot.lane.b32.xlu0 %v900, 32
        %v903 = vpop.permute.xlu0 %902
        %v905 = vadd.f32 %v895, %v903
        %v906 = vtanh.pop %v905
        %908 = vrot.lane.b32.xlu0 %v906, 64
        %v909 = vpop.permute.xlu0 %908
        %v911 = vmul.f32 %v889, %v909
        %913 = vrot.lane.b32.xlu0 %v911, 32
        %v914 = vpop.permute.xlu0 %913
        %vm916 = vcmask 254976
        %917 = vst.msk [vmem:[#allocation2] sm:$0x3] %vm916, %v914
        %s918 = scalar_lea.vmem [#allocation3], 2
        %v919 = vld [vmem:[%s918] sm:$0x3]
        %v920 = vpack.c.bf16 %v911, %v911
        %v921 = vld [vmem:[%s440] sm:$0xf]
        %v922 = vld [vmem:[%s440 + $0x4] sm:$0xf]
        %v923 = vld [vmem:[%s440 + $0x8] sm:$0xf]
        %v924 = vld [vmem:[%s440 + $0xc] sm:$0xf]
        %926 = vrot.lane.b32.xlu0 %v920, 32
        %v927 = vpop.permute.xlu0 %926
        %v932 = vunpack.c.l.b16 %v921
        %v933 = vunpack.c.l.b16 %v922
        %v934 = vunpack.c.l.b16 %v923
        %v935 = vunpack.c.l.b16 %v924
        %v936 = vpack.c.b16 %v933, %v932
        %v937 = vpack.c.b16 %v935, %v934
        %v941 = vsel %vm839, %v927, 0
        %943 = vmatprep.subr.bf16.mxu0 0
        %944 = vmatpush1.bf16.msra.mxu0 0
        %945 = vmatprep.subr.bf16.mxu0 0
        %946 = vmatpush1.bf16.msra.mxu0 0
        %947 = vmatprep.subr.bf16.mxu0 0
        %948 = vmatpush1.bf16.msra.mxu0 0
        %949 = vmatprep.subr.bf16.mxu0 0
        %950 = vmatpush1.bf16.msra.mxu0 0
        %951 = vmatprep.subr.bf16.mxu0 0
        %952 = vmatpush1.bf16.msra.mxu0 0
        %953 = vmatprep.subr.bf16.mxu0 0
        %954 = vmatpush1.bf16.msra.mxu0 0
        %955 = vmatprep.subr.bf16.mxu0 0
        %956 = vmatpush1.bf16.msra.mxu0 %v937
        %957 = vmatprep.subr.bf16.mxu0 0
        %958 = vmatpush1.bf16.msra.mxu0 %v936
        %959 = vmatprep.subr.bf16.mxu0 0
        %960 = vmatpush2.bf16.msra.mxu0 0
        %961 = vmatprep.subr.bf16.mxu0 0
        %962 = vmatpush2.bf16.msra.mxu0 0
        %963 = vmatprep.subr.bf16.mxu0 0
        %964 = vmatpush2.bf16.msra.mxu0 0
        %965 = vmatprep.subr.bf16.mxu0 0
        %966 = vmatpush2.bf16.msra.mxu0 0
        %967 = vmatprep.subr.bf16.mxu0 0
        %968 = vmatpush2.bf16.msra.mxu0 0
        %969 = vmatprep.subr.bf16.mxu0 0
        %970 = vmatpush2.bf16.msra.mxu0 0
        %971 = vmatprep.subr.bf16.mxu0 0
        %972 = vmatpush2.bf16.msra.mxu0 0
        %973 = vmatprep.subr.bf16.mxu0 0
        %974 = vmatpush2.bf16.msra.mxu0 0
        %975 = vmatprep.mubr.bf16.mxu0 0
        %976 = vmatmul.mubr.bf16.gmra.mxu0 %v941
        %v977 = vpop.f32.mrf.mxu0
        %v978 = vadd.f32 0.0, %v977
        %v979 = vpop.f32.mrf.mxu0
        %v980 = vpop.f32.mrf.mxu0
        %v981 = vpop.f32.mrf.mxu0
        %982 = vdwg.mxu0
        %v983 = vadd.f32 %v919, %v978
        %v984 = vxor.u32 %v983, 2147483648
        %v985 = vmul.f32 %v984, 1.442695
        %v986 = vpow.pop %v985
        %v987 = vadd.f32 %v986, 1.0
        %v988 = vrcp.pop %v987
        %v989 = vmul.f32 1.0, %v988
        %v990 = vtanh.pop %v983
        %v991 = vmul.f32 %v989, %v905
        %993 = vrot.lane.b32.xlu0 %v990, 64
        %v994 = vpop.permute.xlu0 %993
        %v996 = vmul.f32 %v989, %v994
        %998 = vrot.lane.b32.xlu0 %v996, 32
        %v999 = vpop.permute.xlu0 %998
        %v1001 = vadd.f32 %v991, %v999
        %v1002 = vtanh.pop %v1001
        %1004 = vrot.lane.b32.xlu0 %v1002, 64
        %v1005 = vpop.permute.xlu0 %1004
        %v1007 = vmul.f32 %v989, %v1005
        %1009 = vrot.lane.b32.xlu0 %v1007, 32
        %v1010 = vpop.permute.xlu0 %1009
        %s1012 = scalar_lea.vmem [#allocation2], 2
        %1013 = vst.msk [vmem:[%s1012] sm:$0x3] %vm916, %v1010
        %s1014 = scalar_lea.vmem [#allocation3], 4
        %v1015 = vld [vmem:[%s1014] sm:$0x3]
        %v1016 = vpack.c.bf16 %v1007, %v1007
        %v1017 = vld [vmem:[%s440] sm:$0xf]
        %v1018 = vld [vmem:[%s440 + $0x4] sm:$0xf]
        %v1019 = vld [vmem:[%s440 + $0x8] sm:$0xf]
        %v1020 = vld [vmem:[%s440 + $0xc] sm:$0xf]
        %1022 = vrot.lane.b32.xlu0 %v1016, 32
        %v1023 = vpop.permute.xlu0 %1022
        %v1028 = vunpack.c.l.b16 %v1017
        %v1029 = vunpack.c.l.b16 %v1018
        %v1030 = vunpack.c.l.b16 %v1019
        %v1031 = vunpack.c.l.b16 %v1020
        %v1032 = vpack.c.b16 %v1029, %v1028
        %v1033 = vpack.c.b16 %v1031, %v1030
        %v1037 = vsel %vm839, %v1023, 0
        %1039 = vmatprep.subr.bf16.mxu0 0
        %1040 = vmatpush1.bf16.msra.mxu0 0
        %1041 = vmatprep.subr.bf16.mxu0 0
        %1042 = vmatpush1.bf16.msra.mxu0 0
        %1043 = vmatprep.subr.bf16.mxu0 0
        %1044 = vmatpush1.bf16.msra.mxu0 0
        %1045 = vmatprep.subr.bf16.mxu0 0
        %1046 = vmatpush1.bf16.msra.mxu0 0
        %1047 = vmatprep.subr.bf16.mxu0 0
        %1048 = vmatpush1.bf16.msra.mxu0 0
        %1049 = vmatprep.subr.bf16.mxu0 0
        %1050 = vmatpush1.bf16.msra.mxu0 0
        %1051 = vmatprep.subr.bf16.mxu0 0
        %1052 = vmatpush1.bf16.msra.mxu0 %v1033
        %1053 = vmatprep.subr.bf16.mxu0 0
        %1054 = vmatpush1.bf16.msra.mxu0 %v1032
        %1055 = vmatprep.subr.bf16.mxu0 0
        %1056 = vmatpush2.bf16.msra.mxu0 0
        %1057 = vmatprep.subr.bf16.mxu0 0
        %1058 = vmatpush2.bf16.msra.mxu0 0
        %1059 = vmatprep.subr.bf16.mxu0 0
        %1060 = vmatpush2.bf16.msra.mxu0 0
        %1061 = vmatprep.subr.bf16.mxu0 0
        %1062 = vmatpush2.bf16.msra.mxu0 0
        %1063 = vmatprep.subr.bf16.mxu0 0
        %1064 = vmatpush2.bf16.msra.mxu0 0
        %1065 = vmatprep.subr.bf16.mxu0 0
        %1066 = vmatpush2.bf16.msra.mxu0 0
        %1067 = vmatprep.subr.bf16.mxu0 0
        %1068 = vmatpush2.bf16.msra.mxu0 0
        %1069 = vmatprep.subr.bf16.mxu0 0
        %1070 = vmatpush2.bf16.msra.mxu0 0
        %1071 = vmatprep.mubr.bf16.mxu0 0
        %1072 = vmatmul.mubr.bf16.gmra.mxu0 %v1037
        %v1073 = vpop.f32.mrf.mxu0
        %v1074 = vadd.f32 0.0, %v1073
        %v1075 = vpop.f32.mrf.mxu0
        %v1076 = vpop.f32.mrf.mxu0
        %v1077 = vpop.f32.mrf.mxu0
        %1078 = vdwg.mxu0
        %v1079 = vadd.f32 %v1015, %v1074
        %v1080 = vxor.u32 %v1079, 2147483648
        %v1081 = vmul.f32 %v1080, 1.442695
        %v1082 = vpow.pop %v1081
        %v1083 = vadd.f32 %v1082, 1.0
        %v1084 = vrcp.pop %v1083
        %v1085 = vmul.f32 1.0, %v1084
        %v1086 = vtanh.pop %v1079
        %v1087 = vmul.f32 %v1085, %v1001
        %1089 = vrot.lane.b32.xlu0 %v1086, 64
        %v1090 = vpop.permute.xlu0 %1089
        %v1092 = vmul.f32 %v1085, %v1090
        %1094 = vrot.lane.b32.xlu0 %v1092, 32
        %v1095 = vpop.permute.xlu0 %1094
        %v1097 = vadd.f32 %v1087, %v1095
        %v1098 = vtanh.pop %v1097
        %1100 = vrot.lane.b32.xlu0 %v1098, 64
        %v1101 = vpop.permute.xlu0 %1100
        %v1103 = vmul.f32 %v1085, %v1101
        %1105 = vrot.lane.b32.xlu0 %v1103, 32
        %v1106 = vpop.permute.xlu0 %1105
        %s1108 = scalar_lea.vmem [#allocation2], 4
        %1109 = vst.msk [vmem:[%s1108] sm:$0x3] %vm916, %v1106
        %s1110 = scalar_lea.vmem [#allocation3], 6
        %v1111 = vld [vmem:[%s1110] sm:$0x3]
        %v1112 = vpack.c.bf16 %v1103, %v1103
        %v1113 = vld [vmem:[%s440] sm:$0xf]
        %v1114 = vld [vmem:[%s440 + $0x4] sm:$0xf]
        %v1115 = vld [vmem:[%s440 + $0x8] sm:$0xf]
        %v1116 = vld [vmem:[%s440 + $0xc] sm:$0xf]
        %1118 = vrot.lane.b32.xlu0 %v1112, 32
        %v1119 = vpop.permute.xlu0 %1118
        %v1124 = vunpack.c.l.b16 %v1113
        %v1125 = vunpack.c.l.b16 %v1114
        %v1126 = vunpack.c.l.b16 %v1115
        %v1127 = vunpack.c.l.b16 %v1116
        %v1128 = vpack.c.b16 %v1125, %v1124
        %v1129 = vpack.c.b16 %v1127, %v1126
        %v1133 = vsel %vm839, %v1119, 0
        %1135 = vmatprep.subr.bf16.mxu0 0
        %1136 = vmatpush1.bf16.msra.mxu0 0
        %1137 = vmatprep.subr.bf16.mxu0 0
        %1138 = vmatpush1.bf16.msra.mxu0 0
        %1139 = vmatprep.subr.bf16.mxu0 0
        %1140 = vmatpush1.bf16.msra.mxu0 0
        %1141 = vmatprep.subr.bf16.mxu0 0
        %1142 = vmatpush1.bf16.msra.mxu0 0
        %1143 = vmatprep.subr.bf16.mxu0 0
        %1144 = vmatpush1.bf16.msra.mxu0 0
        %1145 = vmatprep.subr.bf16.mxu0 0
        %1146 = vmatpush1.bf16.msra.mxu0 0
        %1147 = vmatprep.subr.bf16.mxu0 0
        %1148 = vmatpush1.bf16.msra.mxu0 %v1129
        %1149 = vmatprep.subr.bf16.mxu0 0
        %1150 = vmatpush1.bf16.msra.mxu0 %v1128
        %1151 = vmatprep.subr.bf16.mxu0 0
        %1152 = vmatpush2.bf16.msra.mxu0 0
        %1153 = vmatprep.subr.bf16.mxu0 0
        %1154 = vmatpush2.bf16.msra.mxu0 0
        %1155 = vmatprep.subr.bf16.mxu0 0
        %1156 = vmatpush2.bf16.msra.mxu0 0
        %1157 = vmatprep.subr.bf16.mxu0 0
        %1158 = vmatpush2.bf16.msra.mxu0 0
        %1159 = vmatprep.subr.bf16.mxu0 0
        %1160 = vmatpush2.bf16.msra.mxu0 0
        %1161 = vmatprep.subr.bf16.mxu0 0
        %1162 = vmatpush2.bf16.msra.mxu0 0
        %1163 = vmatprep.subr.bf16.mxu0 0
        %1164 = vmatpush2.bf16.msra.mxu0 0
        %1165 = vmatprep.subr.bf16.mxu0 0
        %1166 = vmatpush2.bf16.msra.mxu0 0
        %1167 = vmatprep.mubr.bf16.mxu0 0
        %1168 = vmatmul.mubr.bf16.gmra.mxu0 %v1133
        %v1169 = vpop.f32.mrf.mxu0
        %v1170 = vadd.f32 0.0, %v1169
        %v1171 = vpop.f32.mrf.mxu0
        %v1172 = vpop.f32.mrf.mxu0
        %v1173 = vpop.f32.mrf.mxu0
        %1174 = vdwg.mxu0
        %v1175 = vadd.f32 %v1111, %v1170
        %v1176 = vxor.u32 %v1175, 2147483648
        %v1177 = vmul.f32 %v1176, 1.442695
        %v1178 = vpow.pop %v1177
        %v1179 = vadd.f32 %v1178, 1.0
        %v1180 = vrcp.pop %v1179
        %v1181 = vmul.f32 1.0, %v1180
        %v1182 = vtanh.pop %v1175
        %v1183 = vmul.f32 %v1181, %v1097
        %1185 = vrot.lane.b32.xlu0 %v1182, 64
        %v1186 = vpop.permute.xlu0 %1185
        %v1188 = vmul.f32 %v1181, %v1186
        %1190 = vrot.lane.b32.xlu0 %v1188, 32
        %v1191 = vpop.permute.xlu0 %1190
        %v1193 = vadd.f32 %v1183, %v1191
        %v1194 = vtanh.pop %v1193
        %1196 = vrot.lane.b32.xlu0 %v1194, 64
        %v1197 = vpop.permute.xlu0 %1196
        %v1199 = vmul.f32 %v1181, %v1197
        %1201 = vrot.lane.b32.xlu0 %v1199, 32
        %v1202 = vpop.permute.xlu0 %1201
        %s1204 = scalar_lea.vmem [#allocation2], 6
        %1205 = vst.msk [vmem:[%s1204] sm:$0x3] %vm916, %v1202
        %s1206 = scalar_lea.vmem [#allocation3], 8
        %v1207 = vld [vmem:[%s1206] sm:$0x3]
        %v1208 = vpack.c.bf16 %v1199, %v1199
        %v1209 = vld [vmem:[%s440] sm:$0xf]
        %v1210 = vld [vmem:[%s440 + $0x4] sm:$0xf]
        %v1211 = vld [vmem:[%s440 + $0x8] sm:$0xf]
        %v1212 = vld [vmem:[%s440 + $0xc] sm:$0xf]
        %1214 = vrot.lane.b32.xlu0 %v1208, 32
        %v1215 = vpop.permute.xlu0 %1214
        %v1220 = vunpack.c.l.b16 %v1209
        %v1221 = vunpack.c.l.b16 %v1210
        %v1222 = vunpack.c.l.b16 %v1211
        %v1223 = vunpack.c.l.b16 %v1212
        %v1224 = vpack.c.b16 %v1221, %v1220
        %v1225 = vpack.c.b16 %v1223, %v1222
        %v1229 = vsel %vm839, %v1215, 0
        %1231 = vmatprep.subr.bf16.mxu0 0
        %1232 = vmatpush1.bf16.msra.mxu0 0
        %1233 = vmatprep.subr.bf16.mxu0 0
        %1234 = vmatpush1.bf16.msra.mxu0 0
        %1235 = vmatprep.subr.bf16.mxu0 0
        %1236 = vmatpush1.bf16.msra.mxu0 0
        %1237 = vmatprep.subr.bf16.mxu0 0
        %1238 = vmatpush1.bf16.msra.mxu0 0
        %1239 = vmatprep.subr.bf16.mxu0 0
        %1240 = vmatpush1.bf16.msra.mxu0 0
        %1241 = vmatprep.subr.bf16.mxu0 0
        %1242 = vmatpush1.bf16.msra.mxu0 0
        %1243 = vmatprep.subr.bf16.mxu0 0
        %1244 = vmatpush1.bf16.msra.mxu0 %v1225
        %1245 = vmatprep.subr.bf16.mxu0 0
        %1246 = vmatpush1.bf16.msra.mxu0 %v1224
        %1247 = vmatprep.subr.bf16.mxu0 0
        %1248 = vmatpush2.bf16.msra.mxu0 0
        %1249 = vmatprep.subr.bf16.mxu0 0
        %1250 = vmatpush2.bf16.msra.mxu0 0
        %1251 = vmatprep.subr.bf16.mxu0 0
        %1252 = vmatpush2.bf16.msra.mxu0 0
        %1253 = vmatprep.subr.bf16.mxu0 0
        %1254 = vmatpush2.bf16.msra.mxu0 0
        %1255 = vmatprep.subr.bf16.mxu0 0
        %1256 = vmatpush2.bf16.msra.mxu0 0
        %1257 = vmatprep.subr.bf16.mxu0 0
        %1258 = vmatpush2.bf16.msra.mxu0 0
        %1259 = vmatprep.subr.bf16.mxu0 0
        %1260 = vmatpush2.bf16.msra.mxu0 0
        %1261 = vmatprep.subr.bf16.mxu0 0
        %1262 = vmatpush2.bf16.msra.mxu0 0
        %1263 = vmatprep.mubr.bf16.mxu0 0
        %1264 = vmatmul.mubr.bf16.gmra.mxu0 %v1229
        %v1265 = vpop.f32.mrf.mxu0
        %v1266 = vadd.f32 0.0, %v1265
        %v1267 = vpop.f32.mrf.mxu0
        %v1268 = vpop.f32.mrf.mxu0
        %v1269 = vpop.f32.mrf.mxu0
        %1270 = vdwg.mxu0
        %v1271 = vadd.f32 %v1207, %v1266
        %v1272 = vxor.u32 %v1271, 2147483648
        %v1273 = vmul.f32 %v1272, 1.442695
        %v1274 = vpow.pop %v1273
        %v1275 = vadd.f32 %v1274, 1.0
        %v1276 = vrcp.pop %v1275
        %v1277 = vmul.f32 1.0, %v1276
        %v1278 = vtanh.pop %v1271
        %v1279 = vmul.f32 %v1277, %v1193
        %1281 = vrot.lane.b32.xlu0 %v1278, 64
        %v1282 = vpop.permute.xlu0 %1281
        %v1284 = vmul.f32 %v1277, %v1282
        %1286 = vrot.lane.b32.xlu0 %v1284, 32
        %v1287 = vpop.permute.xlu0 %1286
        %v1289 = vadd.f32 %v1279, %v1287
        %v1290 = vtanh.pop %v1289
        %1292 = vrot.lane.b32.xlu0 %v1290, 64
        %v1293 = vpop.permute.xlu0 %1292
        %v1295 = vmul.f32 %v1277, %v1293
        %1297 = vrot.lane.b32.xlu0 %v1295, 32
        %v1298 = vpop.permute.xlu0 %1297
        %s1300 = scalar_lea.vmem [#allocation2], 8
        %1301 = vst.msk [vmem:[%s1300] sm:$0x3] %vm916, %v1298
        %s1302 = scalar_lea.vmem [#allocation3], 10
        %v1303 = vld [vmem:[%s1302] sm:$0x3]
        %v1304 = vpack.c.bf16 %v1295, %v1295
        %v1305 = vld [vmem:[%s440] sm:$0xf]
        %v1306 = vld [vmem:[%s440 + $0x4] sm:$0xf]
        %v1307 = vld [vmem:[%s440 + $0x8] sm:$0xf]
        %v1308 = vld [vmem:[%s440 + $0xc] sm:$0xf]
        %1310 = vrot.lane.b32.xlu0 %v1304, 32
        %v1311 = vpop.permute.xlu0 %1310
        %v1316 = vunpack.c.l.b16 %v1305
        %v1317 = vunpack.c.l.b16 %v1306
        %v1318 = vunpack.c.l.b16 %v1307
        %v1319 = vunpack.c.l.b16 %v1308
        %v1320 = vpack.c.b16 %v1317, %v1316
        %v1321 = vpack.c.b16 %v1319, %v1318
        %v1325 = vsel %vm839, %v1311, 0
        %1327 = vmatprep.subr.bf16.mxu0 0
        %1328 = vmatpush1.bf16.msra.mxu0 0
        %1329 = vmatprep.subr.bf16.mxu0 0
        %1330 = vmatpush1.bf16.msra.mxu0 0
        %1331 = vmatprep.subr.bf16.mxu0 0
        %1332 = vmatpush1.bf16.msra.mxu0 0
        %1333 = vmatprep.subr.bf16.mxu0 0
        %1334 = vmatpush1.bf16.msra.mxu0 0
        %1335 = vmatprep.subr.bf16.mxu0 0
        %1336 = vmatpush1.bf16.msra.mxu0 0
        %1337 = vmatprep.subr.bf16.mxu0 0
        %1338 = vmatpush1.bf16.msra.mxu0 0
        %1339 = vmatprep.subr.bf16.mxu0 0
        %1340 = vmatpush1.bf16.msra.mxu0 %v1321
        %1341 = vmatprep.subr.bf16.mxu0 0
        %1342 = vmatpush1.bf16.msra.mxu0 %v1320
        %1343 = vmatprep.subr.bf16.mxu0 0
        %1344 = vmatpush2.bf16.msra.mxu0 0
        %1345 = vmatprep.subr.bf16.mxu0 0
        %1346 = vmatpush2.bf16.msra.mxu0 0
        %1347 = vmatprep.subr.bf16.mxu0 0
        %1348 = vmatpush2.bf16.msra.mxu0 0
        %1349 = vmatprep.subr.bf16.mxu0 0
        %1350 = vmatpush2.bf16.msra.mxu0 0
        %1351 = vmatprep.subr.bf16.mxu0 0
        %1352 = vmatpush2.bf16.msra.mxu0 0
        %1353 = vmatprep.subr.bf16.mxu0 0
        %1354 = vmatpush2.bf16.msra.mxu0 0
        %1355 = vmatprep.subr.bf16.mxu0 0
        %1356 = vmatpush2.bf16.msra.mxu0 0
        %1357 = vmatprep.subr.bf16.mxu0 0
        %1358 = vmatpush2.bf16.msra.mxu0 0
        %1359 = vmatprep.mubr.bf16.mxu0 0
        %1360 = vmatmul.mubr.bf16.gmra.mxu0 %v1325
        %v1361 = vpop.f32.mrf.mxu0
        %v1362 = vadd.f32 0.0, %v1361
        %v1363 = vpop.f32.mrf.mxu0
        %v1364 = vpop.f32.mrf.mxu0
        %v1365 = vpop.f32.mrf.mxu0
        %1366 = vdwg.mxu0
        %v1367 = vadd.f32 %v1303, %v1362
        %v1368 = vxor.u32 %v1367, 2147483648
        %v1369 = vmul.f32 %v1368, 1.442695
        %v1370 = vpow.pop %v1369
        %v1371 = vadd.f32 %v1370, 1.0
        %v1372 = vrcp.pop %v1371
        %v1373 = vmul.f32 1.0, %v1372
        %v1374 = vtanh.pop %v1367
        %v1375 = vmul.f32 %v1373, %v1289
        %1377 = vrot.lane.b32.xlu0 %v1374, 64
        %v1378 = vpop.permute.xlu0 %1377
        %v1380 = vmul.f32 %v1373, %v1378
        %1382 = vrot.lane.b32.xlu0 %v1380, 32
        %v1383 = vpop.permute.xlu0 %1382
        %v1385 = vadd.f32 %v1375, %v1383
        %v1386 = vtanh.pop %v1385
        %1388 = vrot.lane.b32.xlu0 %v1386, 64
        %v1389 = vpop.permute.xlu0 %1388
        %v1391 = vmul.f32 %v1373, %v1389
        %1393 = vrot.lane.b32.xlu0 %v1391, 32
        %v1394 = vpop.permute.xlu0 %1393
        %s1396 = scalar_lea.vmem [#allocation2], 10
        %1397 = vst.msk [vmem:[%s1396] sm:$0x3] %vm916, %v1394
        %s1398 = scalar_lea.vmem [#allocation3], 12
        %v1399 = vld [vmem:[%s1398] sm:$0x3]
        %v1400 = vpack.c.bf16 %v1391, %v1391
        %v1401 = vld [vmem:[%s440] sm:$0xf]
        %v1402 = vld [vmem:[%s440 + $0x4] sm:$0xf]
        %v1403 = vld [vmem:[%s440 + $0x8] sm:$0xf]
        %v1404 = vld [vmem:[%s440 + $0xc] sm:$0xf]
        %1406 = vrot.lane.b32.xlu0 %v1400, 32
        %v1407 = vpop.permute.xlu0 %1406
        %v1412 = vunpack.c.l.b16 %v1401
        %v1413 = vunpack.c.l.b16 %v1402
        %v1414 = vunpack.c.l.b16 %v1403
        %v1415 = vunpack.c.l.b16 %v1404
        %v1416 = vpack.c.b16 %v1413, %v1412
        %v1417 = vpack.c.b16 %v1415, %v1414
        %v1421 = vsel %vm839, %v1407, 0
        %1423 = vmatprep.subr.bf16.mxu0 0
        %1424 = vmatpush1.bf16.msra.mxu0 0
        %1425 = vmatprep.subr.bf16.mxu0 0
        %1426 = vmatpush1.bf16.msra.mxu0 0
        %1427 = vmatprep.subr.bf16.mxu0 0
        %1428 = vmatpush1.bf16.msra.mxu0 0
        %1429 = vmatprep.subr.bf16.mxu0 0
        %1430 = vmatpush1.bf16.msra.mxu0 0
        %1431 = vmatprep.subr.bf16.mxu0 0
        %1432 = vmatpush1.bf16.msra.mxu0 0
        %1433 = vmatprep.subr.bf16.mxu0 0
        %1434 = vmatpush1.bf16.msra.mxu0 0
        %1435 = vmatprep.subr.bf16.mxu0 0
        %1436 = vmatpush1.bf16.msra.mxu0 %v1417
        %1437 = vmatprep.subr.bf16.mxu0 0
        %1438 = vmatpush1.bf16.msra.mxu0 %v1416
        %1439 = vmatprep.subr.bf16.mxu0 0
        %1440 = vmatpush2.bf16.msra.mxu0 0
        %1441 = vmatprep.subr.bf16.mxu0 0
        %1442 = vmatpush2.bf16.msra.mxu0 0
        %1443 = vmatprep.subr.bf16.mxu0 0
        %1444 = vmatpush2.bf16.msra.mxu0 0
        %1445 = vmatprep.subr.bf16.mxu0 0
        %1446 = vmatpush2.bf16.msra.mxu0 0
        %1447 = vmatprep.subr.bf16.mxu0 0
        %1448 = vmatpush2.bf16.msra.mxu0 0
        %1449 = vmatprep.subr.bf16.mxu0 0
        %1450 = vmatpush2.bf16.msra.mxu0 0
        %1451 = vmatprep.subr.bf16.mxu0 0
        %1452 = vmatpush2.bf16.msra.mxu0 0
        %1453 = vmatprep.subr.bf16.mxu0 0
        %1454 = vmatpush2.bf16.msra.mxu0 0
        %1455 = vmatprep.mubr.bf16.mxu0 0
        %1456 = vmatmul.mubr.bf16.gmra.mxu0 %v1421
        %v1457 = vpop.f32.mrf.mxu0
        %v1458 = vadd.f32 0.0, %v1457
        %v1459 = vpop.f32.mrf.mxu0
        %v1460 = vpop.f32.mrf.mxu0
        %v1461 = vpop.f32.mrf.mxu0
        %1462 = vdwg.mxu0
        %v1463 = vadd.f32 %v1399, %v1458
        %v1464 = vxor.u32 %v1463, 2147483648
        %v1465 = vmul.f32 %v1464, 1.442695
        %v1466 = vpow.pop %v1465
        %v1467 = vadd.f32 %v1466, 1.0
        %v1468 = vrcp.pop %v1467
        %v1469 = vmul.f32 1.0, %v1468
        %v1470 = vtanh.pop %v1463
        %v1471 = vmul.f32 %v1469, %v1385
        %1473 = vrot.lane.b32.xlu0 %v1470, 64
        %v1474 = vpop.permute.xlu0 %1473
        %v1476 = vmul.f32 %v1469, %v1474
        %1478 = vrot.lane.b32.xlu0 %v1476, 32
        %v1479 = vpop.permute.xlu0 %1478
        %v1481 = vadd.f32 %v1471, %v1479
        %v1482 = vtanh.pop %v1481
        %1484 = vrot.lane.b32.xlu0 %v1482, 64
        %v1485 = vpop.permute.xlu0 %1484
        %v1487 = vmul.f32 %v1469, %v1485
        %1489 = vrot.lane.b32.xlu0 %v1487, 32
        %v1490 = vpop.permute.xlu0 %1489
        %s1492 = scalar_lea.vmem [#allocation2], 12
        %1493 = vst.msk [vmem:[%s1492] sm:$0x3] %vm916, %v1490
        %s1494 = scalar_lea.vmem [#allocation3], 14
        %v1495 = vld [vmem:[%s1494] sm:$0x3]
        %v1496 = vpack.c.bf16 %v1487, %v1487
        %v1497 = vld [vmem:[%s440] sm:$0xf]
        %v1498 = vld [vmem:[%s440 + $0x4] sm:$0xf]
        %v1499 = vld [vmem:[%s440 + $0x8] sm:$0xf]
        %v1500 = vld [vmem:[%s440 + $0xc] sm:$0xf]
        %1502 = vrot.lane.b32.xlu0 %v1496, 32
        %v1503 = vpop.permute.xlu0 %1502
        %v1508 = vunpack.c.l.b16 %v1497
        %v1509 = vunpack.c.l.b16 %v1498
        %v1510 = vunpack.c.l.b16 %v1499
        %v1511 = vunpack.c.l.b16 %v1500
        %v1512 = vpack.c.b16 %v1509, %v1508
        %v1513 = vpack.c.b16 %v1511, %v1510
        %v1517 = vsel %vm839, %v1503, 0
        %1519 = vmatprep.subr.bf16.mxu0 0
        %1520 = vmatpush1.bf16.msra.mxu0 0
        %1521 = vmatprep.subr.bf16.mxu0 0
        %1522 = vmatpush1.bf16.msra.mxu0 0
        %1523 = vmatprep.subr.bf16.mxu0 0
        %1524 = vmatpush1.bf16.msra.mxu0 0
        %1525 = vmatprep.subr.bf16.mxu0 0
        %1526 = vmatpush1.bf16.msra.mxu0 0
        %1527 = vmatprep.subr.bf16.mxu0 0
        %1528 = vmatpush1.bf16.msra.mxu0 0
        %1529 = vmatprep.subr.bf16.mxu0 0
        %1530 = vmatpush1.bf16.msra.mxu0 0
        %1531 = vmatprep.subr.bf16.mxu0 0
        %1532 = vmatpush1.bf16.msra.mxu0 %v1513
        %1533 = vmatprep.subr.bf16.mxu0 0
        %1534 = vmatpush1.bf16.msra.mxu0 %v1512
        %1535 = vmatprep.subr.bf16.mxu0 0
        %1536 = vmatpush2.bf16.msra.mxu0 0
        %1537 = vmatprep.subr.bf16.mxu0 0
        %1538 = vmatpush2.bf16.msra.mxu0 0
        %1539 = vmatprep.subr.bf16.mxu0 0
        %1540 = vmatpush2.bf16.msra.mxu0 0
        %1541 = vmatprep.subr.bf16.mxu0 0
        %1542 = vmatpush2.bf16.msra.mxu0 0
        %1543 = vmatprep.subr.bf16.mxu0 0
        %1544 = vmatpush2.bf16.msra.mxu0 0
        %1545 = vmatprep.subr.bf16.mxu0 0
        %1546 = vmatpush2.bf16.msra.mxu0 0
        %1547 = vmatprep.subr.bf16.mxu0 0
        %1548 = vmatpush2.bf16.msra.mxu0 0
        %1549 = vmatprep.subr.bf16.mxu0 0
        %1550 = vmatpush2.bf16.msra.mxu0 0
        %1551 = vmatprep.mubr.bf16.mxu0 0
        %1552 = vmatmul.mubr.bf16.gmra.mxu0 %v1517
        %v1553 = vpop.f32.mrf.mxu0
        %v1554 = vadd.f32 0.0, %v1553
        %v1555 = vpop.f32.mrf.mxu0
        %v1556 = vpop.f32.mrf.mxu0
        %v1557 = vpop.f32.mrf.mxu0
        %1558 = vdwg.mxu0
        %v1559 = vadd.f32 %v1495, %v1554
        %v1560 = vxor.u32 %v1559, 2147483648
        %v1561 = vmul.f32 %v1560, 1.442695
        %v1562 = vpow.pop %v1561
        %v1563 = vadd.f32 %v1562, 1.0
        %v1564 = vrcp.pop %v1563
        %v1565 = vmul.f32 1.0, %v1564
        %v1566 = vtanh.pop %v1559
        %v1567 = vmul.f32 %v1565, %v1481
        %1569 = vrot.lane.b32.xlu0 %v1566, 64
        %v1570 = vpop.permute.xlu0 %1569
        %v1572 = vmul.f32 %v1565, %v1570
        %1574 = vrot.lane.b32.xlu0 %v1572, 32
        %v1575 = vpop.permute.xlu0 %1574
        %v1577 = vadd.f32 %v1567, %v1575
        %v1578 = vtanh.pop %v1577
        %1580 = vrot.lane.b32.xlu0 %v1578, 64
        %v1581 = vpop.permute.xlu0 %1580
        %v1583 = vmul.f32 %v1565, %v1581
        %1585 = vrot.lane.b32.xlu0 %v1583, 32
        %v1586 = vpop.permute.xlu0 %1585
        %s1588 = scalar_lea.vmem [#allocation2], 14
        %1589 = vst.msk [vmem:[%s1588] sm:$0x3] %vm916, %v1586
        %1590 = vst.msk [vmem:[%s405] sm:$0x3] %vm916, %v1586
        %1592 = vrot.lane.b32.xlu0 %v1577, 96
        %v1593 = vpop.permute.xlu0 %1592
        %1595 = vst.msk [vmem:[%s412] sm:$0x3] %vm916, %v1593
        %p1596 = scmp.eq.s32.totalorder %s31, 1
        // Predicated region
        $region53: #{pointer_generator_forward.3} parent=43 // pred_check
          %p1597 = pneg %p1596
        $region54: #{pointer_generator_forward.3} parent=43 // pred_check_branch
          %1599 = sbr.rel (%p1597) target = $region56
        $region55: #{pointer_generator_forward.3} parent=43 // pred_region
          %v1600 = vld [vmem:[#allocation2] sm:$0x3]
          %v1601 = vld [vmem:[#allocation2 + $0x2] sm:$0x3]
          %v1602 = vld [vmem:[#allocation2 + $0x4] sm:$0x3]
          %v1603 = vld [vmem:[#allocation2 + $0x6] sm:$0x3]
          %v1604 = vld [vmem:[#allocation2 + $0x8] sm:$0x3]
          %v1605 = vld [vmem:[#allocation2 + $0xa] sm:$0x3]
          %v1606 = vld [vmem:[#allocation2 + $0xc] sm:$0x3]
          %v1607 = vld [vmem:[#allocation2 + $0xe] sm:$0x3]
          %1608 = vst.msk [vmem:[%s447] sm:$0x3] %vm916, %v1600
          %1609 = vst.msk [vmem:[%s447 + $0x2] sm:$0x3] %vm916, %v1601
          %1610 = vst.msk [vmem:[%s447 + $0x4] sm:$0x3] %vm916, %v1602
          %1611 = vst.msk [vmem:[%s447 + $0x6] sm:$0x3] %vm916, %v1603
          %1612 = vst.msk [vmem:[%s447 + $0x8] sm:$0x3] %vm916, %v1604
          %1613 = vst.msk [vmem:[%s447 + $0xa] sm:$0x3] %vm916, %v1605
          %1614 = vst.msk [vmem:[%s447 + $0xc] sm:$0x3] %vm916, %v1606
          %1615 = vst.msk [vmem:[%s447 + $0xe] sm:$0x3] %vm916, %v1607
        $region56: #{pointer_generator_forward.3} parent=43 // pred_fallthru
          _
        %p1616 = scmp.lt.s32.totalorder %s30, 0
        %s1617 = scalar_select %p1616, %s30, 0
        %s1618 = smul.addr %s1617, 2
        %s1619 = scalar_lea.vmem %s6, %s1618
        %s1620 = sand.u32 %s234, 1
        %s1621 = scalar_lea.sflag [#allocation5], %s1620
        %s1622 = sand.u32 %s234, 1
        %s1623 = smul.addr %s1622, 2
        %s1624 = scalar_lea.vmem [#allocation4], %s1623
        %s1625 = sand.u32 %s262, 1
        %s1626 = scalar_lea.sflag [#allocation7], %s1625
        %s1627 = sand.u32 %s262, 1
        %s1628 = smul.addr %s1627, 2
        %s1629 = scalar_lea.vmem [#allocation6], %s1628
        // Predicated region
        $region57: #{pointer_generator_forward.3} parent=43 // pred_check
          %p1630 = pneg %p216
        $region58: #{pointer_generator_forward.3} parent=43 // pred_check_branch
          %1632 = sbr.rel (%p1630) target = $region60
        $region59: #{pointer_generator_forward.3} parent=43 // pred_region
          _
        $region60: #{pointer_generator_forward.3} parent=43 // pred_fallthru
          _
        // Predicated region
        $region61: #{pointer_generator_forward.3} parent=43 // pred_check
          %p1633 = pneg %p244
        $region62: #{pointer_generator_forward.3} parent=43 // pred_check_branch
          %1635 = sbr.rel (%p1633) target = $region64
        $region63: #{pointer_generator_forward.3} parent=43 // pred_region
          %s1637 = ssub.s32 32, 32
          %1638 = vsyncadd %s1621, %s1637
          %s1639 = sadd.s32 %s30, %s31
          %s1640 = smul.addr %s1639, 32
          %s1641 = scalar_lea.hbm %s7, %s1640
          %s1643 = sshll.u32 %s1624, 4
          %s1644 = int_to_ptr.vmem [resolvable:$true] %s1643
          %1646 = dma.vmem_to_hbm [thread:$0]  %s1644, 32, %s1641, %s1621
        $region64: #{pointer_generator_forward.3} parent=43 // pred_fallthru
          _
        // Predicated region
        $region65: #{pointer_generator_forward.3} parent=43 // pred_check
          %p1647 = pneg %p272
        $region66: #{pointer_generator_forward.3} parent=43 // pred_check_branch
          %1649 = sbr.rel (%p1647) target = $region68
        $region67: #{pointer_generator_forward.3} parent=43 // pred_region
          %s1651 = ssub.s32 32, 32
          %1652 = vsyncadd %s1626, %s1651
          %s1653 = sadd.s32 %s30, %s31
          %s1654 = smul.addr %s1653, 32
          %s1655 = scalar_lea.hbm %s8, %s1654
          %s1657 = sshll.u32 %s1629, 4
          %s1658 = int_to_ptr.vmem [resolvable:$true] %s1657
          %1660 = dma.vmem_to_hbm [thread:$0]  %s1658, 32, %s1655, %s1626
        $region68: #{pointer_generator_forward.3} parent=43 // pred_fallthru
          _
        // Predicated region
        $region69: #{pointer_generator_forward.3} parent=43 // pred_check
          %p1661 = pneg %p216
        $region70: #{pointer_generator_forward.3} parent=43 // pred_check_branch
          %1663 = sbr.rel (%p1661) target = $region72
        $region71: #{pointer_generator_forward.3} parent=43 // pred_region
          %p1664 = scmp.lt.s32.totalorder %s30, 0
          %s1665 = scalar_select %p1664, %s30, 0
          %s1666 = smul.addr %s1665, 2
          %s1667 = scalar_lea.vmem %s6, %s1666
        $region72: #{pointer_generator_forward.3} parent=43 // pred_fallthru
          _
      $region44: #{pointer_generator_forward.3} parent=5 // pred_fallthru
        _
      %p1668 = scmp.le.s32.totalorder 2, %s21
      // Predicated region
      $region73: #{pointer_generator_forward.3} parent=5 // pred_check
        %p1669 = pneg %p1668
      $region74: #{pointer_generator_forward.3} parent=5 // pred_check_branch
        %1671 = sbr.rel (%p1669) target = $region76
      $region75: #{pointer_generator_forward.3} parent=5 // pred_region
        %s1672 = ssub.s32 %s21, 2
        // Predicated region
        $region77: #{pointer_generator_forward.3} parent=75 // pred_check
          %p1673 = pneg %p250
        $region78: #{pointer_generator_forward.3} parent=75 // pred_check_branch
          %1675 = sbr.rel (%p1673) target = $region80
        $region79: #{pointer_generator_forward.3} parent=75 // pred_region
          %s1676 = sand.u32 %s235, 1
          %s1677 = scalar_lea.sflag [#allocation5], %s1676
          %s1678 = sand.u32 %s235, 1
          %s1679 = smul.addr %s1678, 2
          %s1680 = scalar_lea.vmem [#allocation4], %s1679
          %1681 = dma.done %s1677, 32
        $region80: #{pointer_generator_forward.3} parent=75 // pred_fallthru
          _
        // Predicated region
        $region81: #{pointer_generator_forward.3} parent=75 // pred_check
          %p1682 = pneg %p278
        $region82: #{pointer_generator_forward.3} parent=75 // pred_check_branch
          %1684 = sbr.rel (%p1682) target = $region84
        $region83: #{pointer_generator_forward.3} parent=75 // pred_region
          %s1685 = sand.u32 %s263, 1
          %s1686 = scalar_lea.sflag [#allocation7], %s1685
          %s1687 = sand.u32 %s263, 1
          %s1688 = smul.addr %s1687, 2
          %s1689 = scalar_lea.vmem [#allocation6], %s1688
          %1690 = dma.done %s1686, 32
        $region84: #{pointer_generator_forward.3} parent=75 // pred_fallthru
          _
      $region76: #{pointer_generator_forward.3} parent=5 // pred_fallthru
        _
    $region6: #{pointer_generator_forward.3} parent=1 // loop_footer
      %s25 = sadd.s32 1, %s21
    $region7: #{pointer_generator_forward.3} parent=1 // loop_footer_branch
      %20 = sbr.rel target = $region3
    $region8: #{pointer_generator_forward.3} parent=1 // loop_exit
      _
    %1691 = vsyncpa [#allocation5], 1
    %s1692 = scalar_lea.sflag [#allocation5], 1
    %1693 = vsyncpa %s1692, 1
    %1694 = vsyncpa [#allocation7], 1
    %s1695 = scalar_lea.sflag [#allocation7], 1
    %1696 = vsyncpa %s1695, 1

</llo_original>
